<compile_context>
chip_gen: v5e
topology: v5e:2x2
jax: 0.10.0
libtpu: 0.0.40
codegen_flags: <defaults>
</compile_context>

<pallas_src>
import jax
import jax.numpy as jnp
from jax.experimental import pallas as pl
from jax.experimental.pallas import tpu as pltpu

LATENT_DIM = 20
HIDDEN_DIM = 500
IN_DIM = 784          # 28 * 28
HIDDEN_PAD = 512      # 500 padded to a lane multiple (zero-padded weights)
MLV_PAD = 128         # mean|logvar (40) padded to one full lane tile


def vae_kernel(x_ref, eps_ref,
               we_ref, be_ref,
               wmlv_ref, bmlv_ref,
               wd1_ref, bd1_ref,
               wd2_ref, bd2_ref,
               xout_ref, mlv_ref):
    # ---- encoder: h = relu(x @ We + be)  (bf16 MXU inputs, f32 accumulate) ----
    h = jnp.dot(x_ref[...], we_ref[...],
                preferred_element_type=jnp.float32) + be_ref[...]
    h = jnp.maximum(h, 0.0)                                   # [B, 512]

    # ---- fused mean|logvar projection, 128-lane padded (lane-dense store) ----
    mlv = jnp.dot(h.astype(jnp.bfloat16), wmlv_ref[...],
                  preferred_element_type=jnp.float32) + bmlv_ref[...]   # [B, 128]
    mean = mlv[:, :LATENT_DIM]
    logvar = mlv[:, LATENT_DIM:2 * LATENT_DIM]

    # ---- reparameterization: z = eps * exp(0.5 * logvar) + mean ----
    z = eps_ref[...] * jnp.exp(logvar * 0.5) + mean           # [B, 20]

    # ---- decoder: x_out = sigmoid(relu(z @ Wd1 + bd1) @ Wd2 + bd2) ----
    d = jnp.dot(z.astype(jnp.bfloat16), wd1_ref[...],
                preferred_element_type=jnp.float32) + bd1_ref[...]
    d = jnp.maximum(d, 0.0)                                   # [B, 512]
    logits = jnp.dot(d.astype(jnp.bfloat16), wd2_ref[...],
                     preferred_element_type=jnp.float32) + bd2_ref[...]  # [B, 784]

    # numerically stable sigmoid: exp of a non-positive argument, exact divide.
    pos = logits >= 0.0
    e = jnp.exp(jnp.where(pos, -logits, logits))              # in (0, 1]
    sig = jnp.where(pos, 1.0, e) / (1.0 + e)                  # exactly in [0, 1)

    xout_ref[...] = sig.astype(xout_ref.dtype)                # bf16 store
    mlv_ref[...] = mlv                                        # [B, 128] f32 store


# ---------------------------------------------------------------------------
# Parameter setup (PyTorch nn.Linear semantics) + kernel-layout preparation.
# ---------------------------------------------------------------------------
def init_linear(key, in_dim, out_dim):
    """PyTorch nn.Linear default init: U(-1/sqrt(fan_in), 1/sqrt(fan_in)).
    Weight returned transposed to [in, out]; bias as [1, out]."""
    kw, kb = jax.random.split(key)
    bound = 1.0 / jnp.sqrt(jnp.float32(in_dim))
    w = jax.random.uniform(kw, (in_dim, out_dim), jnp.float32, -bound, bound)
    b = jax.random.uniform(kb, (1, out_dim), jnp.float32, -bound, bound)
    return w, b


def init_vae_params(key):
    keys = jax.random.split(key, 5)
    we, be = init_linear(keys[0], IN_DIM, HIDDEN_DIM)        # fc_e
    wm, bm = init_linear(keys[1], HIDDEN_DIM, LATENT_DIM)    # fc_mean
    wlv, blv = init_linear(keys[2], HIDDEN_DIM, LATENT_DIM)  # fc_logvar
    wd1, bd1 = init_linear(keys[3], LATENT_DIM, HIDDEN_DIM)  # fc_d1
    wd2, bd2 = init_linear(keys[4], HIDDEN_DIM, IN_DIM)      # fc_d2
    return (we, be, wm, bm, wlv, blv, wd1, bd1, wd2, bd2)


def prepare_vae_params(params):
    """Kernel layout: bf16 weights, hidden dim zero-padded 500->512, fused
    mean|logvar projection zero-padded to 128 output lanes.  Zero padding is
    exact: padded h/d columns are relu(0 + 0) = 0 and hit zero weight rows."""
    we, be, wm, bm, wlv, blv, wd1, bd1, wd2, bd2 = params
    hp = HIDDEN_PAD - HIDDEN_DIM
    mp = MLV_PAD - 2 * LATENT_DIM

    we_p = jnp.pad(we, ((0, 0), (0, hp))).astype(jnp.bfloat16)      # [784, 512]
    be_p = jnp.pad(be, ((0, 0), (0, hp)))                           # [1, 512]

    wmlv = jnp.concatenate([wm, wlv], axis=1)                       # [500, 40]
    wmlv_p = jnp.pad(wmlv, ((0, hp), (0, mp))).astype(jnp.bfloat16)  # [512, 128]
    bmlv = jnp.concatenate([bm, blv], axis=1)
    bmlv_p = jnp.pad(bmlv, ((0, 0), (0, mp)))                       # [1, 128]

    wd1_p = jnp.pad(wd1, ((0, 0), (0, hp))).astype(jnp.bfloat16)    # [20, 512]
    bd1_p = jnp.pad(bd1, ((0, 0), (0, hp)))                         # [1, 512]
    wd2_p = jnp.pad(wd2, ((0, hp), (0, 0))).astype(jnp.bfloat16)    # [512, 784]
    bd2_p = bd2                                                     # [1, 784]

    return (we_p, be_p, wmlv_p, bmlv_p, wd1_p, bd1_p, wd2_p, bd2_p)


# ---------------------------------------------------------------------------
# Forward wrapper
# ---------------------------------------------------------------------------
def _round_up(x, m):
    return ((x + m - 1) // m) * m


def _choose_tile_b(batch):
    """Batch tile: multiple of 8, capped at 512.  Prefers a tile that divides
    the 8-rounded batch (avoids a full-array pad copy) and yields >= 2 grid
    steps (pipelining + v7x 2-TensorCore sharding of the parallel grid axis)."""
    b8 = _round_up(max(batch, 8), 8)
    cap = 512
    upper = min(cap, b8 // 2)
    t = upper - upper % 8
    while t >= 8:
        if b8 % t == 0:
            return t, b8
        t -= 8
    if b8 <= cap:            # small / awkward batch: single tile
        return b8, b8
    return cap, _round_up(b8, cap)   # huge prime-ish batch: pad to the cap


def vae_forward(x_in, kparams, eps):
    """x_in: [B, 1, 28, 28] float32 (NCHW), eps: [B, LATENT_DIM] ~ N(0,1).
    kparams: output of prepare_vae_params(). Returns (x_out, z_mean, z_logvar)."""
    B = x_in.shape[0]
    # stream x in bf16 (MXU already truncates to bf16; halves input HBM bytes)
    x_flat = x_in.reshape(B, IN_DIM).astype(jnp.bfloat16)
    eps = eps.astype(jnp.float32)

    tile_b, b_pad = _choose_tile_b(B)
    if b_pad != B:
        # only hit for batches that are not a multiple of 8 / have no clean tile
        x_flat = jnp.pad(x_flat, ((0, b_pad - B), (0, 0)))
        eps = jnp.pad(eps, ((0, b_pad - B), (0, 0)))

    grid = (b_pad // tile_b,)

    def batch_spec(cols):
        return pl.BlockSpec((tile_b, cols), lambda i: (i, 0))

    def resident(shape):   # same block every grid step -> stays in VMEM
        return pl.BlockSpec(shape, lambda i: (0, 0))

    cost = pl.CostEstimate(
        flops=2 * b_pad * (IN_DIM * HIDDEN_PAD
                           + HIDDEN_PAD * MLV_PAD
                           + LATENT_DIM * HIDDEN_PAD
                           + HIDDEN_PAD * IN_DIM),
        transcendentals=b_pad * (LATENT_DIM + IN_DIM),
        bytes_accessed=((IN_DIM * HIDDEN_PAD + HIDDEN_PAD * MLV_PAD
                         + LATENT_DIM * HIDDEN_PAD + HIDDEN_PAD * IN_DIM) * 2  # bf16 W
                        + (2 * HIDDEN_PAD + MLV_PAD + IN_DIM) * 4              # f32 biases
                        + b_pad * (IN_DIM * 2            # x bf16 in
                                   + LATENT_DIM * 4      # eps f32 in
                                   + IN_DIM * 2          # x_out bf16 out
                                   + MLV_PAD * 4)),      # mlv f32 out
    )

    x_out_flat, mlv = pl.pallas_call(
        vae_kernel,
        grid=grid,
        out_shape=(
            jax.ShapeDtypeStruct((b_pad, IN_DIM), jnp.bfloat16),
            jax.ShapeDtypeStruct((b_pad, MLV_PAD), jnp.float32),
        ),
        in_specs=[
            batch_spec(IN_DIM),                        # x (bf16)
            batch_spec(LATENT_DIM),                    # eps
            resident((IN_DIM, HIDDEN_PAD)),            # We (bf16)
            resident((1, HIDDEN_PAD)),                 # be
            resident((HIDDEN_PAD, MLV_PAD)),           # W_mean|logvar (bf16)
            resident((1, MLV_PAD)),                    # b_mean|logvar
            resident((LATENT_DIM, HIDDEN_PAD)),        # Wd1 (bf16)
            resident((1, HIDDEN_PAD)),                 # bd1
            resident((HIDDEN_PAD, IN_DIM)),            # Wd2 (bf16)
            resident((1, IN_DIM)),                     # bd2
        ],
        out_specs=(
            batch_spec(IN_DIM),
            batch_spec(MLV_PAD),
        ),
        compiler_params=pltpu.CompilerParams(
            dimension_semantics=("parallel",),
            vmem_limit_bytes=48 * 1024 * 1024),
        cost_estimate=cost,
    )(x_flat, eps, *kparams)

    # upcast reconstruction back to f32 for interface parity with the PyTorch module
    x_out = x_out_flat[:B].astype(jnp.float32).reshape(B, 1, 28, 28)
    z_mean = mlv[:B, :LATENT_DIM]
    z_logvar = mlv[:B, LATENT_DIM:2 * LATENT_DIM]
    return x_out, z_mean, z_logvar


if __name__ == "__main__":
    key = jax.random.PRNGKey(0)
    k_param, k_x, k_eps = jax.random.split(key, 3)

    params = init_vae_params(k_param)
    kparams = prepare_vae_params(params)

    B = 8
    x_in = jax.random.uniform(k_x, (B, 1, 28, 28), jnp.float32)   # MNIST-like
    # TODO(synk): torch.distributions Normal sampling has no in-kernel analog;
    # the reparameterization noise is supplied explicitly as an input.
    eps = jax.random.normal(k_eps, (B, LATENT_DIM), jnp.float32)

    x_out, z_mean, z_logvar = vae_forward(x_in, kparams, eps)
    jax.block_until_ready((x_out, z_mean, z_logvar))

    assert x_out.shape == (B, 1, 28, 28)
    assert z_mean.shape == (B, LATENT_DIM)
    assert z_logvar.shape == (B, LATENT_DIM)
    assert bool(jnp.all(jnp.isfinite(x_out)))
    assert bool(jnp.all(jnp.isfinite(z_mean))) and bool(jnp.all(jnp.isfinite(z_logvar)))
    # exact stable sigmoid -> output strictly within [0, 1] (tiny slack for bf16 store)
    assert bool(jnp.all((x_out >= 0.0) & (x_out <= 1.0 + 1e-6)))
    print("KERNEL_OK")
</pallas_src>

<mosaic_0001>
module attributes {stable_mosaic.version = 11 : i64} {
  func.func @vae_kernel(%arg0: i32, %arg1: memref<8x784xbf16, #tpu.memory_space<vmem>>, %arg2: memref<8x20xf32, #tpu.memory_space<vmem>>, %arg3: memref<784x512xbf16, #tpu.memory_space<vmem>>, %arg4: memref<1x512xf32, #tpu.memory_space<vmem>>, %arg5: memref<512x128xbf16, #tpu.memory_space<vmem>>, %arg6: memref<1x128xf32, #tpu.memory_space<vmem>>, %arg7: memref<20x512xbf16, #tpu.memory_space<vmem>>, %arg8: memref<1x512xf32, #tpu.memory_space<vmem>>, %arg9: memref<512x784xbf16, #tpu.memory_space<vmem>>, %arg10: memref<1x784xf32, #tpu.memory_space<vmem>>, %arg11: memref<8x784xbf16, #tpu.memory_space<vmem>>, %arg12: memref<8x128xf32, #tpu.memory_space<vmem>>) attributes {dimension_semantics = [#tpu.dimension_semantics<parallel>], iteration_bounds = array<i64: 1>, scalar_prefetch = 0 : i64, scratch_operands = 0 : i64, tpu.core_type = #tpu.core_type<tc>, window_params = [{transform_indices = @transform_0, window_bounds = array<i64: 8, 784>}, {transform_indices = @transform_1, window_bounds = array<i64: 8, 20>}, {pipeline_mode = #tpu.pipeline_mode<synchronous>, transform_indices = @transform_2, window_bounds = array<i64: 784, 512>}, {pipeline_mode = #tpu.pipeline_mode<synchronous>, transform_indices = @transform_3, window_bounds = array<i64: 1, 512>}, {pipeline_mode = #tpu.pipeline_mode<synchronous>, transform_indices = @transform_4, window_bounds = array<i64: 512, 128>}, {pipeline_mode = #tpu.pipeline_mode<synchronous>, transform_indices = @transform_5, window_bounds = array<i64: 1, 128>}, {pipeline_mode = #tpu.pipeline_mode<synchronous>, transform_indices = @transform_6, window_bounds = array<i64: 20, 512>}, {pipeline_mode = #tpu.pipeline_mode<synchronous>, transform_indices = @transform_7, window_bounds = array<i64: 1, 512>}, {pipeline_mode = #tpu.pipeline_mode<synchronous>, transform_indices = @transform_8, window_bounds = array<i64: 512, 784>}, {pipeline_mode = #tpu.pipeline_mode<synchronous>, transform_indices = @transform_9, window_bounds = array<i64: 1, 784>}, {transform_indices = @transform_10, window_bounds = array<i64: 8, 784>}, {transform_indices = @transform_11, window_bounds = array<i64: 8, 128>}]} {
    %c0 = arith.constant 0 : index
    %c0_0 = arith.constant 0 : index
    %0 = vector.load %arg1[%c0, %c0_0] : memref<8x784xbf16, #tpu.memory_space<vmem>>, vector<8x784xbf16>
    %c0_1 = arith.constant 0 : index
    %c0_2 = arith.constant 0 : index
    %1 = vector.load %arg3[%c0_1, %c0_2] : memref<784x512xbf16, #tpu.memory_space<vmem>>, vector<784x512xbf16>
    %cst = arith.constant dense<0.000000e+00> : vector<8x512xf32>
    %2 = tpu.matmul %0, %1, %cst {dimension_numbers = #tpu.dot_dimension_numbers<[1], [0], [0], [1], [0, 0, 1, 1], [], []>} : vector<8x784xbf16>, vector<784x512xbf16>, vector<8x512xf32> -> vector<8x512xf32>
    %c0_3 = arith.constant 0 : index
    %c0_4 = arith.constant 0 : index
    %3 = vector.load %arg4[%c0_3, %c0_4] : memref<1x512xf32, #tpu.memory_space<vmem>>, vector<1x512xf32>
    %4 = vector.broadcast %3 : vector<1x512xf32> to vector<8x512xf32>
    %5 = arith.addf %2, %4 : vector<8x512xf32>
    %cst_5 = arith.constant 0.000000e+00 : f32
    %6 = vector.broadcast %cst_5 : f32 to vector<8x512xf32>
    %7 = arith.maximumf %5, %6 : vector<8x512xf32>
    %8 = arith.truncf %7 : vector<8x512xf32> to vector<8x512xbf16>
    %c0_6 = arith.constant 0 : index
    %c0_7 = arith.constant 0 : index
    %9 = vector.load %arg5[%c0_6, %c0_7] : memref<512x128xbf16, #tpu.memory_space<vmem>>, vector<512x128xbf16>
    %cst_8 = arith.constant dense<0.000000e+00> : vector<8x128xf32>
    %10 = tpu.matmul %8, %9, %cst_8 {dimension_numbers = #tpu.dot_dimension_numbers<[1], [0], [0], [1], [0, 0, 1, 1], [], []>} : vector<8x512xbf16>, vector<512x128xbf16>, vector<8x128xf32> -> vector<8x128xf32>
    %c0_9 = arith.constant 0 : index
    %c0_10 = arith.constant 0 : index
    %11 = vector.load %arg6[%c0_9, %c0_10] : memref<1x128xf32, #tpu.memory_space<vmem>>, vector<1x128xf32>
    %12 = vector.broadcast %11 : vector<1x128xf32> to vector<8x128xf32>
    %13 = arith.addf %10, %12 : vector<8x128xf32>
    %14 = vector.extract_strided_slice %13 {offsets = [0, 0], sizes = [8, 20], strides = [1, 1]} : vector<8x128xf32> to vector<8x20xf32>
    %15 = vector.extract_strided_slice %13 {offsets = [0, 20], sizes = [8, 20], strides = [1, 1]} : vector<8x128xf32> to vector<8x20xf32>
    %c0_11 = arith.constant 0 : index
    %c0_12 = arith.constant 0 : index
    %16 = vector.load %arg2[%c0_11, %c0_12] : memref<8x20xf32, #tpu.memory_space<vmem>>, vector<8x20xf32>
    %cst_13 = arith.constant 5.000000e-01 : f32
    %17 = vector.broadcast %cst_13 : f32 to vector<8x20xf32>
    %18 = arith.mulf %15, %17 : vector<8x20xf32>
    %19 = math.exp %18 : vector<8x20xf32>
    %20 = arith.mulf %16, %19 : vector<8x20xf32>
    %21 = arith.addf %20, %14 : vector<8x20xf32>
    %22 = arith.truncf %21 : vector<8x20xf32> to vector<8x20xbf16>
    %c0_14 = arith.constant 0 : index
    %c0_15 = arith.constant 0 : index
    %23 = vector.load %arg7[%c0_14, %c0_15] : memref<20x512xbf16, #tpu.memory_space<vmem>>, vector<20x512xbf16>
    %cst_16 = arith.constant dense<0.000000e+00> : vector<8x512xf32>
    %24 = tpu.matmul %22, %23, %cst_16 {dimension_numbers = #tpu.dot_dimension_numbers<[1], [0], [0], [1], [0, 0, 1, 1], [], []>} : vector<8x20xbf16>, vector<20x512xbf16>, vector<8x512xf32> -> vector<8x512xf32>
    %c0_17 = arith.constant 0 : index
    %c0_18 = arith.constant 0 : index
    %25 = vector.load %arg8[%c0_17, %c0_18] : memref<1x512xf32, #tpu.memory_space<vmem>>, vector<1x512xf32>
    %26 = vector.broadcast %25 : vector<1x512xf32> to vector<8x512xf32>
    %27 = arith.addf %24, %26 : vector<8x512xf32>
    %cst_19 = arith.constant 0.000000e+00 : f32
    %28 = vector.broadcast %cst_19 : f32 to vector<8x512xf32>
    %29 = arith.maximumf %27, %28 : vector<8x512xf32>
    %30 = arith.truncf %29 : vector<8x512xf32> to vector<8x512xbf16>
    %c0_20 = arith.constant 0 : index
    %c0_21 = arith.constant 0 : index
    %31 = vector.load %arg9[%c0_20, %c0_21] : memref<512x784xbf16, #tpu.memory_space<vmem>>, vector<512x784xbf16>
    %cst_22 = arith.constant dense<0.000000e+00> : vector<8x784xf32>
    %32 = tpu.matmul %30, %31, %cst_22 {dimension_numbers = #tpu.dot_dimension_numbers<[1], [0], [0], [1], [0, 0, 1, 1], [], []>} : vector<8x512xbf16>, vector<512x784xbf16>, vector<8x784xf32> -> vector<8x784xf32>
    %c0_23 = arith.constant 0 : index
    %c0_24 = arith.constant 0 : index
    %33 = vector.load %arg10[%c0_23, %c0_24] : memref<1x784xf32, #tpu.memory_space<vmem>>, vector<1x784xf32>
    %34 = vector.broadcast %33 : vector<1x784xf32> to vector<8x784xf32>
    %35 = arith.addf %32, %34 : vector<8x784xf32>
    %cst_25 = arith.constant 0.000000e+00 : f32
    %36 = vector.broadcast %cst_25 : f32 to vector<8x784xf32>
    %37 = arith.cmpf oge, %35, %36 : vector<8x784xf32>
    %cst_26 = arith.constant 0.000000e+00 : f32
    %38 = vector.broadcast %cst_26 : f32 to vector<8x784xf32>
    %39 = arith.subf %38, %35 : vector<8x784xf32>
    %40 = arith.select %37, %39, %35 : vector<8x784xi1>, vector<8x784xf32>
    %41 = math.exp %40 : vector<8x784xf32>
    %cst_27 = arith.constant 1.000000e+00 : f32
    %42 = vector.broadcast %cst_27 : f32 to vector<8x784xf32>
    %43 = arith.select %37, %42, %41 : vector<8x784xi1>, vector<8x784xf32>
    %cst_28 = arith.constant 1.000000e+00 : f32
    %44 = vector.broadcast %cst_28 : f32 to vector<8x784xf32>
    %45 = arith.addf %44, %41 : vector<8x784xf32>
    %46 = arith.divf %43, %45 : vector<8x784xf32>
    %47 = arith.truncf %46 : vector<8x784xf32> to vector<8x784xbf16>
    %c0_29 = arith.constant 0 : index
    %c0_30 = arith.constant 0 : index
    %48 = vector.load %arg11[%c0_29, %c0_30] : memref<8x784xbf16, #tpu.memory_space<vmem>>, vector<8x784xbf16>
    tpu.vector_store %arg11[%c0_29, %c0_30], %47 {strides = array<i32>} : memref<8x784xbf16, #tpu.memory_space<vmem>>, vector<8x784xbf16>,
    %c0_31 = arith.constant 0 : index
    %c0_32 = arith.constant 0 : index
    %49 = vector.load %arg12[%c0_31, %c0_32] : memref<8x128xf32, #tpu.memory_space<vmem>>, vector<8x128xf32>
    tpu.vector_store %arg12[%c0_31, %c0_32], %13 {strides = array<i32>} : memref<8x128xf32, #tpu.memory_space<vmem>>, vector<8x128xf32>,
    return
  }
  func.func @transform_0(%arg0: i32) -> (i32, i32) {
    %c0_i32 = arith.constant 0 : i32
    %c0_i32_0 = arith.constant 0 : i32
    return %arg0, %c0_i32 : i32, i32
  }
  func.func @transform_1(%arg0: i32) -> (i32, i32) {
    %c0_i32 = arith.constant 0 : i32
    %c0_i32_0 = arith.constant 0 : i32
    return %arg0, %c0_i32 : i32, i32
  }
  func.func @transform_2(%arg0: i32) -> (i32, i32) {
    %c0_i32 = arith.constant 0 : i32
    %c0_i32_0 = arith.constant 0 : i32
    %c0_i32_1 = arith.constant 0 : i32
    return %c0_i32, %c0_i32_0 : i32, i32
  }
  func.func @transform_3(%arg0: i32) -> (i32, i32) {
    %c0_i32 = arith.constant 0 : i32
    %c0_i32_0 = arith.constant 0 : i32
    %c0_i32_1 = arith.constant 0 : i32
    return %c0_i32, %c0_i32_0 : i32, i32
  }
  func.func @transform_4(%arg0: i32) -> (i32, i32) {
    %c0_i32 = arith.constant 0 : i32
    %c0_i32_0 = arith.constant 0 : i32
    %c0_i32_1 = arith.constant 0 : i32
    return %c0_i32, %c0_i32_0 : i32, i32
  }
  func.func @transform_5(%arg0: i32) -> (i32, i32) {
    %c0_i32 = arith.constant 0 : i32
    %c0_i32_0 = arith.constant 0 : i32
    %c0_i32_1 = arith.constant 0 : i32
    return %c0_i32, %c0_i32_0 : i32, i32
  }
  func.func @transform_6(%arg0: i32) -> (i32, i32) {
    %c0_i32 = arith.constant 0 : i32
    %c0_i32_0 = arith.constant 0 : i32
    %c0_i32_1 = arith.constant 0 : i32
    return %c0_i32, %c0_i32_0 : i32, i32
  }
  func.func @transform_7(%arg0: i32) -> (i32, i32) {
    %c0_i32 = arith.constant 0 : i32
    %c0_i32_0 = arith.constant 0 : i32
    %c0_i32_1 = arith.constant 0 : i32
    return %c0_i32, %c0_i32_0 : i32, i32
  }
  func.func @transform_8(%arg0: i32) -> (i32, i32) {
    %c0_i32 = arith.constant 0 : i32
    %c0_i32_0 = arith.constant 0 : i32
    %c0_i32_1 = arith.constant 0 : i32
    return %c0_i32, %c0_i32_0 : i32, i32
  }
  func.func @transform_9(%arg0: i32) -> (i32, i32) {
    %c0_i32 = arith.constant 0 : i32
    %c0_i32_0 = arith.constant 0 : i32
    %c0_i32_1 = arith.constant 0 : i32
    return %c0_i32, %c0_i32_0 : i32, i32
  }
  func.func @transform_10(%arg0: i32) -> (i32, i32) {
    %c0_i32 = arith.constant 0 : i32
    %c0_i32_0 = arith.constant 0 : i32
    return %arg0, %c0_i32 : i32, i32
  }
  func.func @transform_11(%arg0: i32) -> (i32, i32) {
    %c0_i32 = arith.constant 0 : i32
    %c0_i32_0 = arith.constant 0 : i32
    return %arg0, %c0_i32 : i32, i32
  }
}

</mosaic_0001>

<llo_original>
// kernel: tpu_custom_call.1
$region0: #{tpu_custom_call.1}
  #allocation0 [shape = 'u32[]', space=smem, size = 0x4, offset = 0x4, fixed_abs, tag = 'smem constant byte address 0x4 - core index']
  #allocation1 [shape = 'u32[72,128]{1,0:T(1,128)}', space=vmem, size = 0x9000, scoped, tag = 'internal scratch']
  %s0 = inlined_call_operand.vmem [shape: bf16[8,784], index: 0, kind: input, shape index: {}]
  %s1 = inlined_call_operand.vmem [shape: f32[8,20], index: 1, kind: input, shape index: {}]
  %s2 = inlined_call_operand.vmem [shape: bf16[784,512], index: 2, kind: input, shape index: {}]
  %s3 = inlined_call_operand.vmem [shape: f32[1,512], index: 3, kind: input, shape index: {}]
  %s4 = inlined_call_operand.vmem [shape: bf16[512,128], index: 4, kind: input, shape index: {}]
  %s5 = inlined_call_operand.vmem [shape: f32[1,128], index: 5, kind: input, shape index: {}]
  %s6 = inlined_call_operand.vmem [shape: bf16[20,512], index: 6, kind: input, shape index: {}]
  %s7 = inlined_call_operand.vmem [shape: f32[1,512], index: 7, kind: input, shape index: {}]
  %s8 = inlined_call_operand.vmem [shape: bf16[512,784], index: 8, kind: input, shape index: {}]
  %s9 = inlined_call_operand.vmem [shape: f32[1,784], index: 9, kind: input, shape index: {}]
  %s10 = inlined_call_operand.hbm [shape: bf16[8,784], index: 10, kind: output, shape index: {0}]
  %s11 = inlined_call_operand.hbm [shape: f32[8,128], index: 11, kind: output, shape index: {1}]
  %12 = xla_tuple %s10, %s11
  %s13 = sld [smem:[#allocation0]]
  $region58: #{tpu_custom_call.1} parent=0
    _
  %s15 = ssub.s32 1, %s13
  %s16 = scalar_select 0, %s15, %s13
  $region1: #{tpu_custom_call.1} parent=0
    #allocation2 [shape = 'u8[14336]{0}', space=vmem, size = 0x3800, scoped, tag = 'output window, operand 0, single buffered']
    #allocation3 [shape = 's32[1]{0}', space=sflag, size = 0x4, scoped, tag = 'scoped memory for tpu_custom_call.1']
    #allocation4 [shape = 'u8[4096]{0}', space=vmem, size = 0x1000, scoped, tag = 'output window, operand 1, single buffered']
    #allocation5 [shape = 's32[1]{0}', space=sflag, size = 0x4, scoped, tag = 'scoped memory for tpu_custom_call.1']
    %17 = vsyncpa [#allocation3], 0
    %18 = vsyncpa [#allocation5], 0
    // Predicated region
    $region2: #{tpu_custom_call.1} parent=1 // pred_check
      _
    $region3: #{tpu_custom_call.1} parent=1 // pred_check_branch
      %20 = sbr.rel (0) target = $region5
    $region4: #{tpu_custom_call.1} parent=1 // pred_region
      _
    $region5: #{tpu_custom_call.1} parent=1 // pred_fallthru
      _
    // Predicated region
    $region6: #{tpu_custom_call.1} parent=1 // pred_check
      _
    $region7: #{tpu_custom_call.1} parent=1 // pred_check_branch
      %22 = sbr.rel (0) target = $region9
    $region8: #{tpu_custom_call.1} parent=1 // pred_region
      _
    $region9: #{tpu_custom_call.1} parent=1 // pred_fallthru
      _
    // Predicated region
    $region10: #{tpu_custom_call.1} parent=1 // pred_check
      _
    $region11: #{tpu_custom_call.1} parent=1 // pred_check_branch
      %24 = sbr.rel (0) target = $region13
    $region12: #{tpu_custom_call.1} parent=1 // pred_region
      _
    $region13: #{tpu_custom_call.1} parent=1 // pred_fallthru
      _
    // Predicated region
    $region14: #{tpu_custom_call.1} parent=1 // pred_check
      _
    $region15: #{tpu_custom_call.1} parent=1 // pred_check_branch
      %26 = sbr.rel (0) target = $region17
    $region16: #{tpu_custom_call.1} parent=1 // pred_region
      _
    $region17: #{tpu_custom_call.1} parent=1 // pred_fallthru
      _
    // Predicated region
    $region18: #{tpu_custom_call.1} parent=1 // pred_check
      _
    $region19: #{tpu_custom_call.1} parent=1 // pred_check_branch
      %28 = sbr.rel (0) target = $region21
    $region20: #{tpu_custom_call.1} parent=1 // pred_region
      _
    $region21: #{tpu_custom_call.1} parent=1 // pred_fallthru
      _
    // Predicated region
    $region22: #{tpu_custom_call.1} parent=1 // pred_check
      _
    $region23: #{tpu_custom_call.1} parent=1 // pred_check_branch
      %30 = sbr.rel (0) target = $region25
    $region24: #{tpu_custom_call.1} parent=1 // pred_region
      _
    $region25: #{tpu_custom_call.1} parent=1 // pred_fallthru
      _
    // Predicated region
    $region26: #{tpu_custom_call.1} parent=1 // pred_check
      _
    $region27: #{tpu_custom_call.1} parent=1 // pred_check_branch
      %32 = sbr.rel (0) target = $region29
    $region28: #{tpu_custom_call.1} parent=1 // pred_region
      _
    $region29: #{tpu_custom_call.1} parent=1 // pred_fallthru
      _
    // Predicated region
    $region30: #{tpu_custom_call.1} parent=1 // pred_check
      _
    $region31: #{tpu_custom_call.1} parent=1 // pred_check_branch
      %34 = sbr.rel (0) target = $region33
    $region32: #{tpu_custom_call.1} parent=1 // pred_region
      _
    $region33: #{tpu_custom_call.1} parent=1 // pred_fallthru
      _
    // Predicated region
    $region34: #{tpu_custom_call.1} parent=1 // pred_check
      _
    $region35: #{tpu_custom_call.1} parent=1 // pred_check_branch
      %36 = sbr.rel (0) target = $region37
    $region36: #{tpu_custom_call.1} parent=1 // pred_region
      _
    $region37: #{tpu_custom_call.1} parent=1 // pred_fallthru
      _
    // Predicated region
    $region38: #{tpu_custom_call.1} parent=1 // pred_check
      _
    $region39: #{tpu_custom_call.1} parent=1 // pred_check_branch
      %38 = sbr.rel (0) target = $region41
    $region40: #{tpu_custom_call.1} parent=1 // pred_region
      _
    $region41: #{tpu_custom_call.1} parent=1 // pred_fallthru
      _
    %v40 = vld [vmem:[%s0] sm:$0xff]
    %v41 = vld [vmem:[%s0 + $0x8] sm:$0xff]
    %v42 = vld [vmem:[%s0 + $0x10] sm:$0xff]
    %v43 = vld [vmem:[%s0 + $0x18] sm:$0xf]
    %v44 = vld [vmem:[%s2] sm:$0xff]
    %v45 = vld [vmem:[%s2 + $0x8] sm:$0xff]
    %v46 = vld [vmem:[%s2 + $0x10] sm:$0xff]
    %v47 = vld [vmem:[%s2 + $0x18] sm:$0xff]
    %v48 = vld [vmem:[%s2 + $0x20] sm:$0xff]
    %v49 = vld [vmem:[%s2 + $0x28] sm:$0xff]
    %v50 = vld [vmem:[%s2 + $0x30] sm:$0xff]
    %v51 = vld [vmem:[%s2 + $0x38] sm:$0xff]
    %v52 = vld [vmem:[%s2 + $0x40] sm:$0xff]
    %v53 = vld [vmem:[%s2 + $0x48] sm:$0xff]
    %v54 = vld [vmem:[%s2 + $0x50] sm:$0xff]
    %v55 = vld [vmem:[%s2 + $0x58] sm:$0xff]
    %v56 = vld [vmem:[%s2 + $0x60] sm:$0xff]
    %v57 = vld [vmem:[%s2 + $0x68] sm:$0xff]
    %v58 = vld [vmem:[%s2 + $0x70] sm:$0xff]
    %v59 = vld [vmem:[%s2 + $0x78] sm:$0xff]
    %v60 = vld [vmem:[%s2 + $0x80] sm:$0xff]
    %v61 = vld [vmem:[%s2 + $0x88] sm:$0xff]
    %v62 = vld [vmem:[%s2 + $0x90] sm:$0xff]
    %v63 = vld [vmem:[%s2 + $0x98] sm:$0xff]
    %v64 = vld [vmem:[%s2 + $0xa0] sm:$0xff]
    %v65 = vld [vmem:[%s2 + $0xa8] sm:$0xff]
    %v66 = vld [vmem:[%s2 + $0xb0] sm:$0xff]
    %v67 = vld [vmem:[%s2 + $0xb8] sm:$0xff]
    %v68 = vld [vmem:[%s2 + $0xc0] sm:$0xff]
    %v69 = vld [vmem:[%s2 + $0xc8] sm:$0xff]
    %v70 = vld [vmem:[%s2 + $0xd0] sm:$0xff]
    %v71 = vld [vmem:[%s2 + $0xd8] sm:$0xff]
    %v72 = vld [vmem:[%s2 + $0xe0] sm:$0xff]
    %v73 = vld [vmem:[%s2 + $0xe8] sm:$0xff]
    %v74 = vld [vmem:[%s2 + $0xf0] sm:$0xff]
    %v75 = vld [vmem:[%s2 + $0xf8] sm:$0xff]
    %v76 = vld [vmem:[%s2 + $0x100] sm:$0xff]
    %v77 = vld [vmem:[%s2 + $0x108] sm:$0xff]
    %v78 = vld [vmem:[%s2 + $0x110] sm:$0xff]
    %v79 = vld [vmem:[%s2 + $0x118] sm:$0xff]
    %v80 = vld [vmem:[%s2 + $0x120] sm:$0xff]
    %v81 = vld [vmem:[%s2 + $0x128] sm:$0xff]
    %v82 = vld [vmem:[%s2 + $0x130] sm:$0xff]
    %v83 = vld [vmem:[%s2 + $0x138] sm:$0xff]
    %v84 = vld [vmem:[%s2 + $0x140] sm:$0xff]
    %v85 = vld [vmem:[%s2 + $0x148] sm:$0xff]
    %v86 = vld [vmem:[%s2 + $0x150] sm:$0xff]
    %v87 = vld [vmem:[%s2 + $0x158] sm:$0xff]
    %v88 = vld [vmem:[%s2 + $0x160] sm:$0xff]
    %v89 = vld [vmem:[%s2 + $0x168] sm:$0xff]
    %v90 = vld [vmem:[%s2 + $0x170] sm:$0xff]
    %v91 = vld [vmem:[%s2 + $0x178] sm:$0xff]
    %v92 = vld [vmem:[%s2 + $0x180] sm:$0xff]
    %v93 = vld [vmem:[%s2 + $0x188] sm:$0xff]
    %v94 = vld [vmem:[%s2 + $0x190] sm:$0xff]
    %v95 = vld [vmem:[%s2 + $0x198] sm:$0xff]
    %v96 = vld [vmem:[%s2 + $0x1a0] sm:$0xff]
    %v97 = vld [vmem:[%s2 + $0x1a8] sm:$0xff]
    %v98 = vld [vmem:[%s2 + $0x1b0] sm:$0xff]
    %v99 = vld [vmem:[%s2 + $0x1b8] sm:$0xff]
    %v100 = vld [vmem:[%s2 + $0x1c0] sm:$0xff]
    %v101 = vld [vmem:[%s2 + $0x1c8] sm:$0xff]
    %v102 = vld [vmem:[%s2 + $0x1d0] sm:$0xff]
    %v103 = vld [vmem:[%s2 + $0x1d8] sm:$0xff]
    %v104 = vld [vmem:[%s2 + $0x1e0] sm:$0xff]
    %v105 = vld [vmem:[%s2 + $0x1e8] sm:$0xff]
    %v106 = vld [vmem:[%s2 + $0x1f0] sm:$0xff]
    %v107 = vld [vmem:[%s2 + $0x1f8] sm:$0xff]
    %v108 = vld [vmem:[%s2 + $0x200] sm:$0xff]
    %v109 = vld [vmem:[%s2 + $0x208] sm:$0xff]
    %v110 = vld [vmem:[%s2 + $0x210] sm:$0xff]
    %v111 = vld [vmem:[%s2 + $0x218] sm:$0xff]
    %v112 = vld [vmem:[%s2 + $0x220] sm:$0xff]
    %v113 = vld [vmem:[%s2 + $0x228] sm:$0xff]
    %v114 = vld [vmem:[%s2 + $0x230] sm:$0xff]
    %v115 = vld [vmem:[%s2 + $0x238] sm:$0xff]
    %v116 = vld [vmem:[%s2 + $0x240] sm:$0xff]
    %v117 = vld [vmem:[%s2 + $0x248] sm:$0xff]
    %v118 = vld [vmem:[%s2 + $0x250] sm:$0xff]
    %v119 = vld [vmem:[%s2 + $0x258] sm:$0xff]
    %v120 = vld [vmem:[%s2 + $0x260] sm:$0xff]
    %v121 = vld [vmem:[%s2 + $0x268] sm:$0xff]
    %v122 = vld [vmem:[%s2 + $0x270] sm:$0xff]
    %v123 = vld [vmem:[%s2 + $0x278] sm:$0xff]
    %v124 = vld [vmem:[%s2 + $0x280] sm:$0xff]
    %v125 = vld [vmem:[%s2 + $0x288] sm:$0xff]
    %v126 = vld [vmem:[%s2 + $0x290] sm:$0xff]
    %v127 = vld [vmem:[%s2 + $0x298] sm:$0xff]
    %v128 = vld [vmem:[%s2 + $0x2a0] sm:$0xff]
    %v129 = vld [vmem:[%s2 + $0x2a8] sm:$0xff]
    %v130 = vld [vmem:[%s2 + $0x2b0] sm:$0xff]
    %v131 = vld [vmem:[%s2 + $0x2b8] sm:$0xff]
    %v132 = vld [vmem:[%s2 + $0x2c0] sm:$0xff]
    %v133 = vld [vmem:[%s2 + $0x2c8] sm:$0xff]
    %v134 = vld [vmem:[%s2 + $0x2d0] sm:$0xff]
    %v135 = vld [vmem:[%s2 + $0x2d8] sm:$0xff]
    %v136 = vld [vmem:[%s2 + $0x2e0] sm:$0xff]
    %v137 = vld [vmem:[%s2 + $0x2e8] sm:$0xff]
    %v138 = vld [vmem:[%s2 + $0x2f0] sm:$0xff]
    %v139 = vld [vmem:[%s2 + $0x2f8] sm:$0xff]
    %v140 = vld [vmem:[%s2 + $0x300] sm:$0xff]
    %v141 = vld [vmem:[%s2 + $0x308] sm:$0xff]
    %v142 = vld [vmem:[%s2 + $0x310] sm:$0xff]
    %v143 = vld [vmem:[%s2 + $0x318] sm:$0xff]
    %v144 = vld [vmem:[%s2 + $0x320] sm:$0xff]
    %v145 = vld [vmem:[%s2 + $0x328] sm:$0xff]
    %v146 = vld [vmem:[%s2 + $0x330] sm:$0xff]
    %v147 = vld [vmem:[%s2 + $0x338] sm:$0xff]
    %v148 = vld [vmem:[%s2 + $0x340] sm:$0xff]
    %v149 = vld [vmem:[%s2 + $0x348] sm:$0xff]
    %v150 = vld [vmem:[%s2 + $0x350] sm:$0xff]
    %v151 = vld [vmem:[%s2 + $0x358] sm:$0xff]
    %v152 = vld [vmem:[%s2 + $0x360] sm:$0xff]
    %v153 = vld [vmem:[%s2 + $0x368] sm:$0xff]
    %v154 = vld [vmem:[%s2 + $0x370] sm:$0xff]
    %v155 = vld [vmem:[%s2 + $0x378] sm:$0xff]
    %v156 = vld [vmem:[%s2 + $0x380] sm:$0xff]
    %v157 = vld [vmem:[%s2 + $0x388] sm:$0xff]
    %v158 = vld [vmem:[%s2 + $0x390] sm:$0xff]
    %v159 = vld [vmem:[%s2 + $0x398] sm:$0xff]
    %v160 = vld [vmem:[%s2 + $0x3a0] sm:$0xff]
    %v161 = vld [vmem:[%s2 + $0x3a8] sm:$0xff]
    %v162 = vld [vmem:[%s2 + $0x3b0] sm:$0xff]
    %v163 = vld [vmem:[%s2 + $0x3b8] sm:$0xff]
    %v164 = vld [vmem:[%s2 + $0x3c0] sm:$0xff]
    %v165 = vld [vmem:[%s2 + $0x3c8] sm:$0xff]
    %v166 = vld [vmem:[%s2 + $0x3d0] sm:$0xff]
    %v167 = vld [vmem:[%s2 + $0x3d8] sm:$0xff]
    %v168 = vld [vmem:[%s2 + $0x3e0] sm:$0xff]
    %v169 = vld [vmem:[%s2 + $0x3e8] sm:$0xff]
    %v170 = vld [vmem:[%s2 + $0x3f0] sm:$0xff]
    %v171 = vld [vmem:[%s2 + $0x3f8] sm:$0xff]
    %v172 = vld [vmem:[%s2 + $0x400] sm:$0xff]
    %v173 = vld [vmem:[%s2 + $0x408] sm:$0xff]
    %v174 = vld [vmem:[%s2 + $0x410] sm:$0xff]
    %v175 = vld [vmem:[%s2 + $0x418] sm:$0xff]
    %v176 = vld [vmem:[%s2 + $0x420] sm:$0xff]
    %v177 = vld [vmem:[%s2 + $0x428] sm:$0xff]
    %v178 = vld [vmem:[%s2 + $0x430] sm:$0xff]
    %v179 = vld [vmem:[%s2 + $0x438] sm:$0xff]
    %v180 = vld [vmem:[%s2 + $0x440] sm:$0xff]
    %v181 = vld [vmem:[%s2 + $0x448] sm:$0xff]
    %v182 = vld [vmem:[%s2 + $0x450] sm:$0xff]
    %v183 = vld [vmem:[%s2 + $0x458] sm:$0xff]
    %v184 = vld [vmem:[%s2 + $0x460] sm:$0xff]
    %v185 = vld [vmem:[%s2 + $0x468] sm:$0xff]
    %v186 = vld [vmem:[%s2 + $0x470] sm:$0xff]
    %v187 = vld [vmem:[%s2 + $0x478] sm:$0xff]
    %v188 = vld [vmem:[%s2 + $0x480] sm:$0xff]
    %v189 = vld [vmem:[%s2 + $0x488] sm:$0xff]
    %v190 = vld [vmem:[%s2 + $0x490] sm:$0xff]
    %v191 = vld [vmem:[%s2 + $0x498] sm:$0xff]
    %v192 = vld [vmem:[%s2 + $0x4a0] sm:$0xff]
    %v193 = vld [vmem:[%s2 + $0x4a8] sm:$0xff]
    %v194 = vld [vmem:[%s2 + $0x4b0] sm:$0xff]
    %v195 = vld [vmem:[%s2 + $0x4b8] sm:$0xff]
    %v196 = vld [vmem:[%s2 + $0x4c0] sm:$0xff]
    %v197 = vld [vmem:[%s2 + $0x4c8] sm:$0xff]
    %v198 = vld [vmem:[%s2 + $0x4d0] sm:$0xff]
    %v199 = vld [vmem:[%s2 + $0x4d8] sm:$0xff]
    %v200 = vld [vmem:[%s2 + $0x4e0] sm:$0xff]
    %v201 = vld [vmem:[%s2 + $0x4e8] sm:$0xff]
    %v202 = vld [vmem:[%s2 + $0x4f0] sm:$0xff]
    %v203 = vld [vmem:[%s2 + $0x4f8] sm:$0xff]
    %v204 = vld [vmem:[%s2 + $0x500] sm:$0xff]
    %v205 = vld [vmem:[%s2 + $0x508] sm:$0xff]
    %v206 = vld [vmem:[%s2 + $0x510] sm:$0xff]
    %v207 = vld [vmem:[%s2 + $0x518] sm:$0xff]
    %v208 = vld [vmem:[%s2 + $0x520] sm:$0xff]
    %v209 = vld [vmem:[%s2 + $0x528] sm:$0xff]
    %v210 = vld [vmem:[%s2 + $0x530] sm:$0xff]
    %v211 = vld [vmem:[%s2 + $0x538] sm:$0xff]
    %v212 = vld [vmem:[%s2 + $0x540] sm:$0xff]
    %v213 = vld [vmem:[%s2 + $0x548] sm:$0xff]
    %v214 = vld [vmem:[%s2 + $0x550] sm:$0xff]
    %v215 = vld [vmem:[%s2 + $0x558] sm:$0xff]
    %v216 = vld [vmem:[%s2 + $0x560] sm:$0xff]
    %v217 = vld [vmem:[%s2 + $0x568] sm:$0xff]
    %v218 = vld [vmem:[%s2 + $0x570] sm:$0xff]
    %v219 = vld [vmem:[%s2 + $0x578] sm:$0xff]
    %v220 = vld [vmem:[%s2 + $0x580] sm:$0xff]
    %v221 = vld [vmem:[%s2 + $0x588] sm:$0xff]
    %v222 = vld [vmem:[%s2 + $0x590] sm:$0xff]
    %v223 = vld [vmem:[%s2 + $0x598] sm:$0xff]
    %v224 = vld [vmem:[%s2 + $0x5a0] sm:$0xff]
    %v225 = vld [vmem:[%s2 + $0x5a8] sm:$0xff]
    %v226 = vld [vmem:[%s2 + $0x5b0] sm:$0xff]
    %v227 = vld [vmem:[%s2 + $0x5b8] sm:$0xff]
    %v228 = vld [vmem:[%s2 + $0x5c0] sm:$0xff]
    %v229 = vld [vmem:[%s2 + $0x5c8] sm:$0xff]
    %v230 = vld [vmem:[%s2 + $0x5d0] sm:$0xff]
    %v231 = vld [vmem:[%s2 + $0x5d8] sm:$0xff]
    %v232 = vld [vmem:[%s2 + $0x5e0] sm:$0xff]
    %v233 = vld [vmem:[%s2 + $0x5e8] sm:$0xff]
    %v234 = vld [vmem:[%s2 + $0x5f0] sm:$0xff]
    %v235 = vld [vmem:[%s2 + $0x5f8] sm:$0xff]
    %v236 = vld [vmem:[%s2 + $0x600] sm:$0xff]
    %v237 = vld [vmem:[%s2 + $0x608] sm:$0xff]
    %v238 = vld [vmem:[%s2 + $0x610] sm:$0xff]
    %v239 = vld [vmem:[%s2 + $0x618] sm:$0xff]
    %v240 = vld [vmem:[%s3] sm:$0xf]
    %v242 = vperm.slane %v240, 0
    %v243 = vperm.slane %v240, 1
    %v244 = vperm.slane %v240, 2
    %v245 = vperm.slane %v240, 3
    %v254 = vunpack.c.l.b16 %v40
    %v255 = vunpack.c.h.b16 %v40
    %v256 = vunpack.c.l.b16 %v41
    %v257 = vunpack.c.h.b16 %v41
    %v258 = vunpack.c.l.b16 %v42
    %v259 = vunpack.c.h.b16 %v42
    %v260 = vunpack.c.l.b16 %v43
    %v261 = vpack.c.b16 %v254, %v254
    %v262 = vpack.c.b16 %v255, %v255
    %v263 = vpack.c.b16 %v256, %v256
    %v264 = vpack.c.b16 %v257, %v257
    %v265 = vpack.c.b16 %v258, %v258
    %v266 = vpack.c.b16 %v259, %v259
    %v267 = vpack.c.b16 %v260, %v260
    %v470 = vunpack.c.l.b16 %v44
    %v471 = vunpack.c.h.b16 %v44
    %v472 = vunpack.c.l.b16 %v45
    %v473 = vunpack.c.h.b16 %v45
    %v474 = vunpack.c.l.b16 %v46
    %v475 = vunpack.c.h.b16 %v46
    %v476 = vunpack.c.l.b16 %v47
    %v477 = vunpack.c.h.b16 %v47
    %v478 = vunpack.c.l.b16 %v48
    %v479 = vunpack.c.h.b16 %v48
    %v480 = vunpack.c.l.b16 %v49
    %v481 = vunpack.c.h.b16 %v49
    %v482 = vunpack.c.l.b16 %v50
    %v483 = vunpack.c.h.b16 %v50
    %v484 = vunpack.c.l.b16 %v51
    %v485 = vunpack.c.h.b16 %v51
    %v486 = vunpack.c.l.b16 %v52
    %v487 = vunpack.c.h.b16 %v52
    %v488 = vunpack.c.l.b16 %v53
    %v489 = vunpack.c.h.b16 %v53
    %v490 = vunpack.c.l.b16 %v54
    %v491 = vunpack.c.h.b16 %v54
    %v492 = vunpack.c.l.b16 %v55
    %v493 = vunpack.c.h.b16 %v55
    %v494 = vunpack.c.l.b16 %v56
    %v495 = vunpack.c.h.b16 %v56
    %v496 = vunpack.c.l.b16 %v57
    %v497 = vunpack.c.h.b16 %v57
    %v498 = vunpack.c.l.b16 %v58
    %v499 = vunpack.c.h.b16 %v58
    %v500 = vunpack.c.l.b16 %v59
    %v501 = vunpack.c.h.b16 %v59
    %v502 = vunpack.c.l.b16 %v60
    %v503 = vunpack.c.h.b16 %v60
    %v504 = vunpack.c.l.b16 %v61
    %v505 = vunpack.c.h.b16 %v61
    %v506 = vunpack.c.l.b16 %v62
    %v507 = vunpack.c.h.b16 %v62
    %v508 = vunpack.c.l.b16 %v63
    %v509 = vunpack.c.h.b16 %v63
    %v510 = vunpack.c.l.b16 %v64
    %v511 = vunpack.c.h.b16 %v64
    %v512 = vunpack.c.l.b16 %v65
    %v513 = vunpack.c.h.b16 %v65
    %v514 = vunpack.c.l.b16 %v66
    %v515 = vunpack.c.h.b16 %v66
    %v516 = vunpack.c.l.b16 %v67
    %v517 = vunpack.c.h.b16 %v67
    %v518 = vunpack.c.l.b16 %v68
    %v519 = vunpack.c.h.b16 %v68
    %v520 = vunpack.c.l.b16 %v69
    %v521 = vunpack.c.h.b16 %v69
    %v522 = vunpack.c.l.b16 %v70
    %v523 = vunpack.c.h.b16 %v70
    %v524 = vunpack.c.l.b16 %v71
    %v525 = vunpack.c.h.b16 %v71
    %v526 = vunpack.c.l.b16 %v72
    %v527 = vunpack.c.h.b16 %v72
    %v528 = vunpack.c.l.b16 %v73
    %v529 = vunpack.c.h.b16 %v73
    %v530 = vunpack.c.l.b16 %v74
    %v531 = vunpack.c.h.b16 %v74
    %v532 = vunpack.c.l.b16 %v75
    %v533 = vunpack.c.h.b16 %v75
    %v534 = vunpack.c.l.b16 %v76
    %v535 = vunpack.c.h.b16 %v76
    %v536 = vunpack.c.l.b16 %v77
    %v537 = vunpack.c.h.b16 %v77
    %v538 = vunpack.c.l.b16 %v78
    %v539 = vunpack.c.h.b16 %v78
    %v540 = vunpack.c.l.b16 %v79
    %v541 = vunpack.c.h.b16 %v79
    %v542 = vunpack.c.l.b16 %v80
    %v543 = vunpack.c.h.b16 %v80
    %v544 = vunpack.c.l.b16 %v81
    %v545 = vunpack.c.h.b16 %v81
    %v546 = vunpack.c.l.b16 %v82
    %v547 = vunpack.c.h.b16 %v82
    %v548 = vunpack.c.l.b16 %v83
    %v549 = vunpack.c.h.b16 %v83
    %v550 = vunpack.c.l.b16 %v84
    %v551 = vunpack.c.h.b16 %v84
    %v552 = vunpack.c.l.b16 %v85
    %v553 = vunpack.c.h.b16 %v85
    %v554 = vunpack.c.l.b16 %v86
    %v555 = vunpack.c.h.b16 %v86
    %v556 = vunpack.c.l.b16 %v87
    %v557 = vunpack.c.h.b16 %v87
    %v558 = vunpack.c.l.b16 %v88
    %v559 = vunpack.c.h.b16 %v88
    %v560 = vunpack.c.l.b16 %v89
    %v561 = vunpack.c.h.b16 %v89
    %v562 = vunpack.c.l.b16 %v90
    %v563 = vunpack.c.h.b16 %v90
    %v564 = vunpack.c.l.b16 %v91
    %v565 = vunpack.c.h.b16 %v91
    %v566 = vunpack.c.l.b16 %v92
    %v567 = vunpack.c.h.b16 %v92
    %v568 = vunpack.c.l.b16 %v93
    %v569 = vunpack.c.h.b16 %v93
    %v570 = vunpack.c.l.b16 %v94
    %v571 = vunpack.c.h.b16 %v94
    %v572 = vunpack.c.l.b16 %v95
    %v573 = vunpack.c.h.b16 %v95
    %v574 = vunpack.c.l.b16 %v96
    %v575 = vunpack.c.h.b16 %v96
    %v576 = vunpack.c.l.b16 %v97
    %v577 = vunpack.c.h.b16 %v97
    %v578 = vunpack.c.l.b16 %v98
    %v579 = vunpack.c.h.b16 %v98
    %v580 = vunpack.c.l.b16 %v99
    %v581 = vunpack.c.h.b16 %v99
    %v582 = vunpack.c.l.b16 %v100
    %v583 = vunpack.c.h.b16 %v100
    %v584 = vunpack.c.l.b16 %v101
    %v585 = vunpack.c.h.b16 %v101
    %v586 = vunpack.c.l.b16 %v102
    %v587 = vunpack.c.h.b16 %v102
    %v588 = vunpack.c.l.b16 %v103
    %v589 = vunpack.c.h.b16 %v103
    %v590 = vunpack.c.l.b16 %v104
    %v591 = vunpack.c.h.b16 %v104
    %v592 = vunpack.c.l.b16 %v105
    %v593 = vunpack.c.h.b16 %v105
    %v594 = vunpack.c.l.b16 %v106
    %v595 = vunpack.c.h.b16 %v106
    %v596 = vunpack.c.l.b16 %v107
    %v597 = vunpack.c.h.b16 %v107
    %v598 = vunpack.c.l.b16 %v108
    %v599 = vunpack.c.h.b16 %v108
    %v600 = vunpack.c.l.b16 %v109
    %v601 = vunpack.c.h.b16 %v109
    %v602 = vunpack.c.l.b16 %v110
    %v603 = vunpack.c.h.b16 %v110
    %v604 = vunpack.c.l.b16 %v111
    %v605 = vunpack.c.h.b16 %v111
    %v606 = vunpack.c.l.b16 %v112
    %v607 = vunpack.c.h.b16 %v112
    %v608 = vunpack.c.l.b16 %v113
    %v609 = vunpack.c.h.b16 %v113
    %v610 = vunpack.c.l.b16 %v114
    %v611 = vunpack.c.h.b16 %v114
    %v612 = vunpack.c.l.b16 %v115
    %v613 = vunpack.c.h.b16 %v115
    %v614 = vunpack.c.l.b16 %v116
    %v615 = vunpack.c.h.b16 %v116
    %v616 = vunpack.c.l.b16 %v117
    %v617 = vunpack.c.h.b16 %v117
    %v618 = vunpack.c.l.b16 %v118
    %v619 = vunpack.c.h.b16 %v118
    %v620 = vunpack.c.l.b16 %v119
    %v621 = vunpack.c.h.b16 %v119
    %v622 = vunpack.c.l.b16 %v120
    %v623 = vunpack.c.h.b16 %v120
    %v624 = vunpack.c.l.b16 %v121
    %v625 = vunpack.c.h.b16 %v121
    %v626 = vunpack.c.l.b16 %v122
    %v627 = vunpack.c.h.b16 %v122
    %v628 = vunpack.c.l.b16 %v123
    %v629 = vunpack.c.h.b16 %v123
    %v630 = vunpack.c.l.b16 %v124
    %v631 = vunpack.c.h.b16 %v124
    %v632 = vunpack.c.l.b16 %v125
    %v633 = vunpack.c.h.b16 %v125
    %v634 = vunpack.c.l.b16 %v126
    %v635 = vunpack.c.h.b16 %v126
    %v636 = vunpack.c.l.b16 %v127
    %v637 = vunpack.c.h.b16 %v127
    %v638 = vunpack.c.l.b16 %v128
    %v639 = vunpack.c.h.b16 %v128
    %v640 = vunpack.c.l.b16 %v129
    %v641 = vunpack.c.h.b16 %v129
    %v642 = vunpack.c.l.b16 %v130
    %v643 = vunpack.c.h.b16 %v130
    %v644 = vunpack.c.l.b16 %v131
    %v645 = vunpack.c.h.b16 %v131
    %v646 = vunpack.c.l.b16 %v132
    %v647 = vunpack.c.h.b16 %v132
    %v648 = vunpack.c.l.b16 %v133
    %v649 = vunpack.c.h.b16 %v133
    %v650 = vunpack.c.l.b16 %v134
    %v651 = vunpack.c.h.b16 %v134
    %v652 = vunpack.c.l.b16 %v135
    %v653 = vunpack.c.h.b16 %v135
    %v654 = vunpack.c.l.b16 %v136
    %v655 = vunpack.c.h.b16 %v136
    %v656 = vunpack.c.l.b16 %v137
    %v657 = vunpack.c.h.b16 %v137
    %v658 = vunpack.c.l.b16 %v138
    %v659 = vunpack.c.h.b16 %v138
    %v660 = vunpack.c.l.b16 %v139
    %v661 = vunpack.c.h.b16 %v139
    %v662 = vunpack.c.l.b16 %v140
    %v663 = vunpack.c.h.b16 %v140
    %v664 = vunpack.c.l.b16 %v141
    %v665 = vunpack.c.h.b16 %v141
    %v666 = vunpack.c.l.b16 %v142
    %v667 = vunpack.c.h.b16 %v142
    %v668 = vunpack.c.l.b16 %v143
    %v669 = vunpack.c.h.b16 %v143
    %v670 = vunpack.c.l.b16 %v144
    %v671 = vunpack.c.h.b16 %v144
    %v672 = vunpack.c.l.b16 %v145
    %v673 = vunpack.c.h.b16 %v145
    %v674 = vunpack.c.l.b16 %v146
    %v675 = vunpack.c.h.b16 %v146
    %v676 = vunpack.c.l.b16 %v147
    %v677 = vunpack.c.h.b16 %v147
    %v678 = vunpack.c.l.b16 %v148
    %v679 = vunpack.c.h.b16 %v148
    %v680 = vunpack.c.l.b16 %v149
    %v681 = vunpack.c.h.b16 %v149
    %v682 = vunpack.c.l.b16 %v150
    %v683 = vunpack.c.h.b16 %v150
    %v684 = vunpack.c.l.b16 %v151
    %v685 = vunpack.c.h.b16 %v151
    %v686 = vunpack.c.l.b16 %v152
    %v687 = vunpack.c.h.b16 %v152
    %v688 = vunpack.c.l.b16 %v153
    %v689 = vunpack.c.h.b16 %v153
    %v690 = vunpack.c.l.b16 %v154
    %v691 = vunpack.c.h.b16 %v154
    %v692 = vunpack.c.l.b16 %v155
    %v693 = vunpack.c.h.b16 %v155
    %v694 = vunpack.c.l.b16 %v156
    %v695 = vunpack.c.h.b16 %v156
    %v696 = vunpack.c.l.b16 %v157
    %v697 = vunpack.c.h.b16 %v157
    %v698 = vunpack.c.l.b16 %v158
    %v699 = vunpack.c.h.b16 %v158
    %v700 = vunpack.c.l.b16 %v159
    %v701 = vunpack.c.h.b16 %v159
    %v702 = vunpack.c.l.b16 %v160
    %v703 = vunpack.c.h.b16 %v160
    %v704 = vunpack.c.l.b16 %v161
    %v705 = vunpack.c.h.b16 %v161
    %v706 = vunpack.c.l.b16 %v162
    %v707 = vunpack.c.h.b16 %v162
    %v708 = vunpack.c.l.b16 %v163
    %v709 = vunpack.c.h.b16 %v163
    %v710 = vunpack.c.l.b16 %v164
    %v711 = vunpack.c.h.b16 %v164
    %v712 = vunpack.c.l.b16 %v165
    %v713 = vunpack.c.h.b16 %v165
    %v714 = vunpack.c.l.b16 %v166
    %v715 = vunpack.c.h.b16 %v166
    %v716 = vunpack.c.l.b16 %v167
    %v717 = vunpack.c.h.b16 %v167
    %v718 = vunpack.c.l.b16 %v168
    %v719 = vunpack.c.h.b16 %v168
    %v720 = vunpack.c.l.b16 %v169
    %v721 = vunpack.c.h.b16 %v169
    %v722 = vunpack.c.l.b16 %v170
    %v723 = vunpack.c.h.b16 %v170
    %v724 = vunpack.c.l.b16 %v171
    %v725 = vunpack.c.h.b16 %v171
    %v726 = vunpack.c.l.b16 %v172
    %v727 = vunpack.c.h.b16 %v172
    %v728 = vunpack.c.l.b16 %v173
    %v729 = vunpack.c.h.b16 %v173
    %v730 = vunpack.c.l.b16 %v174
    %v731 = vunpack.c.h.b16 %v174
    %v732 = vunpack.c.l.b16 %v175
    %v733 = vunpack.c.h.b16 %v175
    %v734 = vunpack.c.l.b16 %v176
    %v735 = vunpack.c.h.b16 %v176
    %v736 = vunpack.c.l.b16 %v177
    %v737 = vunpack.c.h.b16 %v177
    %v738 = vunpack.c.l.b16 %v178
    %v739 = vunpack.c.h.b16 %v178
    %v740 = vunpack.c.l.b16 %v179
    %v741 = vunpack.c.h.b16 %v179
    %v742 = vunpack.c.l.b16 %v180
    %v743 = vunpack.c.h.b16 %v180
    %v744 = vunpack.c.l.b16 %v181
    %v745 = vunpack.c.h.b16 %v181
    %v746 = vunpack.c.l.b16 %v182
    %v747 = vunpack.c.h.b16 %v182
    %v748 = vunpack.c.l.b16 %v183
    %v749 = vunpack.c.h.b16 %v183
    %v750 = vunpack.c.l.b16 %v184
    %v751 = vunpack.c.h.b16 %v184
    %v752 = vunpack.c.l.b16 %v185
    %v753 = vunpack.c.h.b16 %v185
    %v754 = vunpack.c.l.b16 %v186
    %v755 = vunpack.c.h.b16 %v186
    %v756 = vunpack.c.l.b16 %v187
    %v757 = vunpack.c.h.b16 %v187
    %v758 = vunpack.c.l.b16 %v188
    %v759 = vunpack.c.h.b16 %v188
    %v760 = vunpack.c.l.b16 %v189
    %v761 = vunpack.c.h.b16 %v189
    %v762 = vunpack.c.l.b16 %v190
    %v763 = vunpack.c.h.b16 %v190
    %v764 = vunpack.c.l.b16 %v191
    %v765 = vunpack.c.h.b16 %v191
    %v766 = vunpack.c.l.b16 %v192
    %v767 = vunpack.c.h.b16 %v192
    %v768 = vunpack.c.l.b16 %v193
    %v769 = vunpack.c.h.b16 %v193
    %v770 = vunpack.c.l.b16 %v194
    %v771 = vunpack.c.h.b16 %v194
    %v772 = vunpack.c.l.b16 %v195
    %v773 = vunpack.c.h.b16 %v195
    %v774 = vunpack.c.l.b16 %v196
    %v775 = vunpack.c.h.b16 %v196
    %v776 = vunpack.c.l.b16 %v197
    %v777 = vunpack.c.h.b16 %v197
    %v778 = vunpack.c.l.b16 %v198
    %v779 = vunpack.c.h.b16 %v198
    %v780 = vunpack.c.l.b16 %v199
    %v781 = vunpack.c.h.b16 %v199
    %v782 = vunpack.c.l.b16 %v200
    %v783 = vunpack.c.h.b16 %v200
    %v784 = vunpack.c.l.b16 %v201
    %v785 = vunpack.c.h.b16 %v201
    %v786 = vunpack.c.l.b16 %v202
    %v787 = vunpack.c.h.b16 %v202
    %v788 = vunpack.c.l.b16 %v203
    %v789 = vunpack.c.h.b16 %v203
    %v790 = vunpack.c.l.b16 %v204
    %v791 = vunpack.c.h.b16 %v204
    %v792 = vunpack.c.l.b16 %v205
    %v793 = vunpack.c.h.b16 %v205
    %v794 = vunpack.c.l.b16 %v206
    %v795 = vunpack.c.h.b16 %v206
    %v796 = vunpack.c.l.b16 %v207
    %v797 = vunpack.c.h.b16 %v207
    %v798 = vunpack.c.l.b16 %v208
    %v799 = vunpack.c.h.b16 %v208
    %v800 = vunpack.c.l.b16 %v209
    %v801 = vunpack.c.h.b16 %v209
    %v802 = vunpack.c.l.b16 %v210
    %v803 = vunpack.c.h.b16 %v210
    %v804 = vunpack.c.l.b16 %v211
    %v805 = vunpack.c.h.b16 %v211
    %v806 = vunpack.c.l.b16 %v212
    %v807 = vunpack.c.h.b16 %v212
    %v808 = vunpack.c.l.b16 %v213
    %v809 = vunpack.c.h.b16 %v213
    %v810 = vunpack.c.l.b16 %v214
    %v811 = vunpack.c.h.b16 %v214
    %v812 = vunpack.c.l.b16 %v215
    %v813 = vunpack.c.h.b16 %v215
    %v814 = vunpack.c.l.b16 %v216
    %v815 = vunpack.c.h.b16 %v216
    %v816 = vunpack.c.l.b16 %v217
    %v817 = vunpack.c.h.b16 %v217
    %v818 = vunpack.c.l.b16 %v218
    %v819 = vunpack.c.h.b16 %v218
    %v820 = vunpack.c.l.b16 %v219
    %v821 = vunpack.c.h.b16 %v219
    %v822 = vunpack.c.l.b16 %v220
    %v823 = vunpack.c.h.b16 %v220
    %v824 = vunpack.c.l.b16 %v221
    %v825 = vunpack.c.h.b16 %v221
    %v826 = vunpack.c.l.b16 %v222
    %v827 = vunpack.c.h.b16 %v222
    %v828 = vunpack.c.l.b16 %v223
    %v829 = vunpack.c.h.b16 %v223
    %v830 = vunpack.c.l.b16 %v224
    %v831 = vunpack.c.h.b16 %v224
    %v832 = vunpack.c.l.b16 %v225
    %v833 = vunpack.c.h.b16 %v225
    %v834 = vunpack.c.l.b16 %v226
    %v835 = vunpack.c.h.b16 %v226
    %v836 = vunpack.c.l.b16 %v227
    %v837 = vunpack.c.h.b16 %v227
    %v838 = vunpack.c.l.b16 %v228
    %v839 = vunpack.c.h.b16 %v228
    %v840 = vunpack.c.l.b16 %v229
    %v841 = vunpack.c.h.b16 %v229
    %v842 = vunpack.c.l.b16 %v230
    %v843 = vunpack.c.h.b16 %v230
    %v844 = vunpack.c.l.b16 %v231
    %v845 = vunpack.c.h.b16 %v231
    %v846 = vunpack.c.l.b16 %v232
    %v847 = vunpack.c.h.b16 %v232
    %v848 = vunpack.c.l.b16 %v233
    %v849 = vunpack.c.h.b16 %v233
    %v850 = vunpack.c.l.b16 %v234
    %v851 = vunpack.c.h.b16 %v234
    %v852 = vunpack.c.l.b16 %v235
    %v853 = vunpack.c.h.b16 %v235
    %v854 = vunpack.c.l.b16 %v236
    %v855 = vunpack.c.h.b16 %v236
    %v856 = vunpack.c.l.b16 %v237
    %v857 = vunpack.c.h.b16 %v237
    %v858 = vunpack.c.l.b16 %v238
    %v859 = vunpack.c.h.b16 %v238
    %v860 = vunpack.c.l.b16 %v239
    %v861 = vunpack.c.h.b16 %v239
    %v862 = vpack.c.b16 %v474, %v470
    %v863 = vpack.c.b16 %v475, %v471
    %v864 = vpack.c.b16 %v476, %v472
    %v865 = vpack.c.b16 %v477, %v473
    %v866 = vpack.c.b16 %v482, %v478
    %v867 = vpack.c.b16 %v483, %v479
    %v868 = vpack.c.b16 %v484, %v480
    %v869 = vpack.c.b16 %v485, %v481
    %v870 = vpack.c.b16 %v490, %v486
    %v871 = vpack.c.b16 %v491, %v487
    %v872 = vpack.c.b16 %v492, %v488
    %v873 = vpack.c.b16 %v493, %v489
    %v874 = vpack.c.b16 %v498, %v494
    %v875 = vpack.c.b16 %v499, %v495
    %v876 = vpack.c.b16 %v500, %v496
    %v877 = vpack.c.b16 %v501, %v497
    %v878 = vpack.c.b16 %v506, %v502
    %v879 = vpack.c.b16 %v507, %v503
    %v880 = vpack.c.b16 %v508, %v504
    %v881 = vpack.c.b16 %v509, %v505
    %v882 = vpack.c.b16 %v514, %v510
    %v883 = vpack.c.b16 %v515, %v511
    %v884 = vpack.c.b16 %v516, %v512
    %v885 = vpack.c.b16 %v517, %v513
    %v886 = vpack.c.b16 %v522, %v518
    %v887 = vpack.c.b16 %v523, %v519
    %v888 = vpack.c.b16 %v524, %v520
    %v889 = vpack.c.b16 %v525, %v521
    %v890 = vpack.c.b16 %v530, %v526
    %v891 = vpack.c.b16 %v531, %v527
    %v892 = vpack.c.b16 %v532, %v528
    %v893 = vpack.c.b16 %v533, %v529
    %v894 = vpack.c.b16 %v538, %v534
    %v895 = vpack.c.b16 %v539, %v535
    %v896 = vpack.c.b16 %v540, %v536
    %v897 = vpack.c.b16 %v541, %v537
    %v898 = vpack.c.b16 %v546, %v542
    %v899 = vpack.c.b16 %v547, %v543
    %v900 = vpack.c.b16 %v548, %v544
    %v901 = vpack.c.b16 %v549, %v545
    %v902 = vpack.c.b16 %v554, %v550
    %v903 = vpack.c.b16 %v555, %v551
    %v904 = vpack.c.b16 %v556, %v552
    %v905 = vpack.c.b16 %v557, %v553
    %v906 = vpack.c.b16 %v562, %v558
    %v907 = vpack.c.b16 %v563, %v559
    %v908 = vpack.c.b16 %v564, %v560
    %v909 = vpack.c.b16 %v565, %v561
    %v910 = vpack.c.b16 %v570, %v566
    %v911 = vpack.c.b16 %v571, %v567
    %v912 = vpack.c.b16 %v572, %v568
    %v913 = vpack.c.b16 %v573, %v569
    %v914 = vpack.c.b16 %v578, %v574
    %v915 = vpack.c.b16 %v579, %v575
    %v916 = vpack.c.b16 %v580, %v576
    %v917 = vpack.c.b16 %v581, %v577
    %v918 = vpack.c.b16 %v586, %v582
    %v919 = vpack.c.b16 %v587, %v583
    %v920 = vpack.c.b16 %v588, %v584
    %v921 = vpack.c.b16 %v589, %v585
    %v922 = vpack.c.b16 %v594, %v590
    %v923 = vpack.c.b16 %v595, %v591
    %v924 = vpack.c.b16 %v596, %v592
    %v925 = vpack.c.b16 %v597, %v593
    %v926 = vpack.c.b16 %v602, %v598
    %v927 = vpack.c.b16 %v603, %v599
    %v928 = vpack.c.b16 %v604, %v600
    %v929 = vpack.c.b16 %v605, %v601
    %v930 = vpack.c.b16 %v610, %v606
    %v931 = vpack.c.b16 %v611, %v607
    %v932 = vpack.c.b16 %v612, %v608
    %v933 = vpack.c.b16 %v613, %v609
    %v934 = vpack.c.b16 %v618, %v614
    %v935 = vpack.c.b16 %v619, %v615
    %v936 = vpack.c.b16 %v620, %v616
    %v937 = vpack.c.b16 %v621, %v617
    %v938 = vpack.c.b16 %v626, %v622
    %v939 = vpack.c.b16 %v627, %v623
    %v940 = vpack.c.b16 %v628, %v624
    %v941 = vpack.c.b16 %v629, %v625
    %v942 = vpack.c.b16 %v634, %v630
    %v943 = vpack.c.b16 %v635, %v631
    %v944 = vpack.c.b16 %v636, %v632
    %v945 = vpack.c.b16 %v637, %v633
    %v946 = vpack.c.b16 %v642, %v638
    %v947 = vpack.c.b16 %v643, %v639
    %v948 = vpack.c.b16 %v644, %v640
    %v949 = vpack.c.b16 %v645, %v641
    %v950 = vpack.c.b16 %v650, %v646
    %v951 = vpack.c.b16 %v651, %v647
    %v952 = vpack.c.b16 %v652, %v648
    %v953 = vpack.c.b16 %v653, %v649
    %v954 = vpack.c.b16 %v658, %v654
    %v955 = vpack.c.b16 %v659, %v655
    %v956 = vpack.c.b16 %v660, %v656
    %v957 = vpack.c.b16 %v661, %v657
    %v958 = vpack.c.b16 %v666, %v662
    %v959 = vpack.c.b16 %v667, %v663
    %v960 = vpack.c.b16 %v668, %v664
    %v961 = vpack.c.b16 %v669, %v665
    %v962 = vpack.c.b16 %v674, %v670
    %v963 = vpack.c.b16 %v675, %v671
    %v964 = vpack.c.b16 %v676, %v672
    %v965 = vpack.c.b16 %v677, %v673
    %v966 = vpack.c.b16 %v682, %v678
    %v967 = vpack.c.b16 %v683, %v679
    %v968 = vpack.c.b16 %v684, %v680
    %v969 = vpack.c.b16 %v685, %v681
    %v970 = vpack.c.b16 %v690, %v686
    %v971 = vpack.c.b16 %v691, %v687
    %v972 = vpack.c.b16 %v692, %v688
    %v973 = vpack.c.b16 %v693, %v689
    %v974 = vpack.c.b16 %v698, %v694
    %v975 = vpack.c.b16 %v699, %v695
    %v976 = vpack.c.b16 %v700, %v696
    %v977 = vpack.c.b16 %v701, %v697
    %v978 = vpack.c.b16 %v706, %v702
    %v979 = vpack.c.b16 %v707, %v703
    %v980 = vpack.c.b16 %v708, %v704
    %v981 = vpack.c.b16 %v709, %v705
    %v982 = vpack.c.b16 %v714, %v710
    %v983 = vpack.c.b16 %v715, %v711
    %v984 = vpack.c.b16 %v716, %v712
    %v985 = vpack.c.b16 %v717, %v713
    %v986 = vpack.c.b16 %v722, %v718
    %v987 = vpack.c.b16 %v723, %v719
    %v988 = vpack.c.b16 %v724, %v720
    %v989 = vpack.c.b16 %v725, %v721
    %v990 = vpack.c.b16 %v730, %v726
    %v991 = vpack.c.b16 %v731, %v727
    %v992 = vpack.c.b16 %v732, %v728
    %v993 = vpack.c.b16 %v733, %v729
    %v994 = vpack.c.b16 %v738, %v734
    %v995 = vpack.c.b16 %v739, %v735
    %v996 = vpack.c.b16 %v740, %v736
    %v997 = vpack.c.b16 %v741, %v737
    %v998 = vpack.c.b16 %v746, %v742
    %v999 = vpack.c.b16 %v747, %v743
    %v1000 = vpack.c.b16 %v748, %v744
    %v1001 = vpack.c.b16 %v749, %v745
    %v1002 = vpack.c.b16 %v754, %v750
    %v1003 = vpack.c.b16 %v755, %v751
    %v1004 = vpack.c.b16 %v756, %v752
    %v1005 = vpack.c.b16 %v757, %v753
    %v1006 = vpack.c.b16 %v762, %v758
    %v1007 = vpack.c.b16 %v763, %v759
    %v1008 = vpack.c.b16 %v764, %v760
    %v1009 = vpack.c.b16 %v765, %v761
    %v1010 = vpack.c.b16 %v770, %v766
    %v1011 = vpack.c.b16 %v771, %v767
    %v1012 = vpack.c.b16 %v772, %v768
    %v1013 = vpack.c.b16 %v773, %v769
    %v1014 = vpack.c.b16 %v778, %v774
    %v1015 = vpack.c.b16 %v779, %v775
    %v1016 = vpack.c.b16 %v780, %v776
    %v1017 = vpack.c.b16 %v781, %v777
    %v1018 = vpack.c.b16 %v786, %v782
    %v1019 = vpack.c.b16 %v787, %v783
    %v1020 = vpack.c.b16 %v788, %v784
    %v1021 = vpack.c.b16 %v789, %v785
    %v1022 = vpack.c.b16 %v794, %v790
    %v1023 = vpack.c.b16 %v795, %v791
    %v1024 = vpack.c.b16 %v796, %v792
    %v1025 = vpack.c.b16 %v797, %v793
    %v1026 = vpack.c.b16 %v802, %v798
    %v1027 = vpack.c.b16 %v803, %v799
    %v1028 = vpack.c.b16 %v804, %v800
    %v1029 = vpack.c.b16 %v805, %v801
    %v1030 = vpack.c.b16 %v810, %v806
    %v1031 = vpack.c.b16 %v811, %v807
    %v1032 = vpack.c.b16 %v812, %v808
    %v1033 = vpack.c.b16 %v813, %v809
    %v1034 = vpack.c.b16 %v818, %v814
    %v1035 = vpack.c.b16 %v819, %v815
    %v1036 = vpack.c.b16 %v820, %v816
    %v1037 = vpack.c.b16 %v821, %v817
    %v1038 = vpack.c.b16 %v826, %v822
    %v1039 = vpack.c.b16 %v827, %v823
    %v1040 = vpack.c.b16 %v828, %v824
    %v1041 = vpack.c.b16 %v829, %v825
    %v1042 = vpack.c.b16 %v834, %v830
    %v1043 = vpack.c.b16 %v835, %v831
    %v1044 = vpack.c.b16 %v836, %v832
    %v1045 = vpack.c.b16 %v837, %v833
    %v1046 = vpack.c.b16 %v842, %v838
    %v1047 = vpack.c.b16 %v843, %v839
    %v1048 = vpack.c.b16 %v844, %v840
    %v1049 = vpack.c.b16 %v845, %v841
    %v1050 = vpack.c.b16 %v850, %v846
    %v1051 = vpack.c.b16 %v851, %v847
    %v1052 = vpack.c.b16 %v852, %v848
    %v1053 = vpack.c.b16 %v853, %v849
    %v1054 = vpack.c.b16 %v858, %v854
    %v1055 = vpack.c.b16 %v859, %v855
    %v1056 = vpack.c.b16 %v860, %v856
    %v1057 = vpack.c.b16 %v861, %v857
    %vm1254 = vcmask 130048
    %v1256 = vsel %vm1254, %v267, 0
    %1258 = vmatpush.bf16.msra.mxu0 %v890
    %1259 = vmatpush.bf16.msra.mxu0 %v886
    %1260 = vmatpush.bf16.msra.mxu0 %v882
    %1261 = vmatpush.bf16.msra.mxu0 %v878
    %1262 = vmatpush.bf16.msra.mxu0 %v874
    %1263 = vmatpush.bf16.msra.mxu0 %v870
    %1264 = vmatpush.bf16.msra.mxu0 %v866
    %1265 = vmatpush.bf16.msra.mxu0 %v862
    %1266 = vmatmul.bf16.gmra.mxu0 %v261
    %v1267 = vpop.f32.mrf.mxu0
    %v1268 = vadd.f32 %v242, %v1267
    %v1269 = vpop.f32.mrf.mxu0
    %1270 = vdwg.mxu0
    %1271 = vmatpush.bf16.msra.mxu0 %v922
    %1272 = vmatpush.bf16.msra.mxu0 %v918
    %1273 = vmatpush.bf16.msra.mxu0 %v914
    %1274 = vmatpush.bf16.msra.mxu0 %v910
    %1275 = vmatpush.bf16.msra.mxu0 %v906
    %1276 = vmatpush.bf16.msra.mxu0 %v902
    %1277 = vmatpush.bf16.msra.mxu0 %v898
    %1278 = vmatpush.bf16.msra.mxu0 %v894
    %1279 = vmatmul.bf16.gmra.mxu0 %v262
    %v1280 = vpop.f32.mrf.mxu0
    %v1281 = vadd.f32 %v1268, %v1280
    %v1282 = vpop.f32.mrf.mxu0
    %1283 = vdwg.mxu0
    %1284 = vmatpush.bf16.msra.mxu0 %v954
    %1285 = vmatpush.bf16.msra.mxu0 %v950
    %1286 = vmatpush.bf16.msra.mxu0 %v946
    %1287 = vmatpush.bf16.msra.mxu0 %v942
    %1288 = vmatpush.bf16.msra.mxu0 %v938
    %1289 = vmatpush.bf16.msra.mxu0 %v934
    %1290 = vmatpush.bf16.msra.mxu0 %v930
    %1291 = vmatpush.bf16.msra.mxu0 %v926
    %1292 = vmatmul.bf16.gmra.mxu0 %v263
    %v1293 = vpop.f32.mrf.mxu0
    %v1294 = vadd.f32 %v1281, %v1293
    %v1295 = vpop.f32.mrf.mxu0
    %1296 = vdwg.mxu0
    %1297 = vmatpush.bf16.msra.mxu0 %v986
    %1298 = vmatpush.bf16.msra.mxu0 %v982
    %1299 = vmatpush.bf16.msra.mxu0 %v978
    %1300 = vmatpush.bf16.msra.mxu0 %v974
    %1301 = vmatpush.bf16.msra.mxu0 %v970
    %1302 = vmatpush.bf16.msra.mxu0 %v966
    %1303 = vmatpush.bf16.msra.mxu0 %v962
    %1304 = vmatpush.bf16.msra.mxu0 %v958
    %1305 = vmatmul.bf16.gmra.mxu0 %v264
    %v1306 = vpop.f32.mrf.mxu0
    %v1307 = vadd.f32 %v1294, %v1306
    %v1308 = vpop.f32.mrf.mxu0
    %1309 = vdwg.mxu0
    %1310 = vmatpush.bf16.msra.mxu0 %v1018
    %1311 = vmatpush.bf16.msra.mxu0 %v1014
    %1312 = vmatpush.bf16.msra.mxu0 %v1010
    %1313 = vmatpush.bf16.msra.mxu0 %v1006
    %1314 = vmatpush.bf16.msra.mxu0 %v1002
    %1315 = vmatpush.bf16.msra.mxu0 %v998
    %1316 = vmatpush.bf16.msra.mxu0 %v994
    %1317 = vmatpush.bf16.msra.mxu0 %v990
    %1318 = vmatmul.bf16.gmra.mxu0 %v265
    %v1319 = vpop.f32.mrf.mxu0
    %v1320 = vadd.f32 %v1307, %v1319
    %v1321 = vpop.f32.mrf.mxu0
    %1322 = vdwg.mxu0
    %1323 = vmatpush.bf16.msra.mxu0 %v1050
    %1324 = vmatpush.bf16.msra.mxu0 %v1046
    %1325 = vmatpush.bf16.msra.mxu0 %v1042
    %1326 = vmatpush.bf16.msra.mxu0 %v1038
    %1327 = vmatpush.bf16.msra.mxu0 %v1034
    %1328 = vmatpush.bf16.msra.mxu0 %v1030
    %1329 = vmatpush.bf16.msra.mxu0 %v1026
    %1330 = vmatpush.bf16.msra.mxu0 %v1022
    %1331 = vmatmul.bf16.gmra.mxu0 %v266
    %v1332 = vpop.f32.mrf.mxu0
    %v1333 = vadd.f32 %v1320, %v1332
    %v1334 = vpop.f32.mrf.mxu0
    %1335 = vdwg.mxu0
    %1336 = vmatpush.bf16.msra.mxu0 0
    %1337 = vmatpush.bf16.msra.mxu0 0
    %1338 = vmatpush.bf16.msra.mxu0 0
    %1339 = vmatpush.bf16.msra.mxu0 0
    %1340 = vmatpush.bf16.msra.mxu0 0
    %1341 = vmatpush.bf16.msra.mxu0 0
    %1342 = vmatpush.bf16.msra.mxu0 0
    %1343 = vmatpush.bf16.msra.mxu0 %v1054
    %1344 = vmatmul.bf16.gmra.mxu0 %v1256
    %v1345 = vpop.f32.mrf.mxu0
    %v1346 = vadd.f32 %v1333, %v1345
    %v1347 = vpop.f32.mrf.mxu0
    %1348 = vdwg.mxu0
    %1349 = vmatpush.bf16.msra.mxu0 %v891
    %1350 = vmatpush.bf16.msra.mxu0 %v887
    %1351 = vmatpush.bf16.msra.mxu0 %v883
    %1352 = vmatpush.bf16.msra.mxu0 %v879
    %1353 = vmatpush.bf16.msra.mxu0 %v875
    %1354 = vmatpush.bf16.msra.mxu0 %v871
    %1355 = vmatpush.bf16.msra.mxu0 %v867
    %1356 = vmatpush.bf16.msra.mxu0 %v863
    %1357 = vmatmul.bf16.gmra.mxu0 %v261
    %v1358 = vpop.f32.mrf.mxu0
    %v1359 = vadd.f32 %v243, %v1358
    %v1360 = vpop.f32.mrf.mxu0
    %1361 = vdwg.mxu0
    %1362 = vmatpush.bf16.msra.mxu0 %v923
    %1363 = vmatpush.bf16.msra.mxu0 %v919
    %1364 = vmatpush.bf16.msra.mxu0 %v915
    %1365 = vmatpush.bf16.msra.mxu0 %v911
    %1366 = vmatpush.bf16.msra.mxu0 %v907
    %1367 = vmatpush.bf16.msra.mxu0 %v903
    %1368 = vmatpush.bf16.msra.mxu0 %v899
    %1369 = vmatpush.bf16.msra.mxu0 %v895
    %1370 = vmatmul.bf16.gmra.mxu0 %v262
    %v1371 = vpop.f32.mrf.mxu0
    %v1372 = vadd.f32 %v1359, %v1371
    %v1373 = vpop.f32.mrf.mxu0
    %1374 = vdwg.mxu0
    %1375 = vmatpush.bf16.msra.mxu0 %v955
    %1376 = vmatpush.bf16.msra.mxu0 %v951
    %1377 = vmatpush.bf16.msra.mxu0 %v947
    %1378 = vmatpush.bf16.msra.mxu0 %v943
    %1379 = vmatpush.bf16.msra.mxu0 %v939
    %1380 = vmatpush.bf16.msra.mxu0 %v935
    %1381 = vmatpush.bf16.msra.mxu0 %v931
    %1382 = vmatpush.bf16.msra.mxu0 %v927
    %1383 = vmatmul.bf16.gmra.mxu0 %v263
    %v1384 = vpop.f32.mrf.mxu0
    %v1385 = vadd.f32 %v1372, %v1384
    %v1386 = vpop.f32.mrf.mxu0
    %1387 = vdwg.mxu0
    %1388 = vmatpush.bf16.msra.mxu0 %v987
    %1389 = vmatpush.bf16.msra.mxu0 %v983
    %1390 = vmatpush.bf16.msra.mxu0 %v979
    %1391 = vmatpush.bf16.msra.mxu0 %v975
    %1392 = vmatpush.bf16.msra.mxu0 %v971
    %1393 = vmatpush.bf16.msra.mxu0 %v967
    %1394 = vmatpush.bf16.msra.mxu0 %v963
    %1395 = vmatpush.bf16.msra.mxu0 %v959
    %1396 = vmatmul.bf16.gmra.mxu0 %v264
    %v1397 = vpop.f32.mrf.mxu0
    %v1398 = vadd.f32 %v1385, %v1397
    %v1399 = vpop.f32.mrf.mxu0
    %1400 = vdwg.mxu0
    %1401 = vmatpush.bf16.msra.mxu0 %v1019
    %1402 = vmatpush.bf16.msra.mxu0 %v1015
    %1403 = vmatpush.bf16.msra.mxu0 %v1011
    %1404 = vmatpush.bf16.msra.mxu0 %v1007
    %1405 = vmatpush.bf16.msra.mxu0 %v1003
    %1406 = vmatpush.bf16.msra.mxu0 %v999
    %1407 = vmatpush.bf16.msra.mxu0 %v995
    %1408 = vmatpush.bf16.msra.mxu0 %v991
    %1409 = vmatmul.bf16.gmra.mxu0 %v265
    %v1410 = vpop.f32.mrf.mxu0
    %v1411 = vadd.f32 %v1398, %v1410
    %v1412 = vpop.f32.mrf.mxu0
    %1413 = vdwg.mxu0
    %1414 = vmatpush.bf16.msra.mxu0 %v1051
    %1415 = vmatpush.bf16.msra.mxu0 %v1047
    %1416 = vmatpush.bf16.msra.mxu0 %v1043
    %1417 = vmatpush.bf16.msra.mxu0 %v1039
    %1418 = vmatpush.bf16.msra.mxu0 %v1035
    %1419 = vmatpush.bf16.msra.mxu0 %v1031
    %1420 = vmatpush.bf16.msra.mxu0 %v1027
    %1421 = vmatpush.bf16.msra.mxu0 %v1023
    %1422 = vmatmul.bf16.gmra.mxu0 %v266
    %v1423 = vpop.f32.mrf.mxu0
    %v1424 = vadd.f32 %v1411, %v1423
    %v1425 = vpop.f32.mrf.mxu0
    %1426 = vdwg.mxu0
    %1427 = vmatpush.bf16.msra.mxu0 0
    %1428 = vmatpush.bf16.msra.mxu0 0
    %1429 = vmatpush.bf16.msra.mxu0 0
    %1430 = vmatpush.bf16.msra.mxu0 0
    %1431 = vmatpush.bf16.msra.mxu0 0
    %1432 = vmatpush.bf16.msra.mxu0 0
    %1433 = vmatpush.bf16.msra.mxu0 0
    %1434 = vmatpush.bf16.msra.mxu0 %v1055
    %1435 = vmatmul.bf16.gmra.mxu0 %v1256
    %v1436 = vpop.f32.mrf.mxu0
    %v1437 = vadd.f32 %v1424, %v1436
    %v1438 = vpop.f32.mrf.mxu0
    %1439 = vdwg.mxu0
    %1440 = vmatpush.bf16.msra.mxu0 %v892
    %1441 = vmatpush.bf16.msra.mxu0 %v888
    %1442 = vmatpush.bf16.msra.mxu0 %v884
    %1443 = vmatpush.bf16.msra.mxu0 %v880
    %1444 = vmatpush.bf16.msra.mxu0 %v876
    %1445 = vmatpush.bf16.msra.mxu0 %v872
    %1446 = vmatpush.bf16.msra.mxu0 %v868
    %1447 = vmatpush.bf16.msra.mxu0 %v864
    %1448 = vmatmul.bf16.gmra.mxu0 %v261
    %v1449 = vpop.f32.mrf.mxu0
    %v1450 = vadd.f32 %v244, %v1449
    %v1451 = vpop.f32.mrf.mxu0
    %1452 = vdwg.mxu0
    %1453 = vmatpush.bf16.msra.mxu0 %v924
    %1454 = vmatpush.bf16.msra.mxu0 %v920
    %1455 = vmatpush.bf16.msra.mxu0 %v916
    %1456 = vmatpush.bf16.msra.mxu0 %v912
    %1457 = vmatpush.bf16.msra.mxu0 %v908
    %1458 = vmatpush.bf16.msra.mxu0 %v904
    %1459 = vmatpush.bf16.msra.mxu0 %v900
    %1460 = vmatpush.bf16.msra.mxu0 %v896
    %1461 = vmatmul.bf16.gmra.mxu0 %v262
    %v1462 = vpop.f32.mrf.mxu0
    %v1463 = vadd.f32 %v1450, %v1462
    %v1464 = vpop.f32.mrf.mxu0
    %1465 = vdwg.mxu0
    %1466 = vmatpush.bf16.msra.mxu0 %v956
    %1467 = vmatpush.bf16.msra.mxu0 %v952
    %1468 = vmatpush.bf16.msra.mxu0 %v948
    %1469 = vmatpush.bf16.msra.mxu0 %v944
    %1470 = vmatpush.bf16.msra.mxu0 %v940
    %1471 = vmatpush.bf16.msra.mxu0 %v936
    %1472 = vmatpush.bf16.msra.mxu0 %v932
    %1473 = vmatpush.bf16.msra.mxu0 %v928
    %1474 = vmatmul.bf16.gmra.mxu0 %v263
    %v1475 = vpop.f32.mrf.mxu0
    %v1476 = vadd.f32 %v1463, %v1475
    %v1477 = vpop.f32.mrf.mxu0
    %1478 = vdwg.mxu0
    %1479 = vmatpush.bf16.msra.mxu0 %v988
    %1480 = vmatpush.bf16.msra.mxu0 %v984
    %1481 = vmatpush.bf16.msra.mxu0 %v980
    %1482 = vmatpush.bf16.msra.mxu0 %v976
    %1483 = vmatpush.bf16.msra.mxu0 %v972
    %1484 = vmatpush.bf16.msra.mxu0 %v968
    %1485 = vmatpush.bf16.msra.mxu0 %v964
    %1486 = vmatpush.bf16.msra.mxu0 %v960
    %1487 = vmatmul.bf16.gmra.mxu0 %v264
    %v1488 = vpop.f32.mrf.mxu0
    %v1489 = vadd.f32 %v1476, %v1488
    %v1490 = vpop.f32.mrf.mxu0
    %1491 = vdwg.mxu0
    %1492 = vmatpush.bf16.msra.mxu0 %v1020
    %1493 = vmatpush.bf16.msra.mxu0 %v1016
    %1494 = vmatpush.bf16.msra.mxu0 %v1012
    %1495 = vmatpush.bf16.msra.mxu0 %v1008
    %1496 = vmatpush.bf16.msra.mxu0 %v1004
    %1497 = vmatpush.bf16.msra.mxu0 %v1000
    %1498 = vmatpush.bf16.msra.mxu0 %v996
    %1499 = vmatpush.bf16.msra.mxu0 %v992
    %1500 = vmatmul.bf16.gmra.mxu0 %v265
    %v1501 = vpop.f32.mrf.mxu0
    %v1502 = vadd.f32 %v1489, %v1501
    %v1503 = vpop.f32.mrf.mxu0
    %1504 = vdwg.mxu0
    %1505 = vmatpush.bf16.msra.mxu0 %v1052
    %1506 = vmatpush.bf16.msra.mxu0 %v1048
    %1507 = vmatpush.bf16.msra.mxu0 %v1044
    %1508 = vmatpush.bf16.msra.mxu0 %v1040
    %1509 = vmatpush.bf16.msra.mxu0 %v1036
    %1510 = vmatpush.bf16.msra.mxu0 %v1032
    %1511 = vmatpush.bf16.msra.mxu0 %v1028
    %1512 = vmatpush.bf16.msra.mxu0 %v1024
    %1513 = vmatmul.bf16.gmra.mxu0 %v266
    %v1514 = vpop.f32.mrf.mxu0
    %v1515 = vadd.f32 %v1502, %v1514
    %v1516 = vpop.f32.mrf.mxu0
    %1517 = vdwg.mxu0
    %1518 = vmatpush.bf16.msra.mxu0 0
    %1519 = vmatpush.bf16.msra.mxu0 0
    %1520 = vmatpush.bf16.msra.mxu0 0
    %1521 = vmatpush.bf16.msra.mxu0 0
    %1522 = vmatpush.bf16.msra.mxu0 0
    %1523 = vmatpush.bf16.msra.mxu0 0
    %1524 = vmatpush.bf16.msra.mxu0 0
    %1525 = vmatpush.bf16.msra.mxu0 %v1056
    %1526 = vmatmul.bf16.gmra.mxu0 %v1256
    %v1527 = vpop.f32.mrf.mxu0
    %v1528 = vadd.f32 %v1515, %v1527
    %v1529 = vpop.f32.mrf.mxu0
    %1530 = vdwg.mxu0
    %1531 = vmatpush.bf16.msra.mxu0 %v893
    %1532 = vmatpush.bf16.msra.mxu0 %v889
    %1533 = vmatpush.bf16.msra.mxu0 %v885
    %1534 = vmatpush.bf16.msra.mxu0 %v881
    %1535 = vmatpush.bf16.msra.mxu0 %v877
    %1536 = vmatpush.bf16.msra.mxu0 %v873
    %1537 = vmatpush.bf16.msra.mxu0 %v869
    %1538 = vmatpush.bf16.msra.mxu0 %v865
    %1539 = vmatmul.bf16.gmra.mxu0 %v261
    %v1540 = vpop.f32.mrf.mxu0
    %v1541 = vadd.f32 %v245, %v1540
    %v1542 = vpop.f32.mrf.mxu0
    %1543 = vdwg.mxu0
    %1544 = vmatpush.bf16.msra.mxu0 %v925
    %1545 = vmatpush.bf16.msra.mxu0 %v921
    %1546 = vmatpush.bf16.msra.mxu0 %v917
    %1547 = vmatpush.bf16.msra.mxu0 %v913
    %1548 = vmatpush.bf16.msra.mxu0 %v909
    %1549 = vmatpush.bf16.msra.mxu0 %v905
    %1550 = vmatpush.bf16.msra.mxu0 %v901
    %1551 = vmatpush.bf16.msra.mxu0 %v897
    %1552 = vmatmul.bf16.gmra.mxu0 %v262
    %v1553 = vpop.f32.mrf.mxu0
    %v1554 = vadd.f32 %v1541, %v1553
    %v1555 = vpop.f32.mrf.mxu0
    %1556 = vdwg.mxu0
    %1557 = vmatpush.bf16.msra.mxu0 %v957
    %1558 = vmatpush.bf16.msra.mxu0 %v953
    %1559 = vmatpush.bf16.msra.mxu0 %v949
    %1560 = vmatpush.bf16.msra.mxu0 %v945
    %1561 = vmatpush.bf16.msra.mxu0 %v941
    %1562 = vmatpush.bf16.msra.mxu0 %v937
    %1563 = vmatpush.bf16.msra.mxu0 %v933
    %1564 = vmatpush.bf16.msra.mxu0 %v929
    %1565 = vmatmul.bf16.gmra.mxu0 %v263
    %v1566 = vpop.f32.mrf.mxu0
    %v1567 = vadd.f32 %v1554, %v1566
    %v1568 = vpop.f32.mrf.mxu0
    %1569 = vdwg.mxu0
    %1570 = vmatpush.bf16.msra.mxu0 %v989
    %1571 = vmatpush.bf16.msra.mxu0 %v985
    %1572 = vmatpush.bf16.msra.mxu0 %v981
    %1573 = vmatpush.bf16.msra.mxu0 %v977
    %1574 = vmatpush.bf16.msra.mxu0 %v973
    %1575 = vmatpush.bf16.msra.mxu0 %v969
    %1576 = vmatpush.bf16.msra.mxu0 %v965
    %1577 = vmatpush.bf16.msra.mxu0 %v961
    %1578 = vmatmul.bf16.gmra.mxu0 %v264
    %v1579 = vpop.f32.mrf.mxu0
    %v1580 = vadd.f32 %v1567, %v1579
    %v1581 = vpop.f32.mrf.mxu0
    %1582 = vdwg.mxu0
    %1583 = vmatpush.bf16.msra.mxu0 %v1021
    %1584 = vmatpush.bf16.msra.mxu0 %v1017
    %1585 = vmatpush.bf16.msra.mxu0 %v1013
    %1586 = vmatpush.bf16.msra.mxu0 %v1009
    %1587 = vmatpush.bf16.msra.mxu0 %v1005
    %1588 = vmatpush.bf16.msra.mxu0 %v1001
    %1589 = vmatpush.bf16.msra.mxu0 %v997
    %1590 = vmatpush.bf16.msra.mxu0 %v993
    %1591 = vmatmul.bf16.gmra.mxu0 %v265
    %v1592 = vpop.f32.mrf.mxu0
    %v1593 = vadd.f32 %v1580, %v1592
    %v1594 = vpop.f32.mrf.mxu0
    %1595 = vdwg.mxu0
    %1596 = vmatpush.bf16.msra.mxu0 %v1053
    %1597 = vmatpush.bf16.msra.mxu0 %v1049
    %1598 = vmatpush.bf16.msra.mxu0 %v1045
    %1599 = vmatpush.bf16.msra.mxu0 %v1041
    %1600 = vmatpush.bf16.msra.mxu0 %v1037
    %1601 = vmatpush.bf16.msra.mxu0 %v1033
    %1602 = vmatpush.bf16.msra.mxu0 %v1029
    %1603 = vmatpush.bf16.msra.mxu0 %v1025
    %1604 = vmatmul.bf16.gmra.mxu0 %v266
    %v1605 = vpop.f32.mrf.mxu0
    %v1606 = vadd.f32 %v1593, %v1605
    %v1607 = vpop.f32.mrf.mxu0
    %1608 = vdwg.mxu0
    %1609 = vmatpush.bf16.msra.mxu0 0
    %1610 = vmatpush.bf16.msra.mxu0 0
    %1611 = vmatpush.bf16.msra.mxu0 0
    %1612 = vmatpush.bf16.msra.mxu0 0
    %1613 = vmatpush.bf16.msra.mxu0 0
    %1614 = vmatpush.bf16.msra.mxu0 0
    %1615 = vmatpush.bf16.msra.mxu0 0
    %1616 = vmatpush.bf16.msra.mxu0 %v1057
    %1617 = vmatmul.bf16.gmra.mxu0 %v1256
    %v1618 = vpop.f32.mrf.mxu0
    %v1619 = vadd.f32 %v1606, %v1618
    %v1620 = vpop.f32.mrf.mxu0
    %1621 = vdwg.mxu0
    %v1622 = vmax.f32 %v1346, 0.0
    %v1623 = vmax.f32 %v1437, 0.0
    %v1624 = vmax.f32 %v1528, 0.0
    %v1625 = vmax.f32 %v1619, 0.0
    %v1626 = vpack.c.bf16 %v1622, %v1622
    %v1627 = vpack.c.bf16 %v1623, %v1623
    %v1628 = vpack.c.bf16 %v1624, %v1624
    %v1629 = vpack.c.bf16 %v1625, %v1625
    %v1630 = vld [vmem:[%s4] sm:$0xf]
    %v1631 = vld [vmem:[%s4 + $0x4] sm:$0xf]
    %v1632 = vld [vmem:[%s4 + $0x8] sm:$0xf]
    %v1633 = vld [vmem:[%s4 + $0xc] sm:$0xf]
    %v1634 = vld [vmem:[%s4 + $0x10] sm:$0xf]
    %v1635 = vld [vmem:[%s4 + $0x14] sm:$0xf]
    %v1636 = vld [vmem:[%s4 + $0x18] sm:$0xf]
    %v1637 = vld [vmem:[%s4 + $0x1c] sm:$0xf]
    %v1638 = vld [vmem:[%s4 + $0x20] sm:$0xf]
    %v1639 = vld [vmem:[%s4 + $0x24] sm:$0xf]
    %v1640 = vld [vmem:[%s4 + $0x28] sm:$0xf]
    %v1641 = vld [vmem:[%s4 + $0x2c] sm:$0xf]
    %v1642 = vld [vmem:[%s4 + $0x30] sm:$0xf]
    %v1643 = vld [vmem:[%s4 + $0x34] sm:$0xf]
    %v1644 = vld [vmem:[%s4 + $0x38] sm:$0xf]
    %v1645 = vld [vmem:[%s4 + $0x3c] sm:$0xf]
    %v1646 = vld [vmem:[%s4 + $0x40] sm:$0xf]
    %v1647 = vld [vmem:[%s4 + $0x44] sm:$0xf]
    %v1648 = vld [vmem:[%s4 + $0x48] sm:$0xf]
    %v1649 = vld [vmem:[%s4 + $0x4c] sm:$0xf]
    %v1650 = vld [vmem:[%s4 + $0x50] sm:$0xf]
    %v1651 = vld [vmem:[%s4 + $0x54] sm:$0xf]
    %v1652 = vld [vmem:[%s4 + $0x58] sm:$0xf]
    %v1653 = vld [vmem:[%s4 + $0x5c] sm:$0xf]
    %v1654 = vld [vmem:[%s4 + $0x60] sm:$0xf]
    %v1655 = vld [vmem:[%s4 + $0x64] sm:$0xf]
    %v1656 = vld [vmem:[%s4 + $0x68] sm:$0xf]
    %v1657 = vld [vmem:[%s4 + $0x6c] sm:$0xf]
    %v1658 = vld [vmem:[%s4 + $0x70] sm:$0xf]
    %v1659 = vld [vmem:[%s4 + $0x74] sm:$0xf]
    %v1660 = vld [vmem:[%s4 + $0x78] sm:$0xf]
    %v1661 = vld [vmem:[%s4 + $0x7c] sm:$0xf]
    %v1662 = vld [vmem:[%s4 + $0x80] sm:$0xf]
    %v1663 = vld [vmem:[%s4 + $0x84] sm:$0xf]
    %v1664 = vld [vmem:[%s4 + $0x88] sm:$0xf]
    %v1665 = vld [vmem:[%s4 + $0x8c] sm:$0xf]
    %v1666 = vld [vmem:[%s4 + $0x90] sm:$0xf]
    %v1667 = vld [vmem:[%s4 + $0x94] sm:$0xf]
    %v1668 = vld [vmem:[%s4 + $0x98] sm:$0xf]
    %v1669 = vld [vmem:[%s4 + $0x9c] sm:$0xf]
    %v1670 = vld [vmem:[%s4 + $0xa0] sm:$0xf]
    %v1671 = vld [vmem:[%s4 + $0xa4] sm:$0xf]
    %v1672 = vld [vmem:[%s4 + $0xa8] sm:$0xf]
    %v1673 = vld [vmem:[%s4 + $0xac] sm:$0xf]
    %v1674 = vld [vmem:[%s4 + $0xb0] sm:$0xf]
    %v1675 = vld [vmem:[%s4 + $0xb4] sm:$0xf]
    %v1676 = vld [vmem:[%s4 + $0xb8] sm:$0xf]
    %v1677 = vld [vmem:[%s4 + $0xbc] sm:$0xf]
    %v1678 = vld [vmem:[%s4 + $0xc0] sm:$0xf]
    %v1679 = vld [vmem:[%s4 + $0xc4] sm:$0xf]
    %v1680 = vld [vmem:[%s4 + $0xc8] sm:$0xf]
    %v1681 = vld [vmem:[%s4 + $0xcc] sm:$0xf]
    %v1682 = vld [vmem:[%s4 + $0xd0] sm:$0xf]
    %v1683 = vld [vmem:[%s4 + $0xd4] sm:$0xf]
    %v1684 = vld [vmem:[%s4 + $0xd8] sm:$0xf]
    %v1685 = vld [vmem:[%s4 + $0xdc] sm:$0xf]
    %v1686 = vld [vmem:[%s4 + $0xe0] sm:$0xf]
    %v1687 = vld [vmem:[%s4 + $0xe4] sm:$0xf]
    %v1688 = vld [vmem:[%s4 + $0xe8] sm:$0xf]
    %v1689 = vld [vmem:[%s4 + $0xec] sm:$0xf]
    %v1690 = vld [vmem:[%s4 + $0xf0] sm:$0xf]
    %v1691 = vld [vmem:[%s4 + $0xf4] sm:$0xf]
    %v1692 = vld [vmem:[%s4 + $0xf8] sm:$0xf]
    %v1693 = vld [vmem:[%s4 + $0xfc] sm:$0xf]
    %v1694 = vld [vmem:[%s5] sm:$0x1]
    %v1696 = vperm.slane %v1694, 0
    %v1762 = vunpack.c.l.b16 %v1630
    %v1763 = vunpack.c.l.b16 %v1631
    %v1764 = vunpack.c.l.b16 %v1632
    %v1765 = vunpack.c.l.b16 %v1633
    %v1766 = vunpack.c.l.b16 %v1634
    %v1767 = vunpack.c.l.b16 %v1635
    %v1768 = vunpack.c.l.b16 %v1636
    %v1769 = vunpack.c.l.b16 %v1637
    %v1770 = vunpack.c.l.b16 %v1638
    %v1771 = vunpack.c.l.b16 %v1639
    %v1772 = vunpack.c.l.b16 %v1640
    %v1773 = vunpack.c.l.b16 %v1641
    %v1774 = vunpack.c.l.b16 %v1642
    %v1775 = vunpack.c.l.b16 %v1643
    %v1776 = vunpack.c.l.b16 %v1644
    %v1777 = vunpack.c.l.b16 %v1645
    %v1778 = vunpack.c.l.b16 %v1646
    %v1779 = vunpack.c.l.b16 %v1647
    %v1780 = vunpack.c.l.b16 %v1648
    %v1781 = vunpack.c.l.b16 %v1649
    %v1782 = vunpack.c.l.b16 %v1650
    %v1783 = vunpack.c.l.b16 %v1651
    %v1784 = vunpack.c.l.b16 %v1652
    %v1785 = vunpack.c.l.b16 %v1653
    %v1786 = vunpack.c.l.b16 %v1654
    %v1787 = vunpack.c.l.b16 %v1655
    %v1788 = vunpack.c.l.b16 %v1656
    %v1789 = vunpack.c.l.b16 %v1657
    %v1790 = vunpack.c.l.b16 %v1658
    %v1791 = vunpack.c.l.b16 %v1659
    %v1792 = vunpack.c.l.b16 %v1660
    %v1793 = vunpack.c.l.b16 %v1661
    %v1794 = vunpack.c.l.b16 %v1662
    %v1795 = vunpack.c.l.b16 %v1663
    %v1796 = vunpack.c.l.b16 %v1664
    %v1797 = vunpack.c.l.b16 %v1665
    %v1798 = vunpack.c.l.b16 %v1666
    %v1799 = vunpack.c.l.b16 %v1667
    %v1800 = vunpack.c.l.b16 %v1668
    %v1801 = vunpack.c.l.b16 %v1669
    %v1802 = vunpack.c.l.b16 %v1670
    %v1803 = vunpack.c.l.b16 %v1671
    %v1804 = vunpack.c.l.b16 %v1672
    %v1805 = vunpack.c.l.b16 %v1673
    %v1806 = vunpack.c.l.b16 %v1674
    %v1807 = vunpack.c.l.b16 %v1675
    %v1808 = vunpack.c.l.b16 %v1676
    %v1809 = vunpack.c.l.b16 %v1677
    %v1810 = vunpack.c.l.b16 %v1678
    %v1811 = vunpack.c.l.b16 %v1679
    %v1812 = vunpack.c.l.b16 %v1680
    %v1813 = vunpack.c.l.b16 %v1681
    %v1814 = vunpack.c.l.b16 %v1682
    %v1815 = vunpack.c.l.b16 %v1683
    %v1816 = vunpack.c.l.b16 %v1684
    %v1817 = vunpack.c.l.b16 %v1685
    %v1818 = vunpack.c.l.b16 %v1686
    %v1819 = vunpack.c.l.b16 %v1687
    %v1820 = vunpack.c.l.b16 %v1688
    %v1821 = vunpack.c.l.b16 %v1689
    %v1822 = vunpack.c.l.b16 %v1690
    %v1823 = vunpack.c.l.b16 %v1691
    %v1824 = vunpack.c.l.b16 %v1692
    %v1825 = vunpack.c.l.b16 %v1693
    %v1826 = vpack.c.b16 %v1763, %v1762
    %v1827 = vpack.c.b16 %v1765, %v1764
    %v1828 = vpack.c.b16 %v1767, %v1766
    %v1829 = vpack.c.b16 %v1769, %v1768
    %v1830 = vpack.c.b16 %v1771, %v1770
    %v1831 = vpack.c.b16 %v1773, %v1772
    %v1832 = vpack.c.b16 %v1775, %v1774
    %v1833 = vpack.c.b16 %v1777, %v1776
    %v1834 = vpack.c.b16 %v1779, %v1778
    %v1835 = vpack.c.b16 %v1781, %v1780
    %v1836 = vpack.c.b16 %v1783, %v1782
    %v1837 = vpack.c.b16 %v1785, %v1784
    %v1838 = vpack.c.b16 %v1787, %v1786
    %v1839 = vpack.c.b16 %v1789, %v1788
    %v1840 = vpack.c.b16 %v1791, %v1790
    %v1841 = vpack.c.b16 %v1793, %v1792
    %v1842 = vpack.c.b16 %v1795, %v1794
    %v1843 = vpack.c.b16 %v1797, %v1796
    %v1844 = vpack.c.b16 %v1799, %v1798
    %v1845 = vpack.c.b16 %v1801, %v1800
    %v1846 = vpack.c.b16 %v1803, %v1802
    %v1847 = vpack.c.b16 %v1805, %v1804
    %v1848 = vpack.c.b16 %v1807, %v1806
    %v1849 = vpack.c.b16 %v1809, %v1808
    %v1850 = vpack.c.b16 %v1811, %v1810
    %v1851 = vpack.c.b16 %v1813, %v1812
    %v1852 = vpack.c.b16 %v1815, %v1814
    %v1853 = vpack.c.b16 %v1817, %v1816
    %v1854 = vpack.c.b16 %v1819, %v1818
    %v1855 = vpack.c.b16 %v1821, %v1820
    %v1856 = vpack.c.b16 %v1823, %v1822
    %v1857 = vpack.c.b16 %v1825, %v1824
    %1890 = vmatpush.bf16.msra.mxu0 %v1833
    %1891 = vmatpush.bf16.msra.mxu0 %v1832
    %1892 = vmatpush.bf16.msra.mxu0 %v1831
    %1893 = vmatpush.bf16.msra.mxu0 %v1830
    %1894 = vmatpush.bf16.msra.mxu0 %v1829
    %1895 = vmatpush.bf16.msra.mxu0 %v1828
    %1896 = vmatpush.bf16.msra.mxu0 %v1827
    %1897 = vmatpush.bf16.msra.mxu0 %v1826
    %1898 = vmatmul.bf16.gmra.mxu0 %v1626
    %v1899 = vpop.f32.mrf.mxu0
    %v1900 = vadd.f32 %v1696, %v1899
    %v1901 = vpop.f32.mrf.mxu0
    %1902 = vdwg.mxu0
    %1903 = vmatpush.bf16.msra.mxu0 %v1841
    %1904 = vmatpush.bf16.msra.mxu0 %v1840
    %1905 = vmatpush.bf16.msra.mxu0 %v1839
    %1906 = vmatpush.bf16.msra.mxu0 %v1838
    %1907 = vmatpush.bf16.msra.mxu0 %v1837
    %1908 = vmatpush.bf16.msra.mxu0 %v1836
    %1909 = vmatpush.bf16.msra.mxu0 %v1835
    %1910 = vmatpush.bf16.msra.mxu0 %v1834
    %1911 = vmatmul.bf16.gmra.mxu0 %v1627
    %v1912 = vpop.f32.mrf.mxu0
    %v1913 = vadd.f32 %v1900, %v1912
    %v1914 = vpop.f32.mrf.mxu0
    %1915 = vdwg.mxu0
    %1916 = vmatpush.bf16.msra.mxu0 %v1849
    %1917 = vmatpush.bf16.msra.mxu0 %v1848
    %1918 = vmatpush.bf16.msra.mxu0 %v1847
    %1919 = vmatpush.bf16.msra.mxu0 %v1846
    %1920 = vmatpush.bf16.msra.mxu0 %v1845
    %1921 = vmatpush.bf16.msra.mxu0 %v1844
    %1922 = vmatpush.bf16.msra.mxu0 %v1843
    %1923 = vmatpush.bf16.msra.mxu0 %v1842
    %1924 = vmatmul.bf16.gmra.mxu0 %v1628
    %v1925 = vpop.f32.mrf.mxu0
    %v1926 = vadd.f32 %v1913, %v1925
    %v1927 = vpop.f32.mrf.mxu0
    %1928 = vdwg.mxu0
    %1929 = vmatpush.bf16.msra.mxu0 %v1857
    %1930 = vmatpush.bf16.msra.mxu0 %v1856
    %1931 = vmatpush.bf16.msra.mxu0 %v1855
    %1932 = vmatpush.bf16.msra.mxu0 %v1854
    %1933 = vmatpush.bf16.msra.mxu0 %v1853
    %1934 = vmatpush.bf16.msra.mxu0 %v1852
    %1935 = vmatpush.bf16.msra.mxu0 %v1851
    %1936 = vmatpush.bf16.msra.mxu0 %v1850
    %1937 = vmatmul.bf16.gmra.mxu0 %v1629
    %v1938 = vpop.f32.mrf.mxu0
    %v1939 = vadd.f32 %v1926, %v1938
    %v1940 = vpop.f32.mrf.mxu0
    %1941 = vdwg.mxu0
    %v1942 = vld [vmem:[%s1] sm:$0xff]
    %v1943 = vmul.f32 %v1939, 0.5
    %v1944 = vmul.f32 %v1943, 1.442695
    %v1945 = vpow.pop %v1944
    %1947 = vrot.lane.b32.xlu0 %v1945, 108
    %v1948 = vpop.permute.xlu0 %1947
    %v1950 = vmul.f32 %v1942, %v1948
    %v1951 = vadd.f32 %v1950, %v1939
    %v1952 = vpack.c.bf16 %v1951, %v1951
    %v1953 = vld [vmem:[%s6] sm:$0xff]
    %v1954 = vld [vmem:[%s6 + $0x8] sm:$0xff]
    %v1955 = vld [vmem:[%s6 + $0x10] sm:$0xff]
    %v1956 = vld [vmem:[%s6 + $0x18] sm:$0xff]
    %v1957 = vld [vmem:[%s6 + $0x20] sm:$0x33]
    %v1958 = vld [vmem:[%s6 + $0x28] sm:$0x33]
    %v1959 = vld [vmem:[%s7] sm:$0xf]
    %v1961 = vperm.slane %v1959, 0
    %v1962 = vperm.slane %v1959, 1
    %v1963 = vperm.slane %v1959, 2
    %v1964 = vperm.slane %v1959, 3
    %v1975 = vunpack.c.l.b16 %v1953
    %v1976 = vunpack.c.h.b16 %v1953
    %v1977 = vunpack.c.l.b16 %v1954
    %v1978 = vunpack.c.h.b16 %v1954
    %v1979 = vunpack.c.l.b16 %v1955
    %v1980 = vunpack.c.h.b16 %v1955
    %v1981 = vunpack.c.l.b16 %v1956
    %v1982 = vunpack.c.h.b16 %v1956
    %v1983 = vunpack.c.l.b16 %v1957
    %v1984 = vunpack.c.h.b16 %v1957
    %v1985 = vunpack.c.l.b16 %v1958
    %v1986 = vunpack.c.h.b16 %v1958
    %v1987 = vpack.c.b16 %v1979, %v1975
    %v1988 = vpack.c.b16 %v1980, %v1976
    %v1989 = vpack.c.b16 %v1981, %v1977
    %v1990 = vpack.c.b16 %v1982, %v1978
    %v1991 = vpack.c.b16 %v1983, %v1983
    %v1992 = vpack.c.b16 %v1984, %v1984
    %v1993 = vpack.c.b16 %v1985, %v1985
    %v1994 = vpack.c.b16 %v1986, %v1986
    %vm1999 = vcmask 162816
    %v2001 = vsel %vm1999, %v1952, 0
    %vm2003 = vcmask 1041408
    %v2005 = vsel %vm2003, %v1991, 0
    %v2008 = vsel %vm2003, %v1992, 0
    %v2011 = vsel %vm2003, %v1993, 0
    %v2014 = vsel %vm2003, %v1994, 0
    %2016 = vmatpush.bf16.msra.mxu0 0
    %2017 = vmatpush.bf16.msra.mxu0 0
    %2018 = vmatpush.bf16.msra.mxu0 0
    %2019 = vmatpush.bf16.msra.mxu0 0
    %2020 = vmatpush.bf16.msra.mxu0 0
    %2021 = vmatpush.bf16.msra.mxu0 0
    %2022 = vmatpush.bf16.msra.mxu0 %v2005
    %2023 = vmatpush.bf16.msra.mxu0 %v1987
    %2024 = vmatmul.bf16.gmra.mxu0 %v2001
    %v2025 = vpop.f32.mrf.mxu0
    %v2026 = vadd.f32 %v1961, %v2025
    %v2027 = vpop.f32.mrf.mxu0
    %2028 = vdwg.mxu0
    %2029 = vmatpush.bf16.msra.mxu0 0
    %2030 = vmatpush.bf16.msra.mxu0 0
    %2031 = vmatpush.bf16.msra.mxu0 0
    %2032 = vmatpush.bf16.msra.mxu0 0
    %2033 = vmatpush.bf16.msra.mxu0 0
    %2034 = vmatpush.bf16.msra.mxu0 0
    %2035 = vmatpush.bf16.msra.mxu0 %v2008
    %2036 = vmatpush.bf16.msra.mxu0 %v1988
    %2037 = vmatmul.bf16.gmra.mxu0 %v2001
    %v2038 = vpop.f32.mrf.mxu0
    %v2039 = vadd.f32 %v1962, %v2038
    %v2040 = vpop.f32.mrf.mxu0
    %2041 = vdwg.mxu0
    %2042 = vmatpush.bf16.msra.mxu0 0
    %2043 = vmatpush.bf16.msra.mxu0 0
    %2044 = vmatpush.bf16.msra.mxu0 0
    %2045 = vmatpush.bf16.msra.mxu0 0
    %2046 = vmatpush.bf16.msra.mxu0 0
    %2047 = vmatpush.bf16.msra.mxu0 0
    %2048 = vmatpush.bf16.msra.mxu0 %v2011
    %2049 = vmatpush.bf16.msra.mxu0 %v1989
    %2050 = vmatmul.bf16.gmra.mxu0 %v2001
    %v2051 = vpop.f32.mrf.mxu0
    %v2052 = vadd.f32 %v1963, %v2051
    %v2053 = vpop.f32.mrf.mxu0
    %2054 = vdwg.mxu0
    %2055 = vmatpush.bf16.msra.mxu0 0
    %2056 = vmatpush.bf16.msra.mxu0 0
    %2057 = vmatpush.bf16.msra.mxu0 0
    %2058 = vmatpush.bf16.msra.mxu0 0
    %2059 = vmatpush.bf16.msra.mxu0 0
    %2060 = vmatpush.bf16.msra.mxu0 0
    %2061 = vmatpush.bf16.msra.mxu0 %v2014
    %2062 = vmatpush.bf16.msra.mxu0 %v1990
    %2063 = vmatmul.bf16.gmra.mxu0 %v2001
    %v2064 = vpop.f32.mrf.mxu0
    %v2065 = vadd.f32 %v1964, %v2064
    %v2066 = vpop.f32.mrf.mxu0
    %2067 = vdwg.mxu0
    %v2068 = vmax.f32 %v2026, 0.0
    %v2069 = vmax.f32 %v2039, 0.0
    %v2070 = vmax.f32 %v2052, 0.0
    %v2071 = vmax.f32 %v2065, 0.0
    %v2072 = vpack.c.bf16 %v2068, %v2068
    %v2073 = vpack.c.bf16 %v2069, %v2069
    %v2074 = vpack.c.bf16 %v2070, %v2070
    %v2075 = vpack.c.bf16 %v2071, %v2071
    %v2076 = vld [vmem:[%s8] sm:$0xff]
    %v2077 = vld [vmem:[%s8 + $0x8] sm:$0xff]
    %v2078 = vld [vmem:[%s8 + $0x10] sm:$0xff]
    %v2079 = vld [vmem:[%s8 + $0x18] sm:$0xf]
    %v2080 = vld [vmem:[%s8 + $0x1c] sm:$0xff]
    %v2081 = vld [vmem:[%s8 + $0x24] sm:$0xff]
    %v2082 = vld [vmem:[%s8 + $0x2c] sm:$0xff]
    %v2083 = vld [vmem:[%s8 + $0x34] sm:$0xf]
    %v2084 = vld [vmem:[%s8 + $0x38] sm:$0xff]
    %v2085 = vld [vmem:[%s8 + $0x40] sm:$0xff]
    %v2086 = vld [vmem:[%s8 + $0x48] sm:$0xff]
    %v2087 = vld [vmem:[%s8 + $0x50] sm:$0xf]
    %v2088 = vld [vmem:[%s8 + $0x54] sm:$0xff]
    %v2089 = vld [vmem:[%s8 + $0x5c] sm:$0xff]
    %v2090 = vld [vmem:[%s8 + $0x64] sm:$0xff]
    %v2091 = vld [vmem:[%s8 + $0x6c] sm:$0xf]
    %v2092 = vld [vmem:[%s8 + $0x70] sm:$0xff]
    %v2093 = vld [vmem:[%s8 + $0x78] sm:$0xff]
    %v2094 = vld [vmem:[%s8 + $0x80] sm:$0xff]
    %v2095 = vld [vmem:[%s8 + $0x88] sm:$0xf]
    %v2096 = vld [vmem:[%s8 + $0x8c] sm:$0xff]
    %v2097 = vld [vmem:[%s8 + $0x94] sm:$0xff]
    %v2098 = vld [vmem:[%s8 + $0x9c] sm:$0xff]
    %v2099 = vld [vmem:[%s8 + $0xa4] sm:$0xf]
    %v2100 = vld [vmem:[%s8 + $0xa8] sm:$0xff]
    %v2101 = vld [vmem:[%s8 + $0xb0] sm:$0xff]
    %v2102 = vld [vmem:[%s8 + $0xb8] sm:$0xff]
    %v2103 = vld [vmem:[%s8 + $0xc0] sm:$0xf]
    %v2104 = vld [vmem:[%s8 + $0xc4] sm:$0xff]
    %v2105 = vld [vmem:[%s8 + $0xcc] sm:$0xff]
    %v2106 = vld [vmem:[%s8 + $0xd4] sm:$0xff]
    %v2107 = vld [vmem:[%s8 + $0xdc] sm:$0xf]
    %v2108 = vld [vmem:[%s8 + $0xe0] sm:$0xff]
    %v2109 = vld [vmem:[%s8 + $0xe8] sm:$0xff]
    %v2110 = vld [vmem:[%s8 + $0xf0] sm:$0xff]
    %v2111 = vld [vmem:[%s8 + $0xf8] sm:$0xf]
    %v2112 = vld [vmem:[%s8 + $0xfc] sm:$0xff]
    %v2113 = vld [vmem:[%s8 + $0x104] sm:$0xff]
    %v2114 = vld [vmem:[%s8 + $0x10c] sm:$0xff]
    %v2115 = vld [vmem:[%s8 + $0x114] sm:$0xf]
    %v2116 = vld [vmem:[%s8 + $0x118] sm:$0xff]
    %v2117 = vld [vmem:[%s8 + $0x120] sm:$0xff]
    %v2118 = vld [vmem:[%s8 + $0x128] sm:$0xff]
    %v2119 = vld [vmem:[%s8 + $0x130] sm:$0xf]
    %v2120 = vld [vmem:[%s8 + $0x134] sm:$0xff]
    %v2121 = vld [vmem:[%s8 + $0x13c] sm:$0xff]
    %v2122 = vld [vmem:[%s8 + $0x144] sm:$0xff]
    %v2123 = vld [vmem:[%s8 + $0x14c] sm:$0xf]
    %v2124 = vld [vmem:[%s8 + $0x150] sm:$0xff]
    %v2125 = vld [vmem:[%s8 + $0x158] sm:$0xff]
    %v2126 = vld [vmem:[%s8 + $0x160] sm:$0xff]
    %v2127 = vld [vmem:[%s8 + $0x168] sm:$0xf]
    %v2128 = vld [vmem:[%s8 + $0x16c] sm:$0xff]
    %v2129 = vld [vmem:[%s8 + $0x174] sm:$0xff]
    %v2130 = vld [vmem:[%s8 + $0x17c] sm:$0xff]
    %v2131 = vld [vmem:[%s8 + $0x184] sm:$0xf]
    %v2132 = vld [vmem:[%s8 + $0x188] sm:$0xff]
    %v2133 = vld [vmem:[%s8 + $0x190] sm:$0xff]
    %v2134 = vld [vmem:[%s8 + $0x198] sm:$0xff]
    %v2135 = vld [vmem:[%s8 + $0x1a0] sm:$0xf]
    %v2136 = vld [vmem:[%s8 + $0x1a4] sm:$0xff]
    %v2137 = vld [vmem:[%s8 + $0x1ac] sm:$0xff]
    %v2138 = vld [vmem:[%s8 + $0x1b4] sm:$0xff]
    %v2139 = vld [vmem:[%s8 + $0x1bc] sm:$0xf]
    %v2140 = vld [vmem:[%s8 + $0x1c0] sm:$0xff]
    %v2141 = vld [vmem:[%s8 + $0x1c8] sm:$0xff]
    %v2142 = vld [vmem:[%s8 + $0x1d0] sm:$0xff]
    %v2143 = vld [vmem:[%s8 + $0x1d8] sm:$0xf]
    %v2144 = vld [vmem:[%s8 + $0x1dc] sm:$0xff]
    %v2145 = vld [vmem:[%s8 + $0x1e4] sm:$0xff]
    %v2146 = vld [vmem:[%s8 + $0x1ec] sm:$0xff]
    %v2147 = vld [vmem:[%s8 + $0x1f4] sm:$0xf]
    %v2148 = vld [vmem:[%s8 + $0x1f8] sm:$0xff]
    %v2149 = vld [vmem:[%s8 + $0x200] sm:$0xff]
    %v2150 = vld [vmem:[%s8 + $0x208] sm:$0xff]
    %v2151 = vld [vmem:[%s8 + $0x210] sm:$0xf]
    %v2152 = vld [vmem:[%s8 + $0x214] sm:$0xff]
    %v2153 = vld [vmem:[%s8 + $0x21c] sm:$0xff]
    %v2154 = vld [vmem:[%s8 + $0x224] sm:$0xff]
    %v2155 = vld [vmem:[%s8 + $0x22c] sm:$0xf]
    %v2156 = vld [vmem:[%s8 + $0x230] sm:$0xff]
    %v2157 = vld [vmem:[%s8 + $0x238] sm:$0xff]
    %v2158 = vld [vmem:[%s8 + $0x240] sm:$0xff]
    %v2159 = vld [vmem:[%s8 + $0x248] sm:$0xf]
    %v2160 = vld [vmem:[%s8 + $0x24c] sm:$0xff]
    %v2161 = vld [vmem:[%s8 + $0x254] sm:$0xff]
    %v2162 = vld [vmem:[%s8 + $0x25c] sm:$0xff]
    %v2163 = vld [vmem:[%s8 + $0x264] sm:$0xf]
    %v2164 = vld [vmem:[%s8 + $0x268] sm:$0xff]
    %v2165 = vld [vmem:[%s8 + $0x270] sm:$0xff]
    %v2166 = vld [vmem:[%s8 + $0x278] sm:$0xff]
    %v2167 = vld [vmem:[%s8 + $0x280] sm:$0xf]
    %v2168 = vld [vmem:[%s8 + $0x284] sm:$0xff]
    %v2169 = vld [vmem:[%s8 + $0x28c] sm:$0xff]
    %v2170 = vld [vmem:[%s8 + $0x294] sm:$0xff]
    %v2171 = vld [vmem:[%s8 + $0x29c] sm:$0xf]
    %v2172 = vld [vmem:[%s8 + $0x2a0] sm:$0xff]
    %v2173 = vld [vmem:[%s8 + $0x2a8] sm:$0xff]
    %v2174 = vld [vmem:[%s8 + $0x2b0] sm:$0xff]
    %v2175 = vld [vmem:[%s8 + $0x2b8] sm:$0xf]
    %v2176 = vld [vmem:[%s8 + $0x2bc] sm:$0xff]
    %v2177 = vld [vmem:[%s8 + $0x2c4] sm:$0xff]
    %v2178 = vld [vmem:[%s8 + $0x2cc] sm:$0xff]
    %v2179 = vld [vmem:[%s8 + $0x2d4] sm:$0xf]
    %v2180 = vld [vmem:[%s8 + $0x2d8] sm:$0xff]
    %v2181 = vld [vmem:[%s8 + $0x2e0] sm:$0xff]
    %v2182 = vld [vmem:[%s8 + $0x2e8] sm:$0xff]
    %v2183 = vld [vmem:[%s8 + $0x2f0] sm:$0xf]
    %v2184 = vld [vmem:[%s8 + $0x2f4] sm:$0xff]
    %v2185 = vld [vmem:[%s8 + $0x2fc] sm:$0xff]
    %v2186 = vld [vmem:[%s8 + $0x304] sm:$0xff]
    %v2187 = vld [vmem:[%s8 + $0x30c] sm:$0xf]
    %v2188 = vld [vmem:[%s8 + $0x310] sm:$0xff]
    %v2189 = vld [vmem:[%s8 + $0x318] sm:$0xff]
    %v2190 = vld [vmem:[%s8 + $0x320] sm:$0xff]
    %v2191 = vld [vmem:[%s8 + $0x328] sm:$0xf]
    %v2192 = vld [vmem:[%s8 + $0x32c] sm:$0xff]
    %v2193 = vld [vmem:[%s8 + $0x334] sm:$0xff]
    %v2194 = vld [vmem:[%s8 + $0x33c] sm:$0xff]
    %v2195 = vld [vmem:[%s8 + $0x344] sm:$0xf]
    %v2196 = vld [vmem:[%s8 + $0x348] sm:$0xff]
    %v2197 = vld [vmem:[%s8 + $0x350] sm:$0xff]
    %v2198 = vld [vmem:[%s8 + $0x358] sm:$0xff]
    %v2199 = vld [vmem:[%s8 + $0x360] sm:$0xf]
    %v2200 = vld [vmem:[%s8 + $0x364] sm:$0xff]
    %v2201 = vld [vmem:[%s8 + $0x36c] sm:$0xff]
    %v2202 = vld [vmem:[%s8 + $0x374] sm:$0xff]
    %v2203 = vld [vmem:[%s8 + $0x37c] sm:$0xf]
    %v2204 = vld [vmem:[%s8 + $0x380] sm:$0xff]
    %v2205 = vld [vmem:[%s8 + $0x388] sm:$0xff]
    %v2206 = vld [vmem:[%s8 + $0x390] sm:$0xff]
    %v2207 = vld [vmem:[%s8 + $0x398] sm:$0xf]
    %v2208 = vld [vmem:[%s8 + $0x39c] sm:$0xff]
    %v2209 = vld [vmem:[%s8 + $0x3a4] sm:$0xff]
    %v2210 = vld [vmem:[%s8 + $0x3ac] sm:$0xff]
    %v2211 = vld [vmem:[%s8 + $0x3b4] sm:$0xf]
    %v2212 = vld [vmem:[%s8 + $0x3b8] sm:$0xff]
    %v2213 = vld [vmem:[%s8 + $0x3c0] sm:$0xff]
    %v2214 = vld [vmem:[%s8 + $0x3c8] sm:$0xff]
    %v2215 = vld [vmem:[%s8 + $0x3d0] sm:$0xf]
    %v2216 = vld [vmem:[%s8 + $0x3d4] sm:$0xff]
    %v2217 = vld [vmem:[%s8 + $0x3dc] sm:$0xff]
    %v2218 = vld [vmem:[%s8 + $0x3e4] sm:$0xff]
    %v2219 = vld [vmem:[%s8 + $0x3ec] sm:$0xf]
    %v2220 = vld [vmem:[%s8 + $0x3f0] sm:$0xff]
    %v2221 = vld [vmem:[%s8 + $0x3f8] sm:$0xff]
    %v2222 = vld [vmem:[%s8 + $0x400] sm:$0xff]
    %v2223 = vld [vmem:[%s8 + $0x408] sm:$0xf]
    %v2224 = vld [vmem:[%s8 + $0x40c] sm:$0xff]
    %v2225 = vld [vmem:[%s8 + $0x414] sm:$0xff]
    %v2226 = vld [vmem:[%s8 + $0x41c] sm:$0xff]
    %v2227 = vld [vmem:[%s8 + $0x424] sm:$0xf]
    %v2228 = vld [vmem:[%s8 + $0x428] sm:$0xff]
    %v2229 = vld [vmem:[%s8 + $0x430] sm:$0xff]
    %v2230 = vld [vmem:[%s8 + $0x438] sm:$0xff]
    %v2231 = vld [vmem:[%s8 + $0x440] sm:$0xf]
    %v2232 = vld [vmem:[%s8 + $0x444] sm:$0xff]
    %v2233 = vld [vmem:[%s8 + $0x44c] sm:$0xff]
    %v2234 = vld [vmem:[%s8 + $0x454] sm:$0xff]
    %v2235 = vld [vmem:[%s8 + $0x45c] sm:$0xf]
    %v2236 = vld [vmem:[%s8 + $0x460] sm:$0xff]
    %v2237 = vld [vmem:[%s8 + $0x468] sm:$0xff]
    %v2238 = vld [vmem:[%s8 + $0x470] sm:$0xff]
    %v2239 = vld [vmem:[%s8 + $0x478] sm:$0xf]
    %v2240 = vld [vmem:[%s8 + $0x47c] sm:$0xff]
    %v2241 = vld [vmem:[%s8 + $0x484] sm:$0xff]
    %v2242 = vld [vmem:[%s8 + $0x48c] sm:$0xff]
    %v2243 = vld [vmem:[%s8 + $0x494] sm:$0xf]
    %v2244 = vld [vmem:[%s8 + $0x498] sm:$0xff]
    %v2245 = vld [vmem:[%s8 + $0x4a0] sm:$0xff]
    %v2246 = vld [vmem:[%s8 + $0x4a8] sm:$0xff]
    %v2247 = vld [vmem:[%s8 + $0x4b0] sm:$0xf]
    %v2248 = vld [vmem:[%s8 + $0x4b4] sm:$0xff]
    %v2249 = vld [vmem:[%s8 + $0x4bc] sm:$0xff]
    %v2250 = vld [vmem:[%s8 + $0x4c4] sm:$0xff]
    %v2251 = vld [vmem:[%s8 + $0x4cc] sm:$0xf]
    %v2252 = vld [vmem:[%s8 + $0x4d0] sm:$0xff]
    %v2253 = vld [vmem:[%s8 + $0x4d8] sm:$0xff]
    %v2254 = vld [vmem:[%s8 + $0x4e0] sm:$0xff]
    %v2255 = vld [vmem:[%s8 + $0x4e8] sm:$0xf]
    %v2256 = vld [vmem:[%s8 + $0x4ec] sm:$0xff]
    %v2257 = vld [vmem:[%s8 + $0x4f4] sm:$0xff]
    %v2258 = vld [vmem:[%s8 + $0x4fc] sm:$0xff]
    %v2259 = vld [vmem:[%s8 + $0x504] sm:$0xf]
    %v2260 = vld [vmem:[%s8 + $0x508] sm:$0xff]
    %v2261 = vld [vmem:[%s8 + $0x510] sm:$0xff]
    %v2262 = vld [vmem:[%s8 + $0x518] sm:$0xff]
    %v2263 = vld [vmem:[%s8 + $0x520] sm:$0xf]
    %v2264 = vld [vmem:[%s8 + $0x524] sm:$0xff]
    %v2265 = vld [vmem:[%s8 + $0x52c] sm:$0xff]
    %v2266 = vld [vmem:[%s8 + $0x534] sm:$0xff]
    %v2267 = vld [vmem:[%s8 + $0x53c] sm:$0xf]
    %v2268 = vld [vmem:[%s8 + $0x540] sm:$0xff]
    %v2269 = vld [vmem:[%s8 + $0x548] sm:$0xff]
    %v2270 = vld [vmem:[%s8 + $0x550] sm:$0xff]
    %v2271 = vld [vmem:[%s8 + $0x558] sm:$0xf]
    %v2272 = vld [vmem:[%s8 + $0x55c] sm:$0xff]
    %v2273 = vld [vmem:[%s8 + $0x564] sm:$0xff]
    %v2274 = vld [vmem:[%s8 + $0x56c] sm:$0xff]
    %v2275 = vld [vmem:[%s8 + $0x574] sm:$0xf]
    %v2276 = vld [vmem:[%s8 + $0x578] sm:$0xff]
    %v2277 = vld [vmem:[%s8 + $0x580] sm:$0xff]
    %v2278 = vld [vmem:[%s8 + $0x588] sm:$0xff]
    %v2279 = vld [vmem:[%s8 + $0x590] sm:$0xf]
    %v2280 = vld [vmem:[%s8 + $0x594] sm:$0xff]
    %v2281 = vld [vmem:[%s8 + $0x59c] sm:$0xff]
    %v2282 = vld [vmem:[%s8 + $0x5a4] sm:$0xff]
    %v2283 = vld [vmem:[%s8 + $0x5ac] sm:$0xf]
    %v2284 = vld [vmem:[%s8 + $0x5b0] sm:$0xff]
    %v2285 = vld [vmem:[%s8 + $0x5b8] sm:$0xff]
    %v2286 = vld [vmem:[%s8 + $0x5c0] sm:$0xff]
    %v2287 = vld [vmem:[%s8 + $0x5c8] sm:$0xf]
    %v2288 = vld [vmem:[%s8 + $0x5cc] sm:$0xff]
    %v2289 = vld [vmem:[%s8 + $0x5d4] sm:$0xff]
    %v2290 = vld [vmem:[%s8 + $0x5dc] sm:$0xff]
    %v2291 = vld [vmem:[%s8 + $0x5e4] sm:$0xf]
    %v2292 = vld [vmem:[%s8 + $0x5e8] sm:$0xff]
    %v2293 = vld [vmem:[%s8 + $0x5f0] sm:$0xff]
    %v2294 = vld [vmem:[%s8 + $0x5f8] sm:$0xff]
    %v2295 = vld [vmem:[%s8 + $0x600] sm:$0xf]
    %v2296 = vld [vmem:[%s8 + $0x604] sm:$0xff]
    %v2297 = vld [vmem:[%s8 + $0x60c] sm:$0xff]
    %v2298 = vld [vmem:[%s8 + $0x614] sm:$0xff]
    %v2299 = vld [vmem:[%s8 + $0x61c] sm:$0xf]
    %v2300 = vld [vmem:[%s8 + $0x620] sm:$0xff]
    %v2301 = vld [vmem:[%s8 + $0x628] sm:$0xff]
    %v2302 = vld [vmem:[%s8 + $0x630] sm:$0xff]
    %v2303 = vld [vmem:[%s8 + $0x638] sm:$0xf]
    %v2304 = vld [vmem:[%s8 + $0x63c] sm:$0xff]
    %v2305 = vld [vmem:[%s8 + $0x644] sm:$0xff]
    %v2306 = vld [vmem:[%s8 + $0x64c] sm:$0xff]
    %v2307 = vld [vmem:[%s8 + $0x654] sm:$0xf]
    %v2308 = vld [vmem:[%s8 + $0x658] sm:$0xff]
    %v2309 = vld [vmem:[%s8 + $0x660] sm:$0xff]
    %v2310 = vld [vmem:[%s8 + $0x668] sm:$0xff]
    %v2311 = vld [vmem:[%s8 + $0x670] sm:$0xf]
    %v2312 = vld [vmem:[%s8 + $0x674] sm:$0xff]
    %v2313 = vld [vmem:[%s8 + $0x67c] sm:$0xff]
    %v2314 = vld [vmem:[%s8 + $0x684] sm:$0xff]
    %v2315 = vld [vmem:[%s8 + $0x68c] sm:$0xf]
    %v2316 = vld [vmem:[%s8 + $0x690] sm:$0xff]
    %v2317 = vld [vmem:[%s8 + $0x698] sm:$0xff]
    %v2318 = vld [vmem:[%s8 + $0x6a0] sm:$0xff]
    %v2319 = vld [vmem:[%s8 + $0x6a8] sm:$0xf]
    %v2320 = vld [vmem:[%s8 + $0x6ac] sm:$0xff]
    %v2321 = vld [vmem:[%s8 + $0x6b4] sm:$0xff]
    %v2322 = vld [vmem:[%s8 + $0x6bc] sm:$0xff]
    %v2323 = vld [vmem:[%s8 + $0x6c4] sm:$0xf]
    %v2324 = vld [vmem:[%s8 + $0x6c8] sm:$0xff]
    %v2325 = vld [vmem:[%s8 + $0x6d0] sm:$0xff]
    %v2326 = vld [vmem:[%s8 + $0x6d8] sm:$0xff]
    %v2327 = vld [vmem:[%s8 + $0x6e0] sm:$0xf]
    %v2328 = vld [vmem:[%s8 + $0x6e4] sm:$0xff]
    %v2329 = vld [vmem:[%s8 + $0x6ec] sm:$0xff]
    %v2330 = vld [vmem:[%s8 + $0x6f4] sm:$0xff]
    %v2331 = vld [vmem:[%s8 + $0x6fc] sm:$0xf]
    %v2332 = vld [vmem:[%s9] sm:$0x7f]
    %v2334 = vperm.slane %v2332, 0
    %v2335 = vperm.slane %v2332, 1
    %v2336 = vperm.slane %v2332, 2
    %v2337 = vperm.slane %v2332, 3
    %v2338 = vperm.slane %v2332, 4
    %v2339 = vperm.slane %v2332, 5
    %v2340 = vperm.slane %v2332, 6
    %v2604 = vunpack.c.l.b16 %v2076
    %v2605 = vunpack.c.h.b16 %v2076
    %v2606 = vunpack.c.l.b16 %v2077
    %v2607 = vunpack.c.h.b16 %v2077
    %v2608 = vunpack.c.l.b16 %v2078
    %v2609 = vunpack.c.h.b16 %v2078
    %v2610 = vunpack.c.l.b16 %v2079
    %v2611 = vunpack.c.l.b16 %v2080
    %v2612 = vunpack.c.h.b16 %v2080
    %v2613 = vunpack.c.l.b16 %v2081
    %v2614 = vunpack.c.h.b16 %v2081
    %v2615 = vunpack.c.l.b16 %v2082
    %v2616 = vunpack.c.h.b16 %v2082
    %v2617 = vunpack.c.l.b16 %v2083
    %v2618 = vunpack.c.l.b16 %v2084
    %v2619 = vunpack.c.h.b16 %v2084
    %v2620 = vunpack.c.l.b16 %v2085
    %v2621 = vunpack.c.h.b16 %v2085
    %v2622 = vunpack.c.l.b16 %v2086
    %v2623 = vunpack.c.h.b16 %v2086
    %v2624 = vunpack.c.l.b16 %v2087
    %v2625 = vunpack.c.l.b16 %v2088
    %v2626 = vunpack.c.h.b16 %v2088
    %v2627 = vunpack.c.l.b16 %v2089
    %v2628 = vunpack.c.h.b16 %v2089
    %v2629 = vunpack.c.l.b16 %v2090
    %v2630 = vunpack.c.h.b16 %v2090
    %v2631 = vunpack.c.l.b16 %v2091
    %v2632 = vunpack.c.l.b16 %v2092
    %v2633 = vunpack.c.h.b16 %v2092
    %v2634 = vunpack.c.l.b16 %v2093
    %v2635 = vunpack.c.h.b16 %v2093
    %v2636 = vunpack.c.l.b16 %v2094
    %v2637 = vunpack.c.h.b16 %v2094
    %v2638 = vunpack.c.l.b16 %v2095
    %v2639 = vunpack.c.l.b16 %v2096
    %v2640 = vunpack.c.h.b16 %v2096
    %v2641 = vunpack.c.l.b16 %v2097
    %v2642 = vunpack.c.h.b16 %v2097
    %v2643 = vunpack.c.l.b16 %v2098
    %v2644 = vunpack.c.h.b16 %v2098
    %v2645 = vunpack.c.l.b16 %v2099
    %v2646 = vunpack.c.l.b16 %v2100
    %v2647 = vunpack.c.h.b16 %v2100
    %v2648 = vunpack.c.l.b16 %v2101
    %v2649 = vunpack.c.h.b16 %v2101
    %v2650 = vunpack.c.l.b16 %v2102
    %v2651 = vunpack.c.h.b16 %v2102
    %v2652 = vunpack.c.l.b16 %v2103
    %v2653 = vunpack.c.l.b16 %v2104
    %v2654 = vunpack.c.h.b16 %v2104
    %v2655 = vunpack.c.l.b16 %v2105
    %v2656 = vunpack.c.h.b16 %v2105
    %v2657 = vunpack.c.l.b16 %v2106
    %v2658 = vunpack.c.h.b16 %v2106
    %v2659 = vunpack.c.l.b16 %v2107
    %v2660 = vunpack.c.l.b16 %v2108
    %v2661 = vunpack.c.h.b16 %v2108
    %v2662 = vunpack.c.l.b16 %v2109
    %v2663 = vunpack.c.h.b16 %v2109
    %v2664 = vunpack.c.l.b16 %v2110
    %v2665 = vunpack.c.h.b16 %v2110
    %v2666 = vunpack.c.l.b16 %v2111
    %v2667 = vunpack.c.l.b16 %v2112
    %v2668 = vunpack.c.h.b16 %v2112
    %v2669 = vunpack.c.l.b16 %v2113
    %v2670 = vunpack.c.h.b16 %v2113
    %v2671 = vunpack.c.l.b16 %v2114
    %v2672 = vunpack.c.h.b16 %v2114
    %v2673 = vunpack.c.l.b16 %v2115
    %v2674 = vunpack.c.l.b16 %v2116
    %v2675 = vunpack.c.h.b16 %v2116
    %v2676 = vunpack.c.l.b16 %v2117
    %v2677 = vunpack.c.h.b16 %v2117
    %v2678 = vunpack.c.l.b16 %v2118
    %v2679 = vunpack.c.h.b16 %v2118
    %v2680 = vunpack.c.l.b16 %v2119
    %v2681 = vunpack.c.l.b16 %v2120
    %v2682 = vunpack.c.h.b16 %v2120
    %v2683 = vunpack.c.l.b16 %v2121
    %v2684 = vunpack.c.h.b16 %v2121
    %v2685 = vunpack.c.l.b16 %v2122
    %v2686 = vunpack.c.h.b16 %v2122
    %v2687 = vunpack.c.l.b16 %v2123
    %v2688 = vunpack.c.l.b16 %v2124
    %v2689 = vunpack.c.h.b16 %v2124
    %v2690 = vunpack.c.l.b16 %v2125
    %v2691 = vunpack.c.h.b16 %v2125
    %v2692 = vunpack.c.l.b16 %v2126
    %v2693 = vunpack.c.h.b16 %v2126
    %v2694 = vunpack.c.l.b16 %v2127
    %v2695 = vunpack.c.l.b16 %v2128
    %v2696 = vunpack.c.h.b16 %v2128
    %v2697 = vunpack.c.l.b16 %v2129
    %v2698 = vunpack.c.h.b16 %v2129
    %v2699 = vunpack.c.l.b16 %v2130
    %v2700 = vunpack.c.h.b16 %v2130
    %v2701 = vunpack.c.l.b16 %v2131
    %v2702 = vunpack.c.l.b16 %v2132
    %v2703 = vunpack.c.h.b16 %v2132
    %v2704 = vunpack.c.l.b16 %v2133
    %v2705 = vunpack.c.h.b16 %v2133
    %v2706 = vunpack.c.l.b16 %v2134
    %v2707 = vunpack.c.h.b16 %v2134
    %v2708 = vunpack.c.l.b16 %v2135
    %v2709 = vunpack.c.l.b16 %v2136
    %v2710 = vunpack.c.h.b16 %v2136
    %v2711 = vunpack.c.l.b16 %v2137
    %v2712 = vunpack.c.h.b16 %v2137
    %v2713 = vunpack.c.l.b16 %v2138
    %v2714 = vunpack.c.h.b16 %v2138
    %v2715 = vunpack.c.l.b16 %v2139
    %v2716 = vunpack.c.l.b16 %v2140
    %v2717 = vunpack.c.h.b16 %v2140
    %v2718 = vunpack.c.l.b16 %v2141
    %v2719 = vunpack.c.h.b16 %v2141
    %v2720 = vunpack.c.l.b16 %v2142
    %v2721 = vunpack.c.h.b16 %v2142
    %v2722 = vunpack.c.l.b16 %v2143
    %v2723 = vunpack.c.l.b16 %v2144
    %v2724 = vunpack.c.h.b16 %v2144
    %v2725 = vunpack.c.l.b16 %v2145
    %v2726 = vunpack.c.h.b16 %v2145
    %v2727 = vunpack.c.l.b16 %v2146
    %v2728 = vunpack.c.h.b16 %v2146
    %v2729 = vunpack.c.l.b16 %v2147
    %v2730 = vunpack.c.l.b16 %v2148
    %v2731 = vunpack.c.h.b16 %v2148
    %v2732 = vunpack.c.l.b16 %v2149
    %v2733 = vunpack.c.h.b16 %v2149
    %v2734 = vunpack.c.l.b16 %v2150
    %v2735 = vunpack.c.h.b16 %v2150
    %v2736 = vunpack.c.l.b16 %v2151
    %v2737 = vunpack.c.l.b16 %v2152
    %v2738 = vunpack.c.h.b16 %v2152
    %v2739 = vunpack.c.l.b16 %v2153
    %v2740 = vunpack.c.h.b16 %v2153
    %v2741 = vunpack.c.l.b16 %v2154
    %v2742 = vunpack.c.h.b16 %v2154
    %v2743 = vunpack.c.l.b16 %v2155
    %v2744 = vunpack.c.l.b16 %v2156
    %v2745 = vunpack.c.h.b16 %v2156
    %v2746 = vunpack.c.l.b16 %v2157
    %v2747 = vunpack.c.h.b16 %v2157
    %v2748 = vunpack.c.l.b16 %v2158
    %v2749 = vunpack.c.h.b16 %v2158
    %v2750 = vunpack.c.l.b16 %v2159
    %v2751 = vunpack.c.l.b16 %v2160
    %v2752 = vunpack.c.h.b16 %v2160
    %v2753 = vunpack.c.l.b16 %v2161
    %v2754 = vunpack.c.h.b16 %v2161
    %v2755 = vunpack.c.l.b16 %v2162
    %v2756 = vunpack.c.h.b16 %v2162
    %v2757 = vunpack.c.l.b16 %v2163
    %v2758 = vunpack.c.l.b16 %v2164
    %v2759 = vunpack.c.h.b16 %v2164
    %v2760 = vunpack.c.l.b16 %v2165
    %v2761 = vunpack.c.h.b16 %v2165
    %v2762 = vunpack.c.l.b16 %v2166
    %v2763 = vunpack.c.h.b16 %v2166
    %v2764 = vunpack.c.l.b16 %v2167
    %v2765 = vunpack.c.l.b16 %v2168
    %v2766 = vunpack.c.h.b16 %v2168
    %v2767 = vunpack.c.l.b16 %v2169
    %v2768 = vunpack.c.h.b16 %v2169
    %v2769 = vunpack.c.l.b16 %v2170
    %v2770 = vunpack.c.h.b16 %v2170
    %v2771 = vunpack.c.l.b16 %v2171
    %v2772 = vunpack.c.l.b16 %v2172
    %v2773 = vunpack.c.h.b16 %v2172
    %v2774 = vunpack.c.l.b16 %v2173
    %v2775 = vunpack.c.h.b16 %v2173
    %v2776 = vunpack.c.l.b16 %v2174
    %v2777 = vunpack.c.h.b16 %v2174
    %v2778 = vunpack.c.l.b16 %v2175
    %v2779 = vunpack.c.l.b16 %v2176
    %v2780 = vunpack.c.h.b16 %v2176
    %v2781 = vunpack.c.l.b16 %v2177
    %v2782 = vunpack.c.h.b16 %v2177
    %v2783 = vunpack.c.l.b16 %v2178
    %v2784 = vunpack.c.h.b16 %v2178
    %v2785 = vunpack.c.l.b16 %v2179
    %v2786 = vunpack.c.l.b16 %v2180
    %v2787 = vunpack.c.h.b16 %v2180
    %v2788 = vunpack.c.l.b16 %v2181
    %v2789 = vunpack.c.h.b16 %v2181
    %v2790 = vunpack.c.l.b16 %v2182
    %v2791 = vunpack.c.h.b16 %v2182
    %v2792 = vunpack.c.l.b16 %v2183
    %v2793 = vunpack.c.l.b16 %v2184
    %v2794 = vunpack.c.h.b16 %v2184
    %v2795 = vunpack.c.l.b16 %v2185
    %v2796 = vunpack.c.h.b16 %v2185
    %v2797 = vunpack.c.l.b16 %v2186
    %v2798 = vunpack.c.h.b16 %v2186
    %v2799 = vunpack.c.l.b16 %v2187
    %v2800 = vunpack.c.l.b16 %v2188
    %v2801 = vunpack.c.h.b16 %v2188
    %v2802 = vunpack.c.l.b16 %v2189
    %v2803 = vunpack.c.h.b16 %v2189
    %v2804 = vunpack.c.l.b16 %v2190
    %v2805 = vunpack.c.h.b16 %v2190
    %v2806 = vunpack.c.l.b16 %v2191
    %v2807 = vunpack.c.l.b16 %v2192
    %v2808 = vunpack.c.h.b16 %v2192
    %v2809 = vunpack.c.l.b16 %v2193
    %v2810 = vunpack.c.h.b16 %v2193
    %v2811 = vunpack.c.l.b16 %v2194
    %v2812 = vunpack.c.h.b16 %v2194
    %v2813 = vunpack.c.l.b16 %v2195
    %v2814 = vunpack.c.l.b16 %v2196
    %v2815 = vunpack.c.h.b16 %v2196
    %v2816 = vunpack.c.l.b16 %v2197
    %v2817 = vunpack.c.h.b16 %v2197
    %v2818 = vunpack.c.l.b16 %v2198
    %v2819 = vunpack.c.h.b16 %v2198
    %v2820 = vunpack.c.l.b16 %v2199
    %v2821 = vunpack.c.l.b16 %v2200
    %v2822 = vunpack.c.h.b16 %v2200
    %v2823 = vunpack.c.l.b16 %v2201
    %v2824 = vunpack.c.h.b16 %v2201
    %v2825 = vunpack.c.l.b16 %v2202
    %v2826 = vunpack.c.h.b16 %v2202
    %v2827 = vunpack.c.l.b16 %v2203
    %v2828 = vunpack.c.l.b16 %v2204
    %v2829 = vunpack.c.h.b16 %v2204
    %v2830 = vunpack.c.l.b16 %v2205
    %v2831 = vunpack.c.h.b16 %v2205
    %v2832 = vunpack.c.l.b16 %v2206
    %v2833 = vunpack.c.h.b16 %v2206
    %v2834 = vunpack.c.l.b16 %v2207
    %v2835 = vunpack.c.l.b16 %v2208
    %v2836 = vunpack.c.h.b16 %v2208
    %v2837 = vunpack.c.l.b16 %v2209
    %v2838 = vunpack.c.h.b16 %v2209
    %v2839 = vunpack.c.l.b16 %v2210
    %v2840 = vunpack.c.h.b16 %v2210
    %v2841 = vunpack.c.l.b16 %v2211
    %v2842 = vunpack.c.l.b16 %v2212
    %v2843 = vunpack.c.h.b16 %v2212
    %v2844 = vunpack.c.l.b16 %v2213
    %v2845 = vunpack.c.h.b16 %v2213
    %v2846 = vunpack.c.l.b16 %v2214
    %v2847 = vunpack.c.h.b16 %v2214
    %v2848 = vunpack.c.l.b16 %v2215
    %v2849 = vunpack.c.l.b16 %v2216
    %v2850 = vunpack.c.h.b16 %v2216
    %v2851 = vunpack.c.l.b16 %v2217
    %v2852 = vunpack.c.h.b16 %v2217
    %v2853 = vunpack.c.l.b16 %v2218
    %v2854 = vunpack.c.h.b16 %v2218
    %v2855 = vunpack.c.l.b16 %v2219
    %v2856 = vunpack.c.l.b16 %v2220
    %v2857 = vunpack.c.h.b16 %v2220
    %v2858 = vunpack.c.l.b16 %v2221
    %v2859 = vunpack.c.h.b16 %v2221
    %v2860 = vunpack.c.l.b16 %v2222
    %v2861 = vunpack.c.h.b16 %v2222
    %v2862 = vunpack.c.l.b16 %v2223
    %v2863 = vunpack.c.l.b16 %v2224
    %v2864 = vunpack.c.h.b16 %v2224
    %v2865 = vunpack.c.l.b16 %v2225
    %v2866 = vunpack.c.h.b16 %v2225
    %v2867 = vunpack.c.l.b16 %v2226
    %v2868 = vunpack.c.h.b16 %v2226
    %v2869 = vunpack.c.l.b16 %v2227
    %v2870 = vunpack.c.l.b16 %v2228
    %v2871 = vunpack.c.h.b16 %v2228
    %v2872 = vunpack.c.l.b16 %v2229
    %v2873 = vunpack.c.h.b16 %v2229
    %v2874 = vunpack.c.l.b16 %v2230
    %v2875 = vunpack.c.h.b16 %v2230
    %v2876 = vunpack.c.l.b16 %v2231
    %v2877 = vunpack.c.l.b16 %v2232
    %v2878 = vunpack.c.h.b16 %v2232
    %v2879 = vunpack.c.l.b16 %v2233
    %v2880 = vunpack.c.h.b16 %v2233
    %v2881 = vunpack.c.l.b16 %v2234
    %v2882 = vunpack.c.h.b16 %v2234
    %v2883 = vunpack.c.l.b16 %v2235
    %v2884 = vunpack.c.l.b16 %v2236
    %v2885 = vunpack.c.h.b16 %v2236
    %v2886 = vunpack.c.l.b16 %v2237
    %v2887 = vunpack.c.h.b16 %v2237
    %v2888 = vunpack.c.l.b16 %v2238
    %v2889 = vunpack.c.h.b16 %v2238
    %v2890 = vunpack.c.l.b16 %v2239
    %v2891 = vunpack.c.l.b16 %v2240
    %v2892 = vunpack.c.h.b16 %v2240
    %v2893 = vunpack.c.l.b16 %v2241
    %v2894 = vunpack.c.h.b16 %v2241
    %v2895 = vunpack.c.l.b16 %v2242
    %v2896 = vunpack.c.h.b16 %v2242
    %v2897 = vunpack.c.l.b16 %v2243
    %v2898 = vunpack.c.l.b16 %v2244
    %v2899 = vunpack.c.h.b16 %v2244
    %v2900 = vunpack.c.l.b16 %v2245
    %v2901 = vunpack.c.h.b16 %v2245
    %v2902 = vunpack.c.l.b16 %v2246
    %v2903 = vunpack.c.h.b16 %v2246
    %v2904 = vunpack.c.l.b16 %v2247
    %v2905 = vunpack.c.l.b16 %v2248
    %v2906 = vunpack.c.h.b16 %v2248
    %v2907 = vunpack.c.l.b16 %v2249
    %v2908 = vunpack.c.h.b16 %v2249
    %v2909 = vunpack.c.l.b16 %v2250
    %v2910 = vunpack.c.h.b16 %v2250
    %v2911 = vunpack.c.l.b16 %v2251
    %v2912 = vunpack.c.l.b16 %v2252
    %v2913 = vunpack.c.h.b16 %v2252
    %v2914 = vunpack.c.l.b16 %v2253
    %v2915 = vunpack.c.h.b16 %v2253
    %v2916 = vunpack.c.l.b16 %v2254
    %v2917 = vunpack.c.h.b16 %v2254
    %v2918 = vunpack.c.l.b16 %v2255
    %v2919 = vunpack.c.l.b16 %v2256
    %v2920 = vunpack.c.h.b16 %v2256
    %v2921 = vunpack.c.l.b16 %v2257
    %v2922 = vunpack.c.h.b16 %v2257
    %v2923 = vunpack.c.l.b16 %v2258
    %v2924 = vunpack.c.h.b16 %v2258
    %v2925 = vunpack.c.l.b16 %v2259
    %v2926 = vunpack.c.l.b16 %v2260
    %v2927 = vunpack.c.h.b16 %v2260
    %v2928 = vunpack.c.l.b16 %v2261
    %v2929 = vunpack.c.h.b16 %v2261
    %v2930 = vunpack.c.l.b16 %v2262
    %v2931 = vunpack.c.h.b16 %v2262
    %v2932 = vunpack.c.l.b16 %v2263
    %v2933 = vunpack.c.l.b16 %v2264
    %v2934 = vunpack.c.h.b16 %v2264
    %v2935 = vunpack.c.l.b16 %v2265
    %v2936 = vunpack.c.h.b16 %v2265
    %v2937 = vunpack.c.l.b16 %v2266
    %v2938 = vunpack.c.h.b16 %v2266
    %v2939 = vunpack.c.l.b16 %v2267
    %v2940 = vunpack.c.l.b16 %v2268
    %v2941 = vunpack.c.h.b16 %v2268
    %v2942 = vunpack.c.l.b16 %v2269
    %v2943 = vunpack.c.h.b16 %v2269
    %v2944 = vunpack.c.l.b16 %v2270
    %v2945 = vunpack.c.h.b16 %v2270
    %v2946 = vunpack.c.l.b16 %v2271
    %v2947 = vunpack.c.l.b16 %v2272
    %v2948 = vunpack.c.h.b16 %v2272
    %v2949 = vunpack.c.l.b16 %v2273
    %v2950 = vunpack.c.h.b16 %v2273
    %v2951 = vunpack.c.l.b16 %v2274
    %v2952 = vunpack.c.h.b16 %v2274
    %v2953 = vunpack.c.l.b16 %v2275
    %v2954 = vunpack.c.l.b16 %v2276
    %v2955 = vunpack.c.h.b16 %v2276
    %v2956 = vunpack.c.l.b16 %v2277
    %v2957 = vunpack.c.h.b16 %v2277
    %v2958 = vunpack.c.l.b16 %v2278
    %v2959 = vunpack.c.h.b16 %v2278
    %v2960 = vunpack.c.l.b16 %v2279
    %v2961 = vunpack.c.l.b16 %v2280
    %v2962 = vunpack.c.h.b16 %v2280
    %v2963 = vunpack.c.l.b16 %v2281
    %v2964 = vunpack.c.h.b16 %v2281
    %v2965 = vunpack.c.l.b16 %v2282
    %v2966 = vunpack.c.h.b16 %v2282
    %v2967 = vunpack.c.l.b16 %v2283
    %v2968 = vunpack.c.l.b16 %v2284
    %v2969 = vunpack.c.h.b16 %v2284
    %v2970 = vunpack.c.l.b16 %v2285
    %v2971 = vunpack.c.h.b16 %v2285
    %v2972 = vunpack.c.l.b16 %v2286
    %v2973 = vunpack.c.h.b16 %v2286
    %v2974 = vunpack.c.l.b16 %v2287
    %v2975 = vunpack.c.l.b16 %v2288
    %v2976 = vunpack.c.h.b16 %v2288
    %v2977 = vunpack.c.l.b16 %v2289
    %v2978 = vunpack.c.h.b16 %v2289
    %v2979 = vunpack.c.l.b16 %v2290
    %v2980 = vunpack.c.h.b16 %v2290
    %v2981 = vunpack.c.l.b16 %v2291
    %v2982 = vunpack.c.l.b16 %v2292
    %v2983 = vunpack.c.h.b16 %v2292
    %v2984 = vunpack.c.l.b16 %v2293
    %v2985 = vunpack.c.h.b16 %v2293
    %v2986 = vunpack.c.l.b16 %v2294
    %v2987 = vunpack.c.h.b16 %v2294
    %v2988 = vunpack.c.l.b16 %v2295
    %v2989 = vunpack.c.l.b16 %v2296
    %v2990 = vunpack.c.h.b16 %v2296
    %v2991 = vunpack.c.l.b16 %v2297
    %v2992 = vunpack.c.h.b16 %v2297
    %v2993 = vunpack.c.l.b16 %v2298
    %v2994 = vunpack.c.h.b16 %v2298
    %v2995 = vunpack.c.l.b16 %v2299
    %v2996 = vunpack.c.l.b16 %v2300
    %v2997 = vunpack.c.h.b16 %v2300
    %v2998 = vunpack.c.l.b16 %v2301
    %v2999 = vunpack.c.h.b16 %v2301
    %v3000 = vunpack.c.l.b16 %v2302
    %v3001 = vunpack.c.h.b16 %v2302
    %v3002 = vunpack.c.l.b16 %v2303
    %v3003 = vunpack.c.l.b16 %v2304
    %v3004 = vunpack.c.h.b16 %v2304
    %v3005 = vunpack.c.l.b16 %v2305
    %v3006 = vunpack.c.h.b16 %v2305
    %v3007 = vunpack.c.l.b16 %v2306
    %v3008 = vunpack.c.h.b16 %v2306
    %v3009 = vunpack.c.l.b16 %v2307
    %v3010 = vunpack.c.l.b16 %v2308
    %v3011 = vunpack.c.h.b16 %v2308
    %v3012 = vunpack.c.l.b16 %v2309
    %v3013 = vunpack.c.h.b16 %v2309
    %v3014 = vunpack.c.l.b16 %v2310
    %v3015 = vunpack.c.h.b16 %v2310
    %v3016 = vunpack.c.l.b16 %v2311
    %v3017 = vunpack.c.l.b16 %v2312
    %v3018 = vunpack.c.h.b16 %v2312
    %v3019 = vunpack.c.l.b16 %v2313
    %v3020 = vunpack.c.h.b16 %v2313
    %v3021 = vunpack.c.l.b16 %v2314
    %v3022 = vunpack.c.h.b16 %v2314
    %v3023 = vunpack.c.l.b16 %v2315
    %v3024 = vunpack.c.l.b16 %v2316
    %v3025 = vunpack.c.h.b16 %v2316
    %v3026 = vunpack.c.l.b16 %v2317
    %v3027 = vunpack.c.h.b16 %v2317
    %v3028 = vunpack.c.l.b16 %v2318
    %v3029 = vunpack.c.h.b16 %v2318
    %v3030 = vunpack.c.l.b16 %v2319
    %v3031 = vunpack.c.l.b16 %v2320
    %v3032 = vunpack.c.h.b16 %v2320
    %v3033 = vunpack.c.l.b16 %v2321
    %v3034 = vunpack.c.h.b16 %v2321
    %v3035 = vunpack.c.l.b16 %v2322
    %v3036 = vunpack.c.h.b16 %v2322
    %v3037 = vunpack.c.l.b16 %v2323
    %v3038 = vunpack.c.l.b16 %v2324
    %v3039 = vunpack.c.h.b16 %v2324
    %v3040 = vunpack.c.l.b16 %v2325
    %v3041 = vunpack.c.h.b16 %v2325
    %v3042 = vunpack.c.l.b16 %v2326
    %v3043 = vunpack.c.h.b16 %v2326
    %v3044 = vunpack.c.l.b16 %v2327
    %v3045 = vunpack.c.l.b16 %v2328
    %v3046 = vunpack.c.h.b16 %v2328
    %v3047 = vunpack.c.l.b16 %v2329
    %v3048 = vunpack.c.h.b16 %v2329
    %v3049 = vunpack.c.l.b16 %v2330
    %v3050 = vunpack.c.h.b16 %v2330
    %v3051 = vunpack.c.l.b16 %v2331
    %v3052 = vpack.c.b16 %v2611, %v2604
    %v3053 = vpack.c.b16 %v2612, %v2605
    %v3054 = vpack.c.b16 %v2613, %v2606
    %v3055 = vpack.c.b16 %v2614, %v2607
    %v3056 = vpack.c.b16 %v2615, %v2608
    %v3057 = vpack.c.b16 %v2616, %v2609
    %v3058 = vpack.c.b16 %v2617, %v2610
    %v3059 = vpack.c.b16 %v2625, %v2618
    %v3060 = vpack.c.b16 %v2626, %v2619
    %v3061 = vpack.c.b16 %v2627, %v2620
    %v3062 = vpack.c.b16 %v2628, %v2621
    %v3063 = vpack.c.b16 %v2629, %v2622
    %v3064 = vpack.c.b16 %v2630, %v2623
    %v3065 = vpack.c.b16 %v2631, %v2624
    %v3066 = vpack.c.b16 %v2639, %v2632
    %v3067 = vpack.c.b16 %v2640, %v2633
    %v3068 = vpack.c.b16 %v2641, %v2634
    %v3069 = vpack.c.b16 %v2642, %v2635
    %v3070 = vpack.c.b16 %v2643, %v2636
    %v3071 = vpack.c.b16 %v2644, %v2637
    %v3072 = vpack.c.b16 %v2645, %v2638
    %v3073 = vpack.c.b16 %v2653, %v2646
    %v3074 = vpack.c.b16 %v2654, %v2647
    %v3075 = vpack.c.b16 %v2655, %v2648
    %v3076 = vpack.c.b16 %v2656, %v2649
    %v3077 = vpack.c.b16 %v2657, %v2650
    %v3078 = vpack.c.b16 %v2658, %v2651
    %v3079 = vpack.c.b16 %v2659, %v2652
    %v3080 = vpack.c.b16 %v2667, %v2660
    %v3081 = vpack.c.b16 %v2668, %v2661
    %v3082 = vpack.c.b16 %v2669, %v2662
    %v3083 = vpack.c.b16 %v2670, %v2663
    %v3084 = vpack.c.b16 %v2671, %v2664
    %v3085 = vpack.c.b16 %v2672, %v2665
    %v3086 = vpack.c.b16 %v2673, %v2666
    %v3087 = vpack.c.b16 %v2681, %v2674
    %v3088 = vpack.c.b16 %v2682, %v2675
    %v3089 = vpack.c.b16 %v2683, %v2676
    %v3090 = vpack.c.b16 %v2684, %v2677
    %v3091 = vpack.c.b16 %v2685, %v2678
    %v3092 = vpack.c.b16 %v2686, %v2679
    %v3093 = vpack.c.b16 %v2687, %v2680
    %v3094 = vpack.c.b16 %v2695, %v2688
    %v3095 = vpack.c.b16 %v2696, %v2689
    %v3096 = vpack.c.b16 %v2697, %v2690
    %v3097 = vpack.c.b16 %v2698, %v2691
    %v3098 = vpack.c.b16 %v2699, %v2692
    %v3099 = vpack.c.b16 %v2700, %v2693
    %v3100 = vpack.c.b16 %v2701, %v2694
    %v3101 = vpack.c.b16 %v2709, %v2702
    %v3102 = vpack.c.b16 %v2710, %v2703
    %v3103 = vpack.c.b16 %v2711, %v2704
    %v3104 = vpack.c.b16 %v2712, %v2705
    %v3105 = vpack.c.b16 %v2713, %v2706
    %v3106 = vpack.c.b16 %v2714, %v2707
    %v3107 = vpack.c.b16 %v2715, %v2708
    %v3108 = vpack.c.b16 %v2723, %v2716
    %v3109 = vpack.c.b16 %v2724, %v2717
    %v3110 = vpack.c.b16 %v2725, %v2718
    %v3111 = vpack.c.b16 %v2726, %v2719
    %v3112 = vpack.c.b16 %v2727, %v2720
    %v3113 = vpack.c.b16 %v2728, %v2721
    %v3114 = vpack.c.b16 %v2729, %v2722
    %v3115 = vpack.c.b16 %v2737, %v2730
    %v3116 = vpack.c.b16 %v2738, %v2731
    %v3117 = vpack.c.b16 %v2739, %v2732
    %v3118 = vpack.c.b16 %v2740, %v2733
    %v3119 = vpack.c.b16 %v2741, %v2734
    %v3120 = vpack.c.b16 %v2742, %v2735
    %v3121 = vpack.c.b16 %v2743, %v2736
    %v3122 = vpack.c.b16 %v2751, %v2744
    %v3123 = vpack.c.b16 %v2752, %v2745
    %v3124 = vpack.c.b16 %v2753, %v2746
    %v3125 = vpack.c.b16 %v2754, %v2747
    %v3126 = vpack.c.b16 %v2755, %v2748
    %v3127 = vpack.c.b16 %v2756, %v2749
    %v3128 = vpack.c.b16 %v2757, %v2750
    %v3129 = vpack.c.b16 %v2765, %v2758
    %v3130 = vpack.c.b16 %v2766, %v2759
    %v3131 = vpack.c.b16 %v2767, %v2760
    %v3132 = vpack.c.b16 %v2768, %v2761
    %v3133 = vpack.c.b16 %v2769, %v2762
    %v3134 = vpack.c.b16 %v2770, %v2763
    %v3135 = vpack.c.b16 %v2771, %v2764
    %v3136 = vpack.c.b16 %v2779, %v2772
    %v3137 = vpack.c.b16 %v2780, %v2773
    %v3138 = vpack.c.b16 %v2781, %v2774
    %v3139 = vpack.c.b16 %v2782, %v2775
    %v3140 = vpack.c.b16 %v2783, %v2776
    %v3141 = vpack.c.b16 %v2784, %v2777
    %v3142 = vpack.c.b16 %v2785, %v2778
    %v3143 = vpack.c.b16 %v2793, %v2786
    %v3144 = vpack.c.b16 %v2794, %v2787
    %v3145 = vpack.c.b16 %v2795, %v2788
    %v3146 = vpack.c.b16 %v2796, %v2789
    %v3147 = vpack.c.b16 %v2797, %v2790
    %v3148 = vpack.c.b16 %v2798, %v2791
    %v3149 = vpack.c.b16 %v2799, %v2792
    %v3150 = vpack.c.b16 %v2807, %v2800
    %v3151 = vpack.c.b16 %v2808, %v2801
    %v3152 = vpack.c.b16 %v2809, %v2802
    %v3153 = vpack.c.b16 %v2810, %v2803
    %v3154 = vpack.c.b16 %v2811, %v2804
    %v3155 = vpack.c.b16 %v2812, %v2805
    %v3156 = vpack.c.b16 %v2813, %v2806
    %v3157 = vpack.c.b16 %v2821, %v2814
    %v3158 = vpack.c.b16 %v2822, %v2815
    %v3159 = vpack.c.b16 %v2823, %v2816
    %v3160 = vpack.c.b16 %v2824, %v2817
    %v3161 = vpack.c.b16 %v2825, %v2818
    %v3162 = vpack.c.b16 %v2826, %v2819
    %v3163 = vpack.c.b16 %v2827, %v2820
    %v3164 = vpack.c.b16 %v2835, %v2828
    %v3165 = vpack.c.b16 %v2836, %v2829
    %v3166 = vpack.c.b16 %v2837, %v2830
    %v3167 = vpack.c.b16 %v2838, %v2831
    %v3168 = vpack.c.b16 %v2839, %v2832
    %v3169 = vpack.c.b16 %v2840, %v2833
    %v3170 = vpack.c.b16 %v2841, %v2834
    %v3171 = vpack.c.b16 %v2849, %v2842
    %v3172 = vpack.c.b16 %v2850, %v2843
    %v3173 = vpack.c.b16 %v2851, %v2844
    %v3174 = vpack.c.b16 %v2852, %v2845
    %v3175 = vpack.c.b16 %v2853, %v2846
    %v3176 = vpack.c.b16 %v2854, %v2847
    %v3177 = vpack.c.b16 %v2855, %v2848
    %v3178 = vpack.c.b16 %v2863, %v2856
    %v3179 = vpack.c.b16 %v2864, %v2857
    %v3180 = vpack.c.b16 %v2865, %v2858
    %v3181 = vpack.c.b16 %v2866, %v2859
    %v3182 = vpack.c.b16 %v2867, %v2860
    %v3183 = vpack.c.b16 %v2868, %v2861
    %v3184 = vpack.c.b16 %v2869, %v2862
    %v3185 = vpack.c.b16 %v2877, %v2870
    %v3186 = vpack.c.b16 %v2878, %v2871
    %v3187 = vpack.c.b16 %v2879, %v2872
    %v3188 = vpack.c.b16 %v2880, %v2873
    %v3189 = vpack.c.b16 %v2881, %v2874
    %v3190 = vpack.c.b16 %v2882, %v2875
    %v3191 = vpack.c.b16 %v2883, %v2876
    %v3192 = vpack.c.b16 %v2891, %v2884
    %v3193 = vpack.c.b16 %v2892, %v2885
    %v3194 = vpack.c.b16 %v2893, %v2886
    %v3195 = vpack.c.b16 %v2894, %v2887
    %v3196 = vpack.c.b16 %v2895, %v2888
    %v3197 = vpack.c.b16 %v2896, %v2889
    %v3198 = vpack.c.b16 %v2897, %v2890
    %v3199 = vpack.c.b16 %v2905, %v2898
    %v3200 = vpack.c.b16 %v2906, %v2899
    %v3201 = vpack.c.b16 %v2907, %v2900
    %v3202 = vpack.c.b16 %v2908, %v2901
    %v3203 = vpack.c.b16 %v2909, %v2902
    %v3204 = vpack.c.b16 %v2910, %v2903
    %v3205 = vpack.c.b16 %v2911, %v2904
    %v3206 = vpack.c.b16 %v2919, %v2912
    %v3207 = vpack.c.b16 %v2920, %v2913
    %v3208 = vpack.c.b16 %v2921, %v2914
    %v3209 = vpack.c.b16 %v2922, %v2915
    %v3210 = vpack.c.b16 %v2923, %v2916
    %v3211 = vpack.c.b16 %v2924, %v2917
    %v3212 = vpack.c.b16 %v2925, %v2918
    %v3213 = vpack.c.b16 %v2933, %v2926
    %v3214 = vpack.c.b16 %v2934, %v2927
    %v3215 = vpack.c.b16 %v2935, %v2928
    %v3216 = vpack.c.b16 %v2936, %v2929
    %v3217 = vpack.c.b16 %v2937, %v2930
    %v3218 = vpack.c.b16 %v2938, %v2931
    %v3219 = vpack.c.b16 %v2939, %v2932
    %v3220 = vpack.c.b16 %v2947, %v2940
    %v3221 = vpack.c.b16 %v2948, %v2941
    %v3222 = vpack.c.b16 %v2949, %v2942
    %v3223 = vpack.c.b16 %v2950, %v2943
    %v3224 = vpack.c.b16 %v2951, %v2944
    %v3225 = vpack.c.b16 %v2952, %v2945
    %v3226 = vpack.c.b16 %v2953, %v2946
    %v3227 = vpack.c.b16 %v2961, %v2954
    %v3228 = vpack.c.b16 %v2962, %v2955
    %v3229 = vpack.c.b16 %v2963, %v2956
    %v3230 = vpack.c.b16 %v2964, %v2957
    %v3231 = vpack.c.b16 %v2965, %v2958
    %v3232 = vpack.c.b16 %v2966, %v2959
    %v3233 = vpack.c.b16 %v2967, %v2960
    %v3234 = vpack.c.b16 %v2975, %v2968
    %v3235 = vpack.c.b16 %v2976, %v2969
    %v3236 = vpack.c.b16 %v2977, %v2970
    %v3237 = vpack.c.b16 %v2978, %v2971
    %v3238 = vpack.c.b16 %v2979, %v2972
    %v3239 = vpack.c.b16 %v2980, %v2973
    %v3240 = vpack.c.b16 %v2981, %v2974
    %v3241 = vpack.c.b16 %v2989, %v2982
    %v3242 = vpack.c.b16 %v2990, %v2983
    %v3243 = vpack.c.b16 %v2991, %v2984
    %v3244 = vpack.c.b16 %v2992, %v2985
    %v3245 = vpack.c.b16 %v2993, %v2986
    %v3246 = vpack.c.b16 %v2994, %v2987
    %v3247 = vpack.c.b16 %v2995, %v2988
    %v3248 = vpack.c.b16 %v3003, %v2996
    %v3249 = vpack.c.b16 %v3004, %v2997
    %v3250 = vpack.c.b16 %v3005, %v2998
    %v3251 = vpack.c.b16 %v3006, %v2999
    %v3252 = vpack.c.b16 %v3007, %v3000
    %v3253 = vpack.c.b16 %v3008, %v3001
    %v3254 = vpack.c.b16 %v3009, %v3002
    %v3255 = vpack.c.b16 %v3017, %v3010
    %v3256 = vpack.c.b16 %v3018, %v3011
    %v3257 = vpack.c.b16 %v3019, %v3012
    %v3258 = vpack.c.b16 %v3020, %v3013
    %v3259 = vpack.c.b16 %v3021, %v3014
    %v3260 = vpack.c.b16 %v3022, %v3015
    %v3261 = vpack.c.b16 %v3023, %v3016
    %v3262 = vpack.c.b16 %v3031, %v3024
    %v3263 = vpack.c.b16 %v3032, %v3025
    %v3264 = vpack.c.b16 %v3033, %v3026
    %v3265 = vpack.c.b16 %v3034, %v3027
    %v3266 = vpack.c.b16 %v3035, %v3028
    %v3267 = vpack.c.b16 %v3036, %v3029
    %v3268 = vpack.c.b16 %v3037, %v3030
    %v3269 = vpack.c.b16 %v3045, %v3038
    %v3270 = vpack.c.b16 %v3046, %v3039
    %v3271 = vpack.c.b16 %v3047, %v3040
    %v3272 = vpack.c.b16 %v3048, %v3041
    %v3273 = vpack.c.b16 %v3049, %v3042
    %v3274 = vpack.c.b16 %v3050, %v3043
    %v3275 = vpack.c.b16 %v3051, %v3044
    %3500 = vmatpush.bf16.msra.mxu0 %v3101
    %3501 = vmatpush.bf16.msra.mxu0 %v3094
    %3502 = vmatpush.bf16.msra.mxu0 %v3087
    %3503 = vmatpush.bf16.msra.mxu0 %v3080
    %3504 = vmatpush.bf16.msra.mxu0 %v3073
    %3505 = vmatpush.bf16.msra.mxu0 %v3066
    %3506 = vmatpush.bf16.msra.mxu0 %v3059
    %3507 = vmatpush.bf16.msra.mxu0 %v3052
    %3508 = vmatmul.bf16.gmra.mxu0 %v2072
    %v3509 = vpop.f32.mrf.mxu0
    %v3510 = vadd.f32 %v2334, %v3509
    %v3511 = vpop.f32.mrf.mxu0
    %3512 = vdwg.mxu0
    %3513 = vmatpush.bf16.msra.mxu0 %v3157
    %3514 = vmatpush.bf16.msra.mxu0 %v3150
    %3515 = vmatpush.bf16.msra.mxu0 %v3143
    %3516 = vmatpush.bf16.msra.mxu0 %v3136
    %3517 = vmatpush.bf16.msra.mxu0 %v3129
    %3518 = vmatpush.bf16.msra.mxu0 %v3122
    %3519 = vmatpush.bf16.msra.mxu0 %v3115
    %3520 = vmatpush.bf16.msra.mxu0 %v3108
    %3521 = vmatmul.bf16.gmra.mxu0 %v2073
    %v3522 = vpop.f32.mrf.mxu0
    %v3523 = vadd.f32 %v3510, %v3522
    %v3524 = vpop.f32.mrf.mxu0
    %3525 = vdwg.mxu0
    %3526 = vmatpush.bf16.msra.mxu0 %v3213
    %3527 = vmatpush.bf16.msra.mxu0 %v3206
    %3528 = vmatpush.bf16.msra.mxu0 %v3199
    %3529 = vmatpush.bf16.msra.mxu0 %v3192
    %3530 = vmatpush.bf16.msra.mxu0 %v3185
    %3531 = vmatpush.bf16.msra.mxu0 %v3178
    %3532 = vmatpush.bf16.msra.mxu0 %v3171
    %3533 = vmatpush.bf16.msra.mxu0 %v3164
    %3534 = vmatmul.bf16.gmra.mxu0 %v2074
    %v3535 = vpop.f32.mrf.mxu0
    %v3536 = vadd.f32 %v3523, %v3535
    %v3537 = vpop.f32.mrf.mxu0
    %3538 = vdwg.mxu0
    %3539 = vmatpush.bf16.msra.mxu0 %v3269
    %3540 = vmatpush.bf16.msra.mxu0 %v3262
    %3541 = vmatpush.bf16.msra.mxu0 %v3255
    %3542 = vmatpush.bf16.msra.mxu0 %v3248
    %3543 = vmatpush.bf16.msra.mxu0 %v3241
    %3544 = vmatpush.bf16.msra.mxu0 %v3234
    %3545 = vmatpush.bf16.msra.mxu0 %v3227
    %3546 = vmatpush.bf16.msra.mxu0 %v3220
    %3547 = vmatmul.bf16.gmra.mxu0 %v2075
    %v3548 = vpop.f32.mrf.mxu0
    %v3549 = vadd.f32 %v3536, %v3548
    %v3550 = vpop.f32.mrf.mxu0
    %3551 = vdwg.mxu0
    %3552 = vmatpush.bf16.msra.mxu0 %v3102
    %3553 = vmatpush.bf16.msra.mxu0 %v3095
    %3554 = vmatpush.bf16.msra.mxu0 %v3088
    %3555 = vmatpush.bf16.msra.mxu0 %v3081
    %3556 = vmatpush.bf16.msra.mxu0 %v3074
    %3557 = vmatpush.bf16.msra.mxu0 %v3067
    %3558 = vmatpush.bf16.msra.mxu0 %v3060
    %3559 = vmatpush.bf16.msra.mxu0 %v3053
    %3560 = vmatmul.bf16.gmra.mxu0 %v2072
    %v3561 = vpop.f32.mrf.mxu0
    %v3562 = vadd.f32 %v2335, %v3561
    %v3563 = vpop.f32.mrf.mxu0
    %3564 = vdwg.mxu0
    %3565 = vmatpush.bf16.msra.mxu0 %v3158
    %3566 = vmatpush.bf16.msra.mxu0 %v3151
    %3567 = vmatpush.bf16.msra.mxu0 %v3144
    %3568 = vmatpush.bf16.msra.mxu0 %v3137
    %3569 = vmatpush.bf16.msra.mxu0 %v3130
    %3570 = vmatpush.bf16.msra.mxu0 %v3123
    %3571 = vmatpush.bf16.msra.mxu0 %v3116
    %3572 = vmatpush.bf16.msra.mxu0 %v3109
    %3573 = vmatmul.bf16.gmra.mxu0 %v2073
    %v3574 = vpop.f32.mrf.mxu0
    %v3575 = vadd.f32 %v3562, %v3574
    %v3576 = vpop.f32.mrf.mxu0
    %3577 = vdwg.mxu0
    %3578 = vmatpush.bf16.msra.mxu0 %v3214
    %3579 = vmatpush.bf16.msra.mxu0 %v3207
    %3580 = vmatpush.bf16.msra.mxu0 %v3200
    %3581 = vmatpush.bf16.msra.mxu0 %v3193
    %3582 = vmatpush.bf16.msra.mxu0 %v3186
    %3583 = vmatpush.bf16.msra.mxu0 %v3179
    %3584 = vmatpush.bf16.msra.mxu0 %v3172
    %3585 = vmatpush.bf16.msra.mxu0 %v3165
    %3586 = vmatmul.bf16.gmra.mxu0 %v2074
    %v3587 = vpop.f32.mrf.mxu0
    %v3588 = vadd.f32 %v3575, %v3587
    %v3589 = vpop.f32.mrf.mxu0
    %3590 = vdwg.mxu0
    %3591 = vmatpush.bf16.msra.mxu0 %v3270
    %3592 = vmatpush.bf16.msra.mxu0 %v3263
    %3593 = vmatpush.bf16.msra.mxu0 %v3256
    %3594 = vmatpush.bf16.msra.mxu0 %v3249
    %3595 = vmatpush.bf16.msra.mxu0 %v3242
    %3596 = vmatpush.bf16.msra.mxu0 %v3235
    %3597 = vmatpush.bf16.msra.mxu0 %v3228
    %3598 = vmatpush.bf16.msra.mxu0 %v3221
    %3599 = vmatmul.bf16.gmra.mxu0 %v2075
    %v3600 = vpop.f32.mrf.mxu0
    %v3601 = vadd.f32 %v3588, %v3600
    %v3602 = vpop.f32.mrf.mxu0
    %3603 = vdwg.mxu0
    %3604 = vmatpush.bf16.msra.mxu0 %v3103
    %3605 = vmatpush.bf16.msra.mxu0 %v3096
    %3606 = vmatpush.bf16.msra.mxu0 %v3089
    %3607 = vmatpush.bf16.msra.mxu0 %v3082
    %3608 = vmatpush.bf16.msra.mxu0 %v3075
    %3609 = vmatpush.bf16.msra.mxu0 %v3068
    %3610 = vmatpush.bf16.msra.mxu0 %v3061
    %3611 = vmatpush.bf16.msra.mxu0 %v3054
    %3612 = vmatmul.bf16.gmra.mxu0 %v2072
    %v3613 = vpop.f32.mrf.mxu0
    %v3614 = vadd.f32 %v2336, %v3613
    %v3615 = vpop.f32.mrf.mxu0
    %3616 = vdwg.mxu0
    %3617 = vmatpush.bf16.msra.mxu0 %v3159
    %3618 = vmatpush.bf16.msra.mxu0 %v3152
    %3619 = vmatpush.bf16.msra.mxu0 %v3145
    %3620 = vmatpush.bf16.msra.mxu0 %v3138
    %3621 = vmatpush.bf16.msra.mxu0 %v3131
    %3622 = vmatpush.bf16.msra.mxu0 %v3124
    %3623 = vmatpush.bf16.msra.mxu0 %v3117
    %3624 = vmatpush.bf16.msra.mxu0 %v3110
    %3625 = vmatmul.bf16.gmra.mxu0 %v2073
    %v3626 = vpop.f32.mrf.mxu0
    %v3627 = vadd.f32 %v3614, %v3626
    %v3628 = vpop.f32.mrf.mxu0
    %3629 = vdwg.mxu0
    %3630 = vmatpush.bf16.msra.mxu0 %v3215
    %3631 = vmatpush.bf16.msra.mxu0 %v3208
    %3632 = vmatpush.bf16.msra.mxu0 %v3201
    %3633 = vmatpush.bf16.msra.mxu0 %v3194
    %3634 = vmatpush.bf16.msra.mxu0 %v3187
    %3635 = vmatpush.bf16.msra.mxu0 %v3180
    %3636 = vmatpush.bf16.msra.mxu0 %v3173
    %3637 = vmatpush.bf16.msra.mxu0 %v3166
    %3638 = vmatmul.bf16.gmra.mxu0 %v2074
    %v3639 = vpop.f32.mrf.mxu0
    %v3640 = vadd.f32 %v3627, %v3639
    %v3641 = vpop.f32.mrf.mxu0
    %3642 = vdwg.mxu0
    %3643 = vmatpush.bf16.msra.mxu0 %v3271
    %3644 = vmatpush.bf16.msra.mxu0 %v3264
    %3645 = vmatpush.bf16.msra.mxu0 %v3257
    %3646 = vmatpush.bf16.msra.mxu0 %v3250
    %3647 = vmatpush.bf16.msra.mxu0 %v3243
    %3648 = vmatpush.bf16.msra.mxu0 %v3236
    %3649 = vmatpush.bf16.msra.mxu0 %v3229
    %3650 = vmatpush.bf16.msra.mxu0 %v3222
    %3651 = vmatmul.bf16.gmra.mxu0 %v2075
    %v3652 = vpop.f32.mrf.mxu0
    %v3653 = vadd.f32 %v3640, %v3652
    %v3654 = vpop.f32.mrf.mxu0
    %3655 = vdwg.mxu0
    %3656 = vmatpush.bf16.msra.mxu0 %v3104
    %3657 = vmatpush.bf16.msra.mxu0 %v3097
    %3658 = vmatpush.bf16.msra.mxu0 %v3090
    %3659 = vmatpush.bf16.msra.mxu0 %v3083
    %3660 = vmatpush.bf16.msra.mxu0 %v3076
    %3661 = vmatpush.bf16.msra.mxu0 %v3069
    %3662 = vmatpush.bf16.msra.mxu0 %v3062
    %3663 = vmatpush.bf16.msra.mxu0 %v3055
    %3664 = vmatmul.bf16.gmra.mxu0 %v2072
    %v3665 = vpop.f32.mrf.mxu0
    %v3666 = vadd.f32 %v2337, %v3665
    %v3667 = vpop.f32.mrf.mxu0
    %3668 = vdwg.mxu0
    %3669 = vmatpush.bf16.msra.mxu0 %v3160
    %3670 = vmatpush.bf16.msra.mxu0 %v3153
    %3671 = vmatpush.bf16.msra.mxu0 %v3146
    %3672 = vmatpush.bf16.msra.mxu0 %v3139
    %3673 = vmatpush.bf16.msra.mxu0 %v3132
    %3674 = vmatpush.bf16.msra.mxu0 %v3125
    %3675 = vmatpush.bf16.msra.mxu0 %v3118
    %3676 = vmatpush.bf16.msra.mxu0 %v3111
    %3677 = vmatmul.bf16.gmra.mxu0 %v2073
    %v3678 = vpop.f32.mrf.mxu0
    %v3679 = vadd.f32 %v3666, %v3678
    %v3680 = vpop.f32.mrf.mxu0
    %3681 = vdwg.mxu0
    %3682 = vmatpush.bf16.msra.mxu0 %v3216
    %3683 = vmatpush.bf16.msra.mxu0 %v3209
    %3684 = vmatpush.bf16.msra.mxu0 %v3202
    %3685 = vmatpush.bf16.msra.mxu0 %v3195
    %3686 = vmatpush.bf16.msra.mxu0 %v3188
    %3687 = vmatpush.bf16.msra.mxu0 %v3181
    %3688 = vmatpush.bf16.msra.mxu0 %v3174
    %3689 = vmatpush.bf16.msra.mxu0 %v3167
    %3690 = vmatmul.bf16.gmra.mxu0 %v2074
    %v3691 = vpop.f32.mrf.mxu0
    %v3692 = vadd.f32 %v3679, %v3691
    %v3693 = vpop.f32.mrf.mxu0
    %3694 = vdwg.mxu0
    %3695 = vmatpush.bf16.msra.mxu0 %v3272
    %3696 = vmatpush.bf16.msra.mxu0 %v3265
    %3697 = vmatpush.bf16.msra.mxu0 %v3258
    %3698 = vmatpush.bf16.msra.mxu0 %v3251
    %3699 = vmatpush.bf16.msra.mxu0 %v3244
    %3700 = vmatpush.bf16.msra.mxu0 %v3237
    %3701 = vmatpush.bf16.msra.mxu0 %v3230
    %3702 = vmatpush.bf16.msra.mxu0 %v3223
    %3703 = vmatmul.bf16.gmra.mxu0 %v2075
    %v3704 = vpop.f32.mrf.mxu0
    %v3705 = vadd.f32 %v3692, %v3704
    %v3706 = vpop.f32.mrf.mxu0
    %3707 = vdwg.mxu0
    %3708 = vmatpush.bf16.msra.mxu0 %v3105
    %3709 = vmatpush.bf16.msra.mxu0 %v3098
    %3710 = vmatpush.bf16.msra.mxu0 %v3091
    %3711 = vmatpush.bf16.msra.mxu0 %v3084
    %3712 = vmatpush.bf16.msra.mxu0 %v3077
    %3713 = vmatpush.bf16.msra.mxu0 %v3070
    %3714 = vmatpush.bf16.msra.mxu0 %v3063
    %3715 = vmatpush.bf16.msra.mxu0 %v3056
    %3716 = vmatmul.bf16.gmra.mxu0 %v2072
    %v3717 = vpop.f32.mrf.mxu0
    %v3718 = vadd.f32 %v2338, %v3717
    %v3719 = vpop.f32.mrf.mxu0
    %3720 = vdwg.mxu0
    %3721 = vmatpush.bf16.msra.mxu0 %v3161
    %3722 = vmatpush.bf16.msra.mxu0 %v3154
    %3723 = vmatpush.bf16.msra.mxu0 %v3147
    %3724 = vmatpush.bf16.msra.mxu0 %v3140
    %3725 = vmatpush.bf16.msra.mxu0 %v3133
    %3726 = vmatpush.bf16.msra.mxu0 %v3126
    %3727 = vmatpush.bf16.msra.mxu0 %v3119
    %3728 = vmatpush.bf16.msra.mxu0 %v3112
    %3729 = vmatmul.bf16.gmra.mxu0 %v2073
    %v3730 = vpop.f32.mrf.mxu0
    %v3731 = vadd.f32 %v3718, %v3730
    %v3732 = vpop.f32.mrf.mxu0
    %3733 = vdwg.mxu0
    %3734 = vmatpush.bf16.msra.mxu0 %v3217
    %3735 = vmatpush.bf16.msra.mxu0 %v3210
    %3736 = vmatpush.bf16.msra.mxu0 %v3203
    %3737 = vmatpush.bf16.msra.mxu0 %v3196
    %3738 = vmatpush.bf16.msra.mxu0 %v3189
    %3739 = vmatpush.bf16.msra.mxu0 %v3182
    %3740 = vmatpush.bf16.msra.mxu0 %v3175
    %3741 = vmatpush.bf16.msra.mxu0 %v3168
    %3742 = vmatmul.bf16.gmra.mxu0 %v2074
    %v3743 = vpop.f32.mrf.mxu0
    %v3744 = vadd.f32 %v3731, %v3743
    %v3745 = vpop.f32.mrf.mxu0
    %3746 = vdwg.mxu0
    %3747 = vmatpush.bf16.msra.mxu0 %v3273
    %3748 = vmatpush.bf16.msra.mxu0 %v3266
    %3749 = vmatpush.bf16.msra.mxu0 %v3259
    %3750 = vmatpush.bf16.msra.mxu0 %v3252
    %3751 = vmatpush.bf16.msra.mxu0 %v3245
    %3752 = vmatpush.bf16.msra.mxu0 %v3238
    %3753 = vmatpush.bf16.msra.mxu0 %v3231
    %3754 = vmatpush.bf16.msra.mxu0 %v3224
    %3755 = vmatmul.bf16.gmra.mxu0 %v2075
    %v3756 = vpop.f32.mrf.mxu0
    %v3757 = vadd.f32 %v3744, %v3756
    %v3758 = vpop.f32.mrf.mxu0
    %3759 = vdwg.mxu0
    %3760 = vmatpush.bf16.msra.mxu0 %v3106
    %3761 = vmatpush.bf16.msra.mxu0 %v3099
    %3762 = vmatpush.bf16.msra.mxu0 %v3092
    %3763 = vmatpush.bf16.msra.mxu0 %v3085
    %3764 = vmatpush.bf16.msra.mxu0 %v3078
    %3765 = vmatpush.bf16.msra.mxu0 %v3071
    %3766 = vmatpush.bf16.msra.mxu0 %v3064
    %3767 = vmatpush.bf16.msra.mxu0 %v3057
    %3768 = vmatmul.bf16.gmra.mxu0 %v2072
    %v3769 = vpop.f32.mrf.mxu0
    %v3770 = vadd.f32 %v2339, %v3769
    %v3771 = vpop.f32.mrf.mxu0
    %3772 = vdwg.mxu0
    %3773 = vmatpush.bf16.msra.mxu0 %v3162
    %3774 = vmatpush.bf16.msra.mxu0 %v3155
    %3775 = vmatpush.bf16.msra.mxu0 %v3148
    %3776 = vmatpush.bf16.msra.mxu0 %v3141
    %3777 = vmatpush.bf16.msra.mxu0 %v3134
    %3778 = vmatpush.bf16.msra.mxu0 %v3127
    %3779 = vmatpush.bf16.msra.mxu0 %v3120
    %3780 = vmatpush.bf16.msra.mxu0 %v3113
    %3781 = vmatmul.bf16.gmra.mxu0 %v2073
    %v3782 = vpop.f32.mrf.mxu0
    %v3783 = vadd.f32 %v3770, %v3782
    %v3784 = vpop.f32.mrf.mxu0
    %3785 = vdwg.mxu0
    %3786 = vmatpush.bf16.msra.mxu0 %v3218
    %3787 = vmatpush.bf16.msra.mxu0 %v3211
    %3788 = vmatpush.bf16.msra.mxu0 %v3204
    %3789 = vmatpush.bf16.msra.mxu0 %v3197
    %3790 = vmatpush.bf16.msra.mxu0 %v3190
    %3791 = vmatpush.bf16.msra.mxu0 %v3183
    %3792 = vmatpush.bf16.msra.mxu0 %v3176
    %3793 = vmatpush.bf16.msra.mxu0 %v3169
    %3794 = vmatmul.bf16.gmra.mxu0 %v2074
    %v3795 = vpop.f32.mrf.mxu0
    %v3796 = vadd.f32 %v3783, %v3795
    %v3797 = vpop.f32.mrf.mxu0
    %3798 = vdwg.mxu0
    %3799 = vmatpush.bf16.msra.mxu0 %v3274
    %3800 = vmatpush.bf16.msra.mxu0 %v3267
    %3801 = vmatpush.bf16.msra.mxu0 %v3260
    %3802 = vmatpush.bf16.msra.mxu0 %v3253
    %3803 = vmatpush.bf16.msra.mxu0 %v3246
    %3804 = vmatpush.bf16.msra.mxu0 %v3239
    %3805 = vmatpush.bf16.msra.mxu0 %v3232
    %3806 = vmatpush.bf16.msra.mxu0 %v3225
    %3807 = vmatmul.bf16.gmra.mxu0 %v2075
    %v3808 = vpop.f32.mrf.mxu0
    %v3809 = vadd.f32 %v3796, %v3808
    %v3810 = vpop.f32.mrf.mxu0
    %3811 = vdwg.mxu0
    %3812 = vmatpush.bf16.msra.mxu0 %v3107
    %3813 = vmatpush.bf16.msra.mxu0 %v3100
    %3814 = vmatpush.bf16.msra.mxu0 %v3093
    %3815 = vmatpush.bf16.msra.mxu0 %v3086
    %3816 = vmatpush.bf16.msra.mxu0 %v3079
    %3817 = vmatpush.bf16.msra.mxu0 %v3072
    %3818 = vmatpush.bf16.msra.mxu0 %v3065
    %3819 = vmatpush.bf16.msra.mxu0 %v3058
    %3820 = vmatmul.bf16.gmra.mxu0 %v2072
    %v3821 = vpop.f32.mrf.mxu0
    %v3822 = vadd.f32 %v2340, %v3821
    %v3823 = vpop.f32.mrf.mxu0
    %3824 = vdwg.mxu0
    %3825 = vmatpush.bf16.msra.mxu0 %v3163
    %3826 = vmatpush.bf16.msra.mxu0 %v3156
    %3827 = vmatpush.bf16.msra.mxu0 %v3149
    %3828 = vmatpush.bf16.msra.mxu0 %v3142
    %3829 = vmatpush.bf16.msra.mxu0 %v3135
    %3830 = vmatpush.bf16.msra.mxu0 %v3128
    %3831 = vmatpush.bf16.msra.mxu0 %v3121
    %3832 = vmatpush.bf16.msra.mxu0 %v3114
    %3833 = vmatmul.bf16.gmra.mxu0 %v2073
    %v3834 = vpop.f32.mrf.mxu0
    %v3835 = vadd.f32 %v3822, %v3834
    %v3836 = vpop.f32.mrf.mxu0
    %3837 = vdwg.mxu0
    %3838 = vmatpush.bf16.msra.mxu0 %v3219
    %3839 = vmatpush.bf16.msra.mxu0 %v3212
    %3840 = vmatpush.bf16.msra.mxu0 %v3205
    %3841 = vmatpush.bf16.msra.mxu0 %v3198
    %3842 = vmatpush.bf16.msra.mxu0 %v3191
    %3843 = vmatpush.bf16.msra.mxu0 %v3184
    %3844 = vmatpush.bf16.msra.mxu0 %v3177
    %3845 = vmatpush.bf16.msra.mxu0 %v3170
    %3846 = vmatmul.bf16.gmra.mxu0 %v2074
    %v3847 = vpop.f32.mrf.mxu0
    %v3848 = vadd.f32 %v3835, %v3847
    %v3849 = vpop.f32.mrf.mxu0
    %3850 = vdwg.mxu0
    %3851 = vmatpush.bf16.msra.mxu0 %v3275
    %3852 = vmatpush.bf16.msra.mxu0 %v3268
    %3853 = vmatpush.bf16.msra.mxu0 %v3261
    %3854 = vmatpush.bf16.msra.mxu0 %v3254
    %3855 = vmatpush.bf16.msra.mxu0 %v3247
    %3856 = vmatpush.bf16.msra.mxu0 %v3240
    %3857 = vmatpush.bf16.msra.mxu0 %v3233
    %3858 = vmatpush.bf16.msra.mxu0 %v3226
    %3859 = vmatmul.bf16.gmra.mxu0 %v2075
    %v3860 = vpop.f32.mrf.mxu0
    %v3861 = vadd.f32 %v3848, %v3860
    %v3862 = vpop.f32.mrf.mxu0
    %3863 = vdwg.mxu0
    %vm3864 = vcmp.ge.f32.partialorder %v3549, 0.0
    %vm3865 = vcmp.ge.f32.partialorder %v3601, 0.0
    %vm3866 = vcmp.ge.f32.partialorder %v3653, 0.0
    %vm3867 = vcmp.ge.f32.partialorder %v3705, 0.0
    %vm3868 = vcmp.ge.f32.partialorder %v3757, 0.0
    %vm3869 = vcmp.ge.f32.partialorder %v3809, 0.0
    %vm3870 = vcmp.ge.f32.partialorder %v3861, 0.0
    %v3871 = vsub.f32 0.0, %v3549
    %v3872 = vsub.f32 0.0, %v3601
    %v3873 = vsub.f32 0.0, %v3653
    %v3874 = vsub.f32 0.0, %v3705
    %v3875 = vsub.f32 0.0, %v3757
    %v3876 = vsub.f32 0.0, %v3809
    %v3877 = vsub.f32 0.0, %v3861
    %v3878 = vsel %vm3864, %v3871, %v3549
    %v3879 = vsel %vm3865, %v3872, %v3601
    %v3880 = vsel %vm3866, %v3873, %v3653
    %v3881 = vsel %vm3867, %v3874, %v3705
    %v3882 = vsel %vm3868, %v3875, %v3757
    %v3883 = vsel %vm3869, %v3876, %v3809
    %v3884 = vsel %vm3870, %v3877, %v3861
    %v3885 = vmul.f32 %v3878, 1.442695
    %v3886 = vpow.pop %v3885
    %v3887 = vmul.f32 %v3879, 1.442695
    %v3888 = vpow.pop %v3887
    %v3889 = vmul.f32 %v3880, 1.442695
    %v3890 = vpow.pop %v3889
    %v3891 = vmul.f32 %v3881, 1.442695
    %v3892 = vpow.pop %v3891
    %v3893 = vmul.f32 %v3882, 1.442695
    %v3894 = vpow.pop %v3893
    %v3895 = vmul.f32 %v3883, 1.442695
    %v3896 = vpow.pop %v3895
    %v3897 = vmul.f32 %v3884, 1.442695
    %v3898 = vpow.pop %v3897
    %v3899 = vsel %vm3864, 1.0, %v3886
    %v3900 = vsel %vm3865, 1.0, %v3888
    %v3901 = vsel %vm3866, 1.0, %v3890
    %v3902 = vsel %vm3867, 1.0, %v3892
    %v3903 = vsel %vm3868, 1.0, %v3894
    %v3904 = vsel %vm3869, 1.0, %v3896
    %v3905 = vsel %vm3870, 1.0, %v3898
    %v3906 = vadd.f32 %v3886, 1.0
    %v3907 = vadd.f32 %v3888, 1.0
    %v3908 = vadd.f32 %v3890, 1.0
    %v3909 = vadd.f32 %v3892, 1.0
    %v3910 = vadd.f32 %v3894, 1.0
    %v3911 = vadd.f32 %v3896, 1.0
    %v3912 = vadd.f32 %v3898, 1.0
    %v3913 = vrcp.pop %v3906
    %v3914 = vmul.f32 %v3906, %v3913
    %v3915 = vsub.f32 1.0, %v3914
    %v3916 = vmul.f32 %v3913, %v3915
    %v3917 = vadd.f32 %v3913, %v3916
    %vm3918 = vweird.f32 %v3906
    %vm3919 = vweird.f32 %v3913
    %vm3920 = vmor %vm3918, %vm3919
    %v3921 = vsel %vm3920, %v3913, %v3917
    %v3922 = vand.u32 2147483647, %v3906
    %vm3923 = vcmp.eq.f32.partialorder %v3922, 8.507059e+37
    %v3924 = vand.u32 %v3906, 2147483648
    %v3925 = vor.u32 1.1754944e-38, %v3924
    %v3926 = vsel %vm3923, %v3925, %v3921
    %v3927 = vmul.f32 %v3899, %v3926
    %v3928 = vrcp.pop %v3907
    %v3929 = vmul.f32 %v3907, %v3928
    %v3930 = vsub.f32 1.0, %v3929
    %v3931 = vmul.f32 %v3928, %v3930
    %v3932 = vadd.f32 %v3928, %v3931
    %vm3933 = vweird.f32 %v3907
    %vm3934 = vweird.f32 %v3928
    %vm3935 = vmor %vm3933, %vm3934
    %v3936 = vsel %vm3935, %v3928, %v3932
    %v3937 = vand.u32 2147483647, %v3907
    %vm3938 = vcmp.eq.f32.partialorder %v3937, 8.507059e+37
    %v3939 = vand.u32 %v3907, 2147483648
    %v3940 = vor.u32 1.1754944e-38, %v3939
    %v3941 = vsel %vm3938, %v3940, %v3936
    %v3942 = vmul.f32 %v3900, %v3941
    %v3943 = vrcp.pop %v3908
    %v3944 = vmul.f32 %v3908, %v3943
    %v3945 = vsub.f32 1.0, %v3944
    %v3946 = vmul.f32 %v3943, %v3945
    %v3947 = vadd.f32 %v3943, %v3946
    %vm3948 = vweird.f32 %v3908
    %vm3949 = vweird.f32 %v3943
    %vm3950 = vmor %vm3948, %vm3949
    %v3951 = vsel %vm3950, %v3943, %v3947
    %v3952 = vand.u32 2147483647, %v3908
    %vm3953 = vcmp.eq.f32.partialorder %v3952, 8.507059e+37
    %v3954 = vand.u32 %v3908, 2147483648
    %v3955 = vor.u32 1.1754944e-38, %v3954
    %v3956 = vsel %vm3953, %v3955, %v3951
    %v3957 = vmul.f32 %v3901, %v3956
    %v3958 = vrcp.pop %v3909
    %v3959 = vmul.f32 %v3909, %v3958
    %v3960 = vsub.f32 1.0, %v3959
    %v3961 = vmul.f32 %v3958, %v3960
    %v3962 = vadd.f32 %v3958, %v3961
    %vm3963 = vweird.f32 %v3909
    %vm3964 = vweird.f32 %v3958
    %vm3965 = vmor %vm3963, %vm3964
    %v3966 = vsel %vm3965, %v3958, %v3962
    %v3967 = vand.u32 2147483647, %v3909
    %vm3968 = vcmp.eq.f32.partialorder %v3967, 8.507059e+37
    %v3969 = vand.u32 %v3909, 2147483648
    %v3970 = vor.u32 1.1754944e-38, %v3969
    %v3971 = vsel %vm3968, %v3970, %v3966
    %v3972 = vmul.f32 %v3902, %v3971
    %v3973 = vrcp.pop %v3910
    %v3974 = vmul.f32 %v3910, %v3973
    %v3975 = vsub.f32 1.0, %v3974
    %v3976 = vmul.f32 %v3973, %v3975
    %v3977 = vadd.f32 %v3973, %v3976
    %vm3978 = vweird.f32 %v3910
    %vm3979 = vweird.f32 %v3973
    %vm3980 = vmor %vm3978, %vm3979
    %v3981 = vsel %vm3980, %v3973, %v3977
    %v3982 = vand.u32 2147483647, %v3910
    %vm3983 = vcmp.eq.f32.partialorder %v3982, 8.507059e+37
    %v3984 = vand.u32 %v3910, 2147483648
    %v3985 = vor.u32 1.1754944e-38, %v3984
    %v3986 = vsel %vm3983, %v3985, %v3981
    %v3987 = vmul.f32 %v3903, %v3986
    %v3988 = vrcp.pop %v3911
    %v3989 = vmul.f32 %v3911, %v3988
    %v3990 = vsub.f32 1.0, %v3989
    %v3991 = vmul.f32 %v3988, %v3990
    %v3992 = vadd.f32 %v3988, %v3991
    %vm3993 = vweird.f32 %v3911
    %vm3994 = vweird.f32 %v3988
    %vm3995 = vmor %vm3993, %vm3994
    %v3996 = vsel %vm3995, %v3988, %v3992
    %v3997 = vand.u32 2147483647, %v3911
    %vm3998 = vcmp.eq.f32.partialorder %v3997, 8.507059e+37
    %v3999 = vand.u32 %v3911, 2147483648
    %v4000 = vor.u32 1.1754944e-38, %v3999
    %v4001 = vsel %vm3998, %v4000, %v3996
    %v4002 = vmul.f32 %v3904, %v4001
    %v4003 = vrcp.pop %v3912
    %v4004 = vmul.f32 %v3912, %v4003
    %v4005 = vsub.f32 1.0, %v4004
    %v4006 = vmul.f32 %v4003, %v4005
    %v4007 = vadd.f32 %v4003, %v4006
    %vm4008 = vweird.f32 %v3912
    %vm4009 = vweird.f32 %v4003
    %vm4010 = vmor %vm4008, %vm4009
    %v4011 = vsel %vm4010, %v4003, %v4007
    %v4012 = vand.u32 2147483647, %v3912
    %vm4013 = vcmp.eq.f32.partialorder %v4012, 8.507059e+37
    %v4014 = vand.u32 %v3912, 2147483648
    %v4015 = vor.u32 1.1754944e-38, %v4014
    %v4016 = vsel %vm4013, %v4015, %v4011
    %v4017 = vmul.f32 %v3905, %v4016
    %v4018 = vpack.c.bf16 %v3942, %v3927
    %v4019 = vpack.c.bf16 %v3972, %v3957
    %v4020 = vpack.c.bf16 %v4002, %v3987
    %v4021 = vpack.c.bf16 %v4017, %v4017
    %4022 = vst [vmem:[#allocation2] sm:$0xff] %v4018
    %4023 = vst [vmem:[#allocation2 + $0x8] sm:$0xff] %v4019
    %4024 = vst [vmem:[#allocation2 + $0x10] sm:$0xff] %v4020
    %vm4025 = vcmask 125952
    %4026 = vst.msk [vmem:[#allocation2 + $0x18] sm:$0xf] %vm4025, %v4021
    %4027 = vst [vmem:[#allocation4] sm:$0xff] %v1939
    // Predicated region
    $region42: #{tpu_custom_call.1} parent=1 // pred_check
      _
    $region43: #{tpu_custom_call.1} parent=1 // pred_check_branch
      %4029 = sbr.rel (0) target = $region45
    $region44: #{tpu_custom_call.1} parent=1 // pred_region
      %4031 = vsyncadd [#allocation3], 0
      %s4033 = sshll.u32 [#allocation2], 4
      %s4034 = int_to_ptr.vmem [resolvable:$true] %s4033
      %s4035 = sshll.u32 %s10, 4
      %s4036 = int_to_ptr.hbm [resolvable:$true] %s4035
      %4038 = dma.vmem_to_hbm [thread:$0]  %s4034, 448, %s4036, [#allocation3]
    $region45: #{tpu_custom_call.1} parent=1 // pred_fallthru
      _
    // Predicated region
    $region46: #{tpu_custom_call.1} parent=1 // pred_check
      _
    $region47: #{tpu_custom_call.1} parent=1 // pred_check_branch
      %4040 = sbr.rel (0) target = $region49
    $region48: #{tpu_custom_call.1} parent=1 // pred_region
      %4042 = vsyncadd [#allocation5], 0
      %s4044 = sshll.u32 [#allocation4], 4
      %s4045 = int_to_ptr.vmem [resolvable:$true] %s4044
      %s4046 = sshll.u32 %s11, 4
      %s4047 = int_to_ptr.hbm [resolvable:$true] %s4046
      %4049 = dma.vmem_to_hbm [thread:$0]  %s4045, 128, %s4047, [#allocation5]
    $region49: #{tpu_custom_call.1} parent=1 // pred_fallthru
      _
    // Predicated region
    $region50: #{tpu_custom_call.1} parent=1 // pred_check
      _
    $region51: #{tpu_custom_call.1} parent=1 // pred_check_branch
      %4051 = sbr.rel (0) target = $region53
    $region52: #{tpu_custom_call.1} parent=1 // pred_region
      %4053 = dma.done [#allocation3], 448
    $region53: #{tpu_custom_call.1} parent=1 // pred_fallthru
      _
    // Predicated region
    $region54: #{tpu_custom_call.1} parent=1 // pred_check
      _
    $region55: #{tpu_custom_call.1} parent=1 // pred_check_branch
      %4055 = sbr.rel (0) target = $region57
    $region56: #{tpu_custom_call.1} parent=1 // pred_region
      %4057 = dma.done [#allocation5], 128
    $region57: #{tpu_custom_call.1} parent=1 // pred_fallthru
      _
    %4058 = vsyncpa [#allocation3], 1
    %4059 = vsyncpa [#allocation5], 1

</llo_original>
